<compile_context>
chip_gen: v7x
topology: tpu7x:2x2x1
jax: 0.10.0
libtpu: 0.0.40
codegen_flags: <defaults>
</compile_context>

<pallas_src>
import jax
import jax.numpy as jnp
from jax.experimental import pallas as pl
from jax.experimental.pallas import tpu as pltpu

# ------------------- net_params (config) -------------------
NUM_ATOM_TYPE    = 28
HIDDEN_DIM       = 32     # hidden_dim
OUT_DIM          = 32     # out_dim == hidden_dim so residual stays on for every layer
N_LAYERS         = 2      # 'L'
TOWERS           = 1
PRETRANS_LAYERS  = 1      # single un-activated linear  -> exact factorization over src/dst
POSTTRANS_LAYERS = 1      # single un-activated linear
AGGREGATORS      = ("mean", "max", "min", "std")
SCALERS          = ("identity", "amplification", "attenuation")
READOUT          = "mean"
GRAPH_NORM       = True
BATCH_NORM       = True   # training-mode batch statistics, gamma=1 / beta=0 init
RESIDUAL         = True
EDGE_FEAT        = False  # embedding_e unused
DROPOUT          = 0.0    # in_feat_dropout / dropout are identity at p = 0
GRU_ENABLE       = False
EPS_AGG          = 1e-5   # EPS in aggregate_std
EPS_BN           = 1e-5   # BatchNorm1d eps
LEAKY_SLOPE      = 0.01   # LeakyReLU in the mixing FCLayer

NUM_GRAPHS       = 2
NODES_PER_GRAPH  = 8
N_NODES          = NUM_GRAPHS * NODES_PER_GRAPH

SLAB             = 8      # source-row slab size for the running max/min reduce
OUT_PAD          = 128    # lane-padded width of the final readout linear (sliced in wrapper)

_VMEM = pl.BlockSpec(memory_space=pltpu.MemorySpace.VMEM)
_SMEM = pl.BlockSpec(memory_space=pltpu.MemorySpace.SMEM)


# ---------------------------------------------------------------------------
# Single fused kernel: (PNA layer x N_LAYERS) -> mean readout -> MLPReadout
# ---------------------------------------------------------------------------
def _pna_net_kernel(avg_ref,
                    h_ref, adj_ref, adjt_ref, snorm_ref, memb_ref,
                    wpre_src_ref, wpre_dst_ref, bpre_ref,
                    wpost_ref, bpost_ref, gamma_ref, beta_ref,
                    wmix_ref, bmix_ref,
                    w1_ref, b1_ref, w2_ref, b2_ref, w3_ref, b3_ref,
                    out_ref):
    f32 = jnp.float32
    h = h_ref[...]                            # [N, F]
    adj = adj_ref[...]                        # [N_src, N_dst]
    adj_t = adjt_ref[...]                     # [N_dst, N_src]
    snorm = snorm_ref[...]                    # [N, 1]
    avg_d_log = avg_ref[0]                    # SMEM scalar: avg_d['log']

    n = h.shape[0]
    feat = h.shape[1]
    n_slabs = n // SLAB                       # N padded to a multiple of 8 by the wrapper
    BIG = jnp.float32(1e30)

    # ---- graph-structure terms (shared by every layer) ----
    deg = jnp.sum(adj_t, axis=1, keepdims=True)              # in-degree  [N, 1]
    has_in = deg > 0.0
    inv_d = 1.0 / jnp.maximum(deg, 1.0)                       # exact: feeds E[x^2]-E[x]^2
    logd = jnp.log(deg + 1.0)
    ampf = logd * (1.0 / avg_d_log)                            # amplification scaler
    attf = avg_d_log * pl.reciprocal(jnp.where(has_in, logd, 1.0), approx=True)

    for li in range(N_LAYERS):
        # ---- pretrans (factorized, narrow F width): m(u->v) = h_u@Wsrc + h_v@Wdst + b ----
        m_src = jnp.dot(h, wpre_src_ref[li], preferred_element_type=f32)             # [N, F]
        m_dst = jnp.dot(h, wpre_dst_ref[li], preferred_element_type=f32) + bpre_ref[li]

        # ---- mean / std aggregation via adj^T matmuls on the MXU (F-wide only) ----
        s1 = jnp.dot(adj_t, m_src, preferred_element_type=f32) * inv_d               # E[m_src]
        s2 = jnp.dot(adj_t, m_src * m_src, preferred_element_type=f32) * inv_d       # E[m_src^2]
        std = jnp.sqrt(jnp.maximum(s2 - s1 * s1, 0.0) + EPS_AGG)                     # dst term cancels

        # ---- max / min: running reduce over 8-row source slabs (no [N,N,F] cube) ----
        mx = jnp.full((n, feat), -BIG, f32)
        mn = jnp.full((n, feat), BIG, f32)
        for s in range(n_slabs):
            rows = slice(s * SLAB, (s + 1) * SLAB)
            msk = adj[rows, :, None] > 0.0                     # [SLAB, N_dst, 1]
            src = m_src[rows][:, None, :]                      # [SLAB, 1, F]
            mx = jnp.maximum(mx, jnp.max(jnp.where(msk, src, -BIG), axis=0))
            mn = jnp.minimum(mn, jnp.min(jnp.where(msk, src, BIG), axis=0))

        # dst term added back for mean/max/min; zero-in-degree guard
        mean_a = jnp.where(has_in, s1 + m_dst, 0.0)
        max_a = jnp.where(has_in, mx + m_dst, 0.0)
        min_a = jnp.where(has_in, mn + m_dst, 0.0)
        std_a = jnp.where(has_in, std, 0.0)
        aggs = jnp.concatenate([mean_a, max_a, min_a, std_a], axis=1)                # [N, 4F]

        # ---- posttrans: ONE matmul over [h | aggs | amp*aggs | att*aggs]  (K = 13F) ----
        post_in = jnp.concatenate([h, aggs, ampf * aggs, attf * aggs], axis=1)       # [N, 13F]
        ht = jnp.dot(post_in, wpost_ref[li], preferred_element_type=f32) + bpost_ref[li]

        # ---- graph norm, batch norm (training-mode stats), relu; dropout p=0 -> identity ----
        ht = ht * snorm
        bmean = jnp.mean(ht, axis=0, keepdims=True)
        diff = ht - bmean
        bvar = jnp.mean(diff * diff, axis=0, keepdims=True)
        ht = diff * jax.lax.rsqrt(bvar + EPS_BN)
        ht = ht * gamma_ref[li] + beta_ref[li]
        ht = jnp.maximum(ht, 0.0)

        # ---- mixing FCLayer (linear + LeakyReLU) + residual ----
        hm = jnp.dot(ht, wmix_ref[li], preferred_element_type=f32) + bmix_ref[li]
        hm = jnp.where(hm >= 0.0, hm, LEAKY_SLOPE * hm)
        h = h + hm

    # ---- readout: dgl.mean_nodes (membership rows pre-normalized host-side) + MLPReadout ----
    hg = jnp.dot(memb_ref[...], h, preferred_element_type=f32)                       # [G, F]
    y = jnp.maximum(jnp.dot(hg, w1_ref[...], preferred_element_type=f32) + b1_ref[...], 0.0)
    y = jnp.maximum(jnp.dot(y, w2_ref[...], preferred_element_type=f32) + b2_ref[...], 0.0)
    out_ref[...] = jnp.dot(y, w3_ref[...], preferred_element_type=f32) + b3_ref[...]  # [G, OUT_PAD]


# ---------------------------------------------------------------------------
# Parameter packing: stack per-layer weights; pad the final readout linear to
# a lane-dense width (real score lives in column 0).
# ---------------------------------------------------------------------------
def pack_params(params):
    layers = params["layers"]
    stk = lambda k: jnp.stack([lp[k] for lp in layers])
    w3, b3 = params["w3"], params["b3"]
    w3p = jnp.zeros((w3.shape[0], OUT_PAD), jnp.float32).at[:, : w3.shape[1]].set(w3)
    b3p = jnp.zeros((1, OUT_PAD), jnp.float32).at[:, : b3.shape[1]].set(b3)
    return dict(
        emb_h=params["emb_h"],
        w_pre_src=stk("w_pre_src"), w_pre_dst=stk("w_pre_dst"), b_pre=stk("b_pre"),
        w_post=stk("w_post"), b_post=stk("b_post"),
        bn_gamma=stk("bn_gamma"), bn_beta=stk("bn_beta"),
        w_mix=stk("w_mix"), b_mix=stk("b_mix"),
        w1=params["w1"], b1=params["b1"], w2=params["w2"], b2=params["b2"],
        w3=w3p, b3=b3p)


@jax.jit
def pna_net_forward(packed, node_types, adj, snorm_n, memb, avg_d_log):
    h0 = packed["emb_h"][node_types]          # embedding_h ; in_feat_dropout(p=0) = identity
    # EDGE_FEAT = False -> no edge embedding; GRU_ENABLE = False -> no GRU between layers
    # Pre-normalize membership rows so the in-kernel readout is one matmul (mean_nodes).
    memb_norm = memb / jnp.maximum(jnp.sum(memb, axis=1, keepdims=True), 1.0)
    avg = jnp.reshape(avg_d_log, (1,)).astype(jnp.float32)
    args = (avg, h0, adj, adj.T, snorm_n, memb_norm,
            packed["w_pre_src"], packed["w_pre_dst"], packed["b_pre"],
            packed["w_post"], packed["b_post"], packed["bn_gamma"], packed["bn_beta"],
            packed["w_mix"], packed["b_mix"],
            packed["w1"], packed["b1"], packed["w2"], packed["b2"],
            packed["w3"], packed["b3"])
    n_graphs = memb.shape[0]
    out = pl.pallas_call(
        _pna_net_kernel,
        out_shape=jax.ShapeDtypeStruct((n_graphs, OUT_PAD), jnp.float32),
        in_specs=[_SMEM] + [_VMEM] * (len(args) - 1),
        out_specs=_VMEM,
    )(*args)
    return out[:, :1]                         # lane-dense store in kernel; real score is column 0


# ---------------------------------------------------------------------------
# Deterministic parameter init (shapes follow the module's __init__)
# ---------------------------------------------------------------------------
def _linear_params(key, fan_in, fan_out):
    kw, kb = jax.random.split(key)
    bound = 1.0 / (fan_in ** 0.5)
    w = jax.random.uniform(kw, (fan_in, fan_out), jnp.float32, -bound, bound)
    b = jax.random.uniform(kb, (1, fan_out), jnp.float32, -bound, bound)
    return w, b


def init_params(key):
    keys = jax.random.split(key, 4 + N_LAYERS)
    params = {"emb_h": jax.random.normal(keys[0], (NUM_ATOM_TYPE, HIDDEN_DIM), jnp.float32)}
    n_agg_scal = len(AGGREGATORS) * len(SCALERS)
    layers = []
    for li in range(N_LAYERS):
        lk = jax.random.split(keys[1 + li], 3)
        w_pre, b_pre = _linear_params(lk[0], 2 * HIDDEN_DIM, HIDDEN_DIM)        # pretrans
        w_post, b_post = _linear_params(lk[1], (n_agg_scal + 1) * HIDDEN_DIM, OUT_DIM)
        w_mix, b_mix = _linear_params(lk[2], OUT_DIM, OUT_DIM)                  # mixing FCLayer
        layers.append(dict(
            w_pre_src=w_pre[:HIDDEN_DIM], w_pre_dst=w_pre[HIDDEN_DIM:], b_pre=b_pre,
            w_post=w_post, b_post=b_post,
            bn_gamma=jnp.ones((1, OUT_DIM), jnp.float32),
            bn_beta=jnp.zeros((1, OUT_DIM), jnp.float32),
            w_mix=w_mix, b_mix=b_mix))
    params["layers"] = layers
    # MLPReadout(out_dim, 1, L=2): 32 -> 16 -> 8 -> 1
    rk = jax.random.split(keys[-1], 3)
    params["w1"], params["b1"] = _linear_params(rk[0], OUT_DIM, OUT_DIM // 2)
    params["w2"], params["b2"] = _linear_params(rk[1], OUT_DIM // 2, OUT_DIM // 4)
    params["w3"], params["b3"] = _linear_params(rk[2], OUT_DIM // 4, 1)
    return params


if __name__ == "__main__":
    key = jax.random.PRNGKey(0)
    k_param, k_nodes = jax.random.split(key)

    params = init_params(k_param)
    packed = pack_params(params)

    # synthetic batched graph: 2 graphs x 8 nodes, bidirectional ring + a chord per node
    edges = []
    for g in range(NUM_GRAPHS):
        off = g * NODES_PER_GRAPH
        for i in range(NODES_PER_GRAPH):
            edges.append((off + i, off + (i + 1) % NODES_PER_GRAPH))
            edges.append((off + (i + 1) % NODES_PER_GRAPH, off + i))
            edges.append((off + i, off + (i + 3) % NODES_PER_GRAPH))
    src = jnp.array([e[0] for e in edges], jnp.int32)
    dst = jnp.array([e[1] for e in edges], jnp.int32)
    adj = jnp.zeros((N_NODES, N_NODES), jnp.float32).at[src, dst].set(1.0)

    node_types = jax.random.randint(k_nodes, (N_NODES,), 0, NUM_ATOM_TYPE)
    snorm_n = jnp.full((N_NODES, 1), 1.0 / (NODES_PER_GRAPH ** 0.5), jnp.float32)
    memb = jnp.repeat(jnp.eye(NUM_GRAPHS, dtype=jnp.float32), NODES_PER_GRAPH, axis=1)

    in_deg = jnp.sum(adj, axis=0)
    avg_d_log = jnp.mean(jnp.log(in_deg + 1.0))   # avg_d['log'] (kept as an array -> no recompiles)

    scores = pna_net_forward(packed, node_types, adj, snorm_n, memb, avg_d_log)
    jax.block_until_ready(scores)
    assert scores.shape == (NUM_GRAPHS, 1) and scores.dtype == jnp.float32
    assert bool(jnp.all(jnp.isfinite(scores)))
    print("KERNEL_OK")
</pallas_src>

<mosaic_0001>
module attributes {stable_mosaic.version = 11 : i64} {
  func.func @_pna_net_kernel(%arg0: memref<1xf32, #tpu.memory_space<smem>>, %arg1: memref<16x32xf32, #tpu.memory_space<vmem>>, %arg2: memref<16x16xf32, #tpu.memory_space<vmem>>, %arg3: memref<16x16xf32, #tpu.memory_space<vmem>>, %arg4: memref<16x1xf32, #tpu.memory_space<vmem>>, %arg5: memref<2x16xf32, #tpu.memory_space<vmem>>, %arg6: memref<2x32x32xf32, #tpu.memory_space<vmem>>, %arg7: memref<2x32x32xf32, #tpu.memory_space<vmem>>, %arg8: memref<2x1x32xf32, #tpu.memory_space<vmem>>, %arg9: memref<2x416x32xf32, #tpu.memory_space<vmem>>, %arg10: memref<2x1x32xf32, #tpu.memory_space<vmem>>, %arg11: memref<2x1x32xf32, #tpu.memory_space<vmem>>, %arg12: memref<2x1x32xf32, #tpu.memory_space<vmem>>, %arg13: memref<2x32x32xf32, #tpu.memory_space<vmem>>, %arg14: memref<2x1x32xf32, #tpu.memory_space<vmem>>, %arg15: memref<32x16xf32, #tpu.memory_space<vmem>>, %arg16: memref<1x16xf32, #tpu.memory_space<vmem>>, %arg17: memref<16x8xf32, #tpu.memory_space<vmem>>, %arg18: memref<1x8xf32, #tpu.memory_space<vmem>>, %arg19: memref<8x128xf32, #tpu.memory_space<vmem>>, %arg20: memref<1x128xf32, #tpu.memory_space<vmem>>, %arg21: memref<2x128xf32, #tpu.memory_space<vmem>>) attributes {dimension_semantics = [], scalar_prefetch = 0 : i64, scratch_operands = 0 : i64, tpu.core_type = #tpu.core_type<tc>} {
    %c0 = arith.constant 0 : index
    %c0_0 = arith.constant 0 : index
    %0 = vector.load %arg1[%c0, %c0_0] : memref<16x32xf32, #tpu.memory_space<vmem>>, vector<16x32xf32>
    %c0_1 = arith.constant 0 : index
    %c0_2 = arith.constant 0 : index
    %1 = vector.load %arg2[%c0_1, %c0_2] : memref<16x16xf32, #tpu.memory_space<vmem>>, vector<16x16xf32>
    %c0_3 = arith.constant 0 : index
    %c0_4 = arith.constant 0 : index
    %2 = vector.load %arg3[%c0_3, %c0_4] : memref<16x16xf32, #tpu.memory_space<vmem>>, vector<16x16xf32>
    %c0_5 = arith.constant 0 : index
    %c0_6 = arith.constant 0 : index
    %3 = vector.load %arg4[%c0_5, %c0_6] : memref<16x1xf32, #tpu.memory_space<vmem>>, vector<16x1xf32>
    %c0_7 = arith.constant 0 : index
    %4 = memref.load %arg0[%c0_7] : memref<1xf32, #tpu.memory_space<smem>>
    %cst = arith.constant dense<0.000000e+00> : vector<16xf32>
    %5 = vector.multi_reduction <add>, %2, %cst [1] : vector<16x16xf32> to vector<16xf32>
    %6 = vector.shape_cast %5 : vector<16xf32> to vector<16x1xf32>
    %cst_8 = arith.constant 0.000000e+00 : f32
    %7 = vector.broadcast %cst_8 : f32 to vector<16x1xf32>
    %8 = arith.cmpf ogt, %6, %7 : vector<16x1xf32>
    %cst_9 = arith.constant 1.000000e+00 : f32
    %9 = vector.broadcast %cst_9 : f32 to vector<16x1xf32>
    %10 = arith.maximumf %6, %9 : vector<16x1xf32>
    %cst_10 = arith.constant 1.000000e+00 : f32
    %11 = vector.broadcast %cst_10 : f32 to vector<16x1xf32>
    %12 = arith.divf %11, %10 : vector<16x1xf32>
    %cst_11 = arith.constant 1.000000e+00 : f32
    %13 = vector.broadcast %cst_11 : f32 to vector<16x1xf32>
    %14 = arith.addf %6, %13 : vector<16x1xf32>
    %15 = math.log %14 : vector<16x1xf32>
    %cst_12 = arith.constant 1.000000e+00 : f32
    %16 = arith.divf %cst_12, %4 : f32
    %17 = vector.broadcast %16 : f32 to vector<16x1xf32>
    %18 = arith.mulf %15, %17 : vector<16x1xf32>
    %cst_13 = arith.constant 1.000000e+00 : f32
    %19 = vector.broadcast %cst_13 : f32 to vector<16x1xf32>
    %20 = arith.select %8, %15, %19 : vector<16x1xi1>, vector<16x1xf32>
    %21 = tpu.reciprocal %20 {approx = true} : vector<16x1xf32> -> vector<16x1xf32>
    %22 = vector.broadcast %4 : f32 to vector<16x1xf32>
    %23 = arith.mulf %22, %21 : vector<16x1xf32>
    %c0_14 = arith.constant 0 : index
    %c0_15 = arith.constant 0 : index
    %c0_16 = arith.constant 0 : index
    %24 = vector.load %arg6[%c0_14, %c0_15, %c0_16] : memref<2x32x32xf32, #tpu.memory_space<vmem>>, vector<1x32x32xf32>
    %25 = vector.shape_cast %24 : vector<1x32x32xf32> to vector<32x32xf32>
    %cst_17 = arith.constant dense<0.000000e+00> : vector<16x32xf32>
    %26 = tpu.matmul %0, %25, %cst_17 {dimension_numbers = #tpu.dot_dimension_numbers<[1], [0], [0], [1], [0, 0, 1, 1], [], []>} : vector<16x32xf32>, vector<32x32xf32>, vector<16x32xf32> -> vector<16x32xf32>
    %c0_18 = arith.constant 0 : index
    %c0_19 = arith.constant 0 : index
    %c0_20 = arith.constant 0 : index
    %27 = vector.load %arg7[%c0_18, %c0_19, %c0_20] : memref<2x32x32xf32, #tpu.memory_space<vmem>>, vector<1x32x32xf32>
    %28 = vector.shape_cast %27 : vector<1x32x32xf32> to vector<32x32xf32>
    %cst_21 = arith.constant dense<0.000000e+00> : vector<16x32xf32>
    %29 = tpu.matmul %0, %28, %cst_21 {dimension_numbers = #tpu.dot_dimension_numbers<[1], [0], [0], [1], [0, 0, 1, 1], [], []>} : vector<16x32xf32>, vector<32x32xf32>, vector<16x32xf32> -> vector<16x32xf32>
    %c0_22 = arith.constant 0 : index
    %c0_23 = arith.constant 0 : index
    %c0_24 = arith.constant 0 : index
    %30 = vector.load %arg8[%c0_22, %c0_23, %c0_24] : memref<2x1x32xf32, #tpu.memory_space<vmem>>, vector<1x1x32xf32>
    %31 = vector.shape_cast %30 : vector<1x1x32xf32> to vector<1x32xf32>
    %32 = vector.broadcast %31 : vector<1x32xf32> to vector<16x32xf32>
    %33 = arith.addf %29, %32 : vector<16x32xf32>
    %cst_25 = arith.constant dense<0.000000e+00> : vector<16x32xf32>
    %34 = tpu.matmul %2, %26, %cst_25 {dimension_numbers = #tpu.dot_dimension_numbers<[1], [0], [0], [1], [0, 0, 1, 1], [], []>} : vector<16x16xf32>, vector<16x32xf32>, vector<16x32xf32> -> vector<16x32xf32>
    %35 = vector.broadcast %12 : vector<16x1xf32> to vector<16x32xf32>
    %36 = arith.mulf %34, %35 : vector<16x32xf32>
    %37 = arith.mulf %26, %26 : vector<16x32xf32>
    %cst_26 = arith.constant dense<0.000000e+00> : vector<16x32xf32>
    %38 = tpu.matmul %2, %37, %cst_26 {dimension_numbers = #tpu.dot_dimension_numbers<[1], [0], [0], [1], [0, 0, 1, 1], [], []>} : vector<16x16xf32>, vector<16x32xf32>, vector<16x32xf32> -> vector<16x32xf32>
    %39 = vector.broadcast %12 : vector<16x1xf32> to vector<16x32xf32>
    %40 = arith.mulf %38, %39 : vector<16x32xf32>
    %41 = arith.mulf %36, %36 : vector<16x32xf32>
    %42 = arith.subf %40, %41 : vector<16x32xf32>
    %cst_27 = arith.constant 0.000000e+00 : f32
    %43 = vector.broadcast %cst_27 : f32 to vector<16x32xf32>
    %44 = arith.maximumf %42, %43 : vector<16x32xf32>
    %cst_28 = arith.constant 9.99999974E-6 : f32
    %45 = vector.broadcast %cst_28 : f32 to vector<16x32xf32>
    %46 = arith.addf %44, %45 : vector<16x32xf32>
    %47 = math.sqrt %46 : vector<16x32xf32>
    %cst_29 = arith.constant 0.000000e+00 : f32
    %cst_30 = arith.constant 1.000000e+30 : f32
    %48 = arith.subf %cst_29, %cst_30 : f32
    %49 = vector.broadcast %48 : f32 to vector<16x32xf32>
    %cst_31 = arith.constant 1.000000e+30 : f32
    %50 = vector.broadcast %cst_31 : f32 to vector<16x32xf32>
    %51 = vector.extract_strided_slice %1 {offsets = [0, 0], sizes = [8, 16], strides = [1, 1]} : vector<16x16xf32> to vector<8x16xf32>
    %52 = vector.shape_cast %51 : vector<8x16xf32> to vector<8x16x1xf32>
    %cst_32 = arith.constant 0.000000e+00 : f32
    %53 = vector.broadcast %cst_32 : f32 to vector<8x16x1xf32>
    %54 = arith.cmpf ogt, %52, %53 : vector<8x16x1xf32>
    %55 = vector.extract_strided_slice %26 {offsets = [0, 0], sizes = [8, 32], strides = [1, 1]} : vector<16x32xf32> to vector<8x32xf32>
    %56 = vector.shape_cast %55 : vector<8x32xf32> to vector<8x1x32xf32>
    %cst_33 = arith.constant 0.000000e+00 : f32
    %cst_34 = arith.constant 1.000000e+30 : f32
    %57 = arith.subf %cst_33, %cst_34 : f32
    %58 = vector.shape_cast %54 : vector<8x16x1xi1> to vector<8x16x1xi1>
    %59 = vector.broadcast %58 : vector<8x16x1xi1> to vector<8x16x32xi1>
    %60 = vector.shape_cast %56 : vector<8x1x32xf32> to vector<8x1x32xf32>
    %61 = vector.broadcast %60 : vector<8x1x32xf32> to vector<8x16x32xf32>
    %62 = vector.broadcast %57 : f32 to vector<8x16x32xf32>
    %63 = arith.select %59, %61, %62 : vector<8x16x32xi1>, vector<8x16x32xf32>
    %cst_35 = arith.constant dense<0xFF800000> : vector<16x32xf32>
    %64 = vector.multi_reduction <maximumf>, %63, %cst_35 [0] : vector<8x16x32xf32> to vector<16x32xf32>
    %65 = arith.maximumf %49, %64 : vector<16x32xf32>
    %cst_36 = arith.constant 1.000000e+30 : f32
    %66 = vector.shape_cast %54 : vector<8x16x1xi1> to vector<8x16x1xi1>
    %67 = vector.broadcast %66 : vector<8x16x1xi1> to vector<8x16x32xi1>
    %68 = vector.shape_cast %56 : vector<8x1x32xf32> to vector<8x1x32xf32>
    %69 = vector.broadcast %68 : vector<8x1x32xf32> to vector<8x16x32xf32>
    %70 = vector.broadcast %cst_36 : f32 to vector<8x16x32xf32>
    %71 = arith.select %67, %69, %70 : vector<8x16x32xi1>, vector<8x16x32xf32>
    %cst_37 = arith.constant dense<0x7F800000> : vector<16x32xf32>
    %72 = vector.multi_reduction <minimumf>, %71, %cst_37 [0] : vector<8x16x32xf32> to vector<16x32xf32>
    %73 = arith.minimumf %50, %72 : vector<16x32xf32>
    %74 = vector.extract_strided_slice %1 {offsets = [8, 0], sizes = [8, 16], strides = [1, 1]} : vector<16x16xf32> to vector<8x16xf32>
    %75 = vector.shape_cast %74 : vector<8x16xf32> to vector<8x16x1xf32>
    %cst_38 = arith.constant 0.000000e+00 : f32
    %76 = vector.broadcast %cst_38 : f32 to vector<8x16x1xf32>
    %77 = arith.cmpf ogt, %75, %76 : vector<8x16x1xf32>
    %78 = vector.extract_strided_slice %26 {offsets = [8, 0], sizes = [8, 32], strides = [1, 1]} : vector<16x32xf32> to vector<8x32xf32>
    %79 = vector.shape_cast %78 : vector<8x32xf32> to vector<8x1x32xf32>
    %cst_39 = arith.constant 0.000000e+00 : f32
    %cst_40 = arith.constant 1.000000e+30 : f32
    %80 = arith.subf %cst_39, %cst_40 : f32
    %81 = vector.shape_cast %77 : vector<8x16x1xi1> to vector<8x16x1xi1>
    %82 = vector.broadcast %81 : vector<8x16x1xi1> to vector<8x16x32xi1>
    %83 = vector.shape_cast %79 : vector<8x1x32xf32> to vector<8x1x32xf32>
    %84 = vector.broadcast %83 : vector<8x1x32xf32> to vector<8x16x32xf32>
    %85 = vector.broadcast %80 : f32 to vector<8x16x32xf32>
    %86 = arith.select %82, %84, %85 : vector<8x16x32xi1>, vector<8x16x32xf32>
    %cst_41 = arith.constant dense<0xFF800000> : vector<16x32xf32>
    %87 = vector.multi_reduction <maximumf>, %86, %cst_41 [0] : vector<8x16x32xf32> to vector<16x32xf32>
    %88 = arith.maximumf %65, %87 : vector<16x32xf32>
    %cst_42 = arith.constant 1.000000e+30 : f32
    %89 = vector.shape_cast %77 : vector<8x16x1xi1> to vector<8x16x1xi1>
    %90 = vector.broadcast %89 : vector<8x16x1xi1> to vector<8x16x32xi1>
    %91 = vector.shape_cast %79 : vector<8x1x32xf32> to vector<8x1x32xf32>
    %92 = vector.broadcast %91 : vector<8x1x32xf32> to vector<8x16x32xf32>
    %93 = vector.broadcast %cst_42 : f32 to vector<8x16x32xf32>
    %94 = arith.select %90, %92, %93 : vector<8x16x32xi1>, vector<8x16x32xf32>
    %cst_43 = arith.constant dense<0x7F800000> : vector<16x32xf32>
    %95 = vector.multi_reduction <minimumf>, %94, %cst_43 [0] : vector<8x16x32xf32> to vector<16x32xf32>
    %96 = arith.minimumf %73, %95 : vector<16x32xf32>
    %97 = arith.addf %36, %33 : vector<16x32xf32>
    %cst_44 = arith.constant 0.000000e+00 : f32
    %98 = vector.shape_cast %8 : vector<16x1xi1> to vector<16x1xi1>
    %99 = vector.broadcast %98 : vector<16x1xi1> to vector<16x32xi1>
    %100 = vector.broadcast %cst_44 : f32 to vector<16x32xf32>
    %101 = arith.select %99, %97, %100 : vector<16x32xi1>, vector<16x32xf32>
    %102 = arith.addf %88, %33 : vector<16x32xf32>
    %cst_45 = arith.constant 0.000000e+00 : f32
    %103 = vector.shape_cast %8 : vector<16x1xi1> to vector<16x1xi1>
    %104 = vector.broadcast %103 : vector<16x1xi1> to vector<16x32xi1>
    %105 = vector.broadcast %cst_45 : f32 to vector<16x32xf32>
    %106 = arith.select %104, %102, %105 : vector<16x32xi1>, vector<16x32xf32>
    %107 = arith.addf %96, %33 : vector<16x32xf32>
    %cst_46 = arith.constant 0.000000e+00 : f32
    %108 = vector.shape_cast %8 : vector<16x1xi1> to vector<16x1xi1>
    %109 = vector.broadcast %108 : vector<16x1xi1> to vector<16x32xi1>
    %110 = vector.broadcast %cst_46 : f32 to vector<16x32xf32>
    %111 = arith.select %109, %107, %110 : vector<16x32xi1>, vector<16x32xf32>
    %cst_47 = arith.constant 0.000000e+00 : f32
    %112 = vector.shape_cast %8 : vector<16x1xi1> to vector<16x1xi1>
    %113 = vector.broadcast %112 : vector<16x1xi1> to vector<16x32xi1>
    %114 = vector.broadcast %cst_47 : f32 to vector<16x32xf32>
    %115 = arith.select %113, %47, %114 : vector<16x32xi1>, vector<16x32xf32>
    %116 = tpu.concatenate %101, %106, %111, %115 in 1 : vector<16x32xf32>, vector<16x32xf32>, vector<16x32xf32>, vector<16x32xf32> -> vector<16x128xf32>
    %117 = vector.broadcast %18 : vector<16x1xf32> to vector<16x128xf32>
    %118 = arith.mulf %117, %116 : vector<16x128xf32>
    %119 = vector.broadcast %23 : vector<16x1xf32> to vector<16x128xf32>
    %120 = arith.mulf %119, %116 : vector<16x128xf32>
    %121 = tpu.concatenate %0, %116, %118, %120 in 1 : vector<16x32xf32>, vector<16x128xf32>, vector<16x128xf32>, vector<16x128xf32> -> vector<16x416xf32>
    %c0_48 = arith.constant 0 : index
    %c0_49 = arith.constant 0 : index
    %c0_50 = arith.constant 0 : index
    %122 = vector.load %arg9[%c0_48, %c0_49, %c0_50] : memref<2x416x32xf32, #tpu.memory_space<vmem>>, vector<1x416x32xf32>
    %123 = vector.shape_cast %122 : vector<1x416x32xf32> to vector<416x32xf32>
    %cst_51 = arith.constant dense<0.000000e+00> : vector<16x32xf32>
    %124 = tpu.matmul %121, %123, %cst_51 {dimension_numbers = #tpu.dot_dimension_numbers<[1], [0], [0], [1], [0, 0, 1, 1], [], []>} : vector<16x416xf32>, vector<416x32xf32>, vector<16x32xf32> -> vector<16x32xf32>
    %c0_52 = arith.constant 0 : index
    %c0_53 = arith.constant 0 : index
    %c0_54 = arith.constant 0 : index
    %125 = vector.load %arg10[%c0_52, %c0_53, %c0_54] : memref<2x1x32xf32, #tpu.memory_space<vmem>>, vector<1x1x32xf32>
    %126 = vector.shape_cast %125 : vector<1x1x32xf32> to vector<1x32xf32>
    %127 = vector.broadcast %126 : vector<1x32xf32> to vector<16x32xf32>
    %128 = arith.addf %124, %127 : vector<16x32xf32>
    %129 = vector.broadcast %3 : vector<16x1xf32> to vector<16x32xf32>
    %130 = arith.mulf %128, %129 : vector<16x32xf32>
    %cst_55 = arith.constant dense<0.000000e+00> : vector<32xf32>
    %131 = vector.multi_reduction <add>, %130, %cst_55 [0] : vector<16x32xf32> to vector<32xf32>
    %132 = vector.shape_cast %131 : vector<32xf32> to vector<1x32xf32>
    %cst_56 = arith.constant 1.600000e+01 : f32
    %133 = vector.broadcast %cst_56 : f32 to vector<1x32xf32>
    %134 = arith.divf %132, %133 : vector<1x32xf32>
    %135 = vector.broadcast %134 : vector<1x32xf32> to vector<16x32xf32>
    %136 = arith.subf %130, %135 : vector<16x32xf32>
    %137 = arith.mulf %136, %136 : vector<16x32xf32>
    %cst_57 = arith.constant dense<0.000000e+00> : vector<32xf32>
    %138 = vector.multi_reduction <add>, %137, %cst_57 [0] : vector<16x32xf32> to vector<32xf32>
    %139 = vector.shape_cast %138 : vector<32xf32> to vector<1x32xf32>
    %cst_58 = arith.constant 1.600000e+01 : f32
    %140 = vector.broadcast %cst_58 : f32 to vector<1x32xf32>
    %141 = arith.divf %139, %140 : vector<1x32xf32>
    %cst_59 = arith.constant 9.99999974E-6 : f32
    %142 = vector.broadcast %cst_59 : f32 to vector<1x32xf32>
    %143 = arith.addf %141, %142 : vector<1x32xf32>
    %144 = math.rsqrt %143 : vector<1x32xf32>
    %145 = vector.broadcast %144 : vector<1x32xf32> to vector<16x32xf32>
    %146 = arith.mulf %136, %145 : vector<16x32xf32>
    %c0_60 = arith.constant 0 : index
    %c0_61 = arith.constant 0 : index
    %c0_62 = arith.constant 0 : index
    %147 = vector.load %arg11[%c0_60, %c0_61, %c0_62] : memref<2x1x32xf32, #tpu.memory_space<vmem>>, vector<1x1x32xf32>
    %148 = vector.shape_cast %147 : vector<1x1x32xf32> to vector<1x32xf32>
    %149 = vector.broadcast %148 : vector<1x32xf32> to vector<16x32xf32>
    %150 = arith.mulf %146, %149 : vector<16x32xf32>
    %c0_63 = arith.constant 0 : index
    %c0_64 = arith.constant 0 : index
    %c0_65 = arith.constant 0 : index
    %151 = vector.load %arg12[%c0_63, %c0_64, %c0_65] : memref<2x1x32xf32, #tpu.memory_space<vmem>>, vector<1x1x32xf32>
    %152 = vector.shape_cast %151 : vector<1x1x32xf32> to vector<1x32xf32>
    %153 = vector.broadcast %152 : vector<1x32xf32> to vector<16x32xf32>
    %154 = arith.addf %150, %153 : vector<16x32xf32>
    %cst_66 = arith.constant 0.000000e+00 : f32
    %155 = vector.broadcast %cst_66 : f32 to vector<16x32xf32>
    %156 = arith.maximumf %154, %155 : vector<16x32xf32>
    %c0_67 = arith.constant 0 : index
    %c0_68 = arith.constant 0 : index
    %c0_69 = arith.constant 0 : index
    %157 = vector.load %arg13[%c0_67, %c0_68, %c0_69] : memref<2x32x32xf32, #tpu.memory_space<vmem>>, vector<1x32x32xf32>
    %158 = vector.shape_cast %157 : vector<1x32x32xf32> to vector<32x32xf32>
    %cst_70 = arith.constant dense<0.000000e+00> : vector<16x32xf32>
    %159 = tpu.matmul %156, %158, %cst_70 {dimension_numbers = #tpu.dot_dimension_numbers<[1], [0], [0], [1], [0, 0, 1, 1], [], []>} : vector<16x32xf32>, vector<32x32xf32>, vector<16x32xf32> -> vector<16x32xf32>
    %c0_71 = arith.constant 0 : index
    %c0_72 = arith.constant 0 : index
    %c0_73 = arith.constant 0 : index
    %160 = vector.load %arg14[%c0_71, %c0_72, %c0_73] : memref<2x1x32xf32, #tpu.memory_space<vmem>>, vector<1x1x32xf32>
    %161 = vector.shape_cast %160 : vector<1x1x32xf32> to vector<1x32xf32>
    %162 = vector.broadcast %161 : vector<1x32xf32> to vector<16x32xf32>
    %163 = arith.addf %159, %162 : vector<16x32xf32>
    %cst_74 = arith.constant 0.000000e+00 : f32
    %164 = vector.broadcast %cst_74 : f32 to vector<16x32xf32>
    %165 = arith.cmpf oge, %163, %164 : vector<16x32xf32>
    %cst_75 = arith.constant 0.00999999977 : f32
    %166 = vector.broadcast %cst_75 : f32 to vector<16x32xf32>
    %167 = arith.mulf %166, %163 : vector<16x32xf32>
    %168 = arith.select %165, %163, %167 : vector<16x32xi1>, vector<16x32xf32>
    %169 = arith.addf %0, %168 : vector<16x32xf32>
    %c1 = arith.constant 1 : index
    %c0_76 = arith.constant 0 : index
    %c0_77 = arith.constant 0 : index
    %170 = vector.load %arg6[%c1, %c0_76, %c0_77] : memref<2x32x32xf32, #tpu.memory_space<vmem>>, vector<1x32x32xf32>
    %171 = vector.shape_cast %170 : vector<1x32x32xf32> to vector<32x32xf32>
    %cst_78 = arith.constant dense<0.000000e+00> : vector<16x32xf32>
    %172 = tpu.matmul %169, %171, %cst_78 {dimension_numbers = #tpu.dot_dimension_numbers<[1], [0], [0], [1], [0, 0, 1, 1], [], []>} : vector<16x32xf32>, vector<32x32xf32>, vector<16x32xf32> -> vector<16x32xf32>
    %c1_79 = arith.constant 1 : index
    %c0_80 = arith.constant 0 : index
    %c0_81 = arith.constant 0 : index
    %173 = vector.load %arg7[%c1_79, %c0_80, %c0_81] : memref<2x32x32xf32, #tpu.memory_space<vmem>>, vector<1x32x32xf32>
    %174 = vector.shape_cast %173 : vector<1x32x32xf32> to vector<32x32xf32>
    %cst_82 = arith.constant dense<0.000000e+00> : vector<16x32xf32>
    %175 = tpu.matmul %169, %174, %cst_82 {dimension_numbers = #tpu.dot_dimension_numbers<[1], [0], [0], [1], [0, 0, 1, 1], [], []>} : vector<16x32xf32>, vector<32x32xf32>, vector<16x32xf32> -> vector<16x32xf32>
    %c1_83 = arith.constant 1 : index
    %c0_84 = arith.constant 0 : index
    %c0_85 = arith.constant 0 : index
    %176 = vector.load %arg8[%c1_83, %c0_84, %c0_85] : memref<2x1x32xf32, #tpu.memory_space<vmem>>, vector<1x1x32xf32>
    %177 = vector.shape_cast %176 : vector<1x1x32xf32> to vector<1x32xf32>
    %178 = vector.broadcast %177 : vector<1x32xf32> to vector<16x32xf32>
    %179 = arith.addf %175, %178 : vector<16x32xf32>
    %cst_86 = arith.constant dense<0.000000e+00> : vector<16x32xf32>
    %180 = tpu.matmul %2, %172, %cst_86 {dimension_numbers = #tpu.dot_dimension_numbers<[1], [0], [0], [1], [0, 0, 1, 1], [], []>} : vector<16x16xf32>, vector<16x32xf32>, vector<16x32xf32> -> vector<16x32xf32>
    %181 = vector.broadcast %12 : vector<16x1xf32> to vector<16x32xf32>
    %182 = arith.mulf %180, %181 : vector<16x32xf32>
    %183 = arith.mulf %172, %172 : vector<16x32xf32>
    %cst_87 = arith.constant dense<0.000000e+00> : vector<16x32xf32>
    %184 = tpu.matmul %2, %183, %cst_87 {dimension_numbers = #tpu.dot_dimension_numbers<[1], [0], [0], [1], [0, 0, 1, 1], [], []>} : vector<16x16xf32>, vector<16x32xf32>, vector<16x32xf32> -> vector<16x32xf32>
    %185 = vector.broadcast %12 : vector<16x1xf32> to vector<16x32xf32>
    %186 = arith.mulf %184, %185 : vector<16x32xf32>
    %187 = arith.mulf %182, %182 : vector<16x32xf32>
    %188 = arith.subf %186, %187 : vector<16x32xf32>
    %cst_88 = arith.constant 0.000000e+00 : f32
    %189 = vector.broadcast %cst_88 : f32 to vector<16x32xf32>
    %190 = arith.maximumf %188, %189 : vector<16x32xf32>
    %cst_89 = arith.constant 9.99999974E-6 : f32
    %191 = vector.broadcast %cst_89 : f32 to vector<16x32xf32>
    %192 = arith.addf %190, %191 : vector<16x32xf32>
    %193 = math.sqrt %192 : vector<16x32xf32>
    %cst_90 = arith.constant 0.000000e+00 : f32
    %cst_91 = arith.constant 1.000000e+30 : f32
    %194 = arith.subf %cst_90, %cst_91 : f32
    %195 = vector.broadcast %194 : f32 to vector<16x32xf32>
    %cst_92 = arith.constant 1.000000e+30 : f32
    %196 = vector.broadcast %cst_92 : f32 to vector<16x32xf32>
    %197 = vector.extract_strided_slice %1 {offsets = [0, 0], sizes = [8, 16], strides = [1, 1]} : vector<16x16xf32> to vector<8x16xf32>
    %198 = vector.shape_cast %197 : vector<8x16xf32> to vector<8x16x1xf32>
    %cst_93 = arith.constant 0.000000e+00 : f32
    %199 = vector.broadcast %cst_93 : f32 to vector<8x16x1xf32>
    %200 = arith.cmpf ogt, %198, %199 : vector<8x16x1xf32>
    %201 = vector.extract_strided_slice %172 {offsets = [0, 0], sizes = [8, 32], strides = [1, 1]} : vector<16x32xf32> to vector<8x32xf32>
    %202 = vector.shape_cast %201 : vector<8x32xf32> to vector<8x1x32xf32>
    %cst_94 = arith.constant 0.000000e+00 : f32
    %cst_95 = arith.constant 1.000000e+30 : f32
    %203 = arith.subf %cst_94, %cst_95 : f32
    %204 = vector.shape_cast %200 : vector<8x16x1xi1> to vector<8x16x1xi1>
    %205 = vector.broadcast %204 : vector<8x16x1xi1> to vector<8x16x32xi1>
    %206 = vector.shape_cast %202 : vector<8x1x32xf32> to vector<8x1x32xf32>
    %207 = vector.broadcast %206 : vector<8x1x32xf32> to vector<8x16x32xf32>
    %208 = vector.broadcast %203 : f32 to vector<8x16x32xf32>
    %209 = arith.select %205, %207, %208 : vector<8x16x32xi1>, vector<8x16x32xf32>
    %cst_96 = arith.constant dense<0xFF800000> : vector<16x32xf32>
    %210 = vector.multi_reduction <maximumf>, %209, %cst_96 [0] : vector<8x16x32xf32> to vector<16x32xf32>
    %211 = arith.maximumf %195, %210 : vector<16x32xf32>
    %cst_97 = arith.constant 1.000000e+30 : f32
    %212 = vector.shape_cast %200 : vector<8x16x1xi1> to vector<8x16x1xi1>
    %213 = vector.broadcast %212 : vector<8x16x1xi1> to vector<8x16x32xi1>
    %214 = vector.shape_cast %202 : vector<8x1x32xf32> to vector<8x1x32xf32>
    %215 = vector.broadcast %214 : vector<8x1x32xf32> to vector<8x16x32xf32>
    %216 = vector.broadcast %cst_97 : f32 to vector<8x16x32xf32>
    %217 = arith.select %213, %215, %216 : vector<8x16x32xi1>, vector<8x16x32xf32>
    %cst_98 = arith.constant dense<0x7F800000> : vector<16x32xf32>
    %218 = vector.multi_reduction <minimumf>, %217, %cst_98 [0] : vector<8x16x32xf32> to vector<16x32xf32>
    %219 = arith.minimumf %196, %218 : vector<16x32xf32>
    %220 = vector.extract_strided_slice %1 {offsets = [8, 0], sizes = [8, 16], strides = [1, 1]} : vector<16x16xf32> to vector<8x16xf32>
    %221 = vector.shape_cast %220 : vector<8x16xf32> to vector<8x16x1xf32>
    %cst_99 = arith.constant 0.000000e+00 : f32
    %222 = vector.broadcast %cst_99 : f32 to vector<8x16x1xf32>
    %223 = arith.cmpf ogt, %221, %222 : vector<8x16x1xf32>
    %224 = vector.extract_strided_slice %172 {offsets = [8, 0], sizes = [8, 32], strides = [1, 1]} : vector<16x32xf32> to vector<8x32xf32>
    %225 = vector.shape_cast %224 : vector<8x32xf32> to vector<8x1x32xf32>
    %cst_100 = arith.constant 0.000000e+00 : f32
    %cst_101 = arith.constant 1.000000e+30 : f32
    %226 = arith.subf %cst_100, %cst_101 : f32
    %227 = vector.shape_cast %223 : vector<8x16x1xi1> to vector<8x16x1xi1>
    %228 = vector.broadcast %227 : vector<8x16x1xi1> to vector<8x16x32xi1>
    %229 = vector.shape_cast %225 : vector<8x1x32xf32> to vector<8x1x32xf32>
    %230 = vector.broadcast %229 : vector<8x1x32xf32> to vector<8x16x32xf32>
    %231 = vector.broadcast %226 : f32 to vector<8x16x32xf32>
    %232 = arith.select %228, %230, %231 : vector<8x16x32xi1>, vector<8x16x32xf32>
    %cst_102 = arith.constant dense<0xFF800000> : vector<16x32xf32>
    %233 = vector.multi_reduction <maximumf>, %232, %cst_102 [0] : vector<8x16x32xf32> to vector<16x32xf32>
    %234 = arith.maximumf %211, %233 : vector<16x32xf32>
    %cst_103 = arith.constant 1.000000e+30 : f32
    %235 = vector.shape_cast %223 : vector<8x16x1xi1> to vector<8x16x1xi1>
    %236 = vector.broadcast %235 : vector<8x16x1xi1> to vector<8x16x32xi1>
    %237 = vector.shape_cast %225 : vector<8x1x32xf32> to vector<8x1x32xf32>
    %238 = vector.broadcast %237 : vector<8x1x32xf32> to vector<8x16x32xf32>
    %239 = vector.broadcast %cst_103 : f32 to vector<8x16x32xf32>
    %240 = arith.select %236, %238, %239 : vector<8x16x32xi1>, vector<8x16x32xf32>
    %cst_104 = arith.constant dense<0x7F800000> : vector<16x32xf32>
    %241 = vector.multi_reduction <minimumf>, %240, %cst_104 [0] : vector<8x16x32xf32> to vector<16x32xf32>
    %242 = arith.minimumf %219, %241 : vector<16x32xf32>
    %243 = arith.addf %182, %179 : vector<16x32xf32>
    %cst_105 = arith.constant 0.000000e+00 : f32
    %244 = vector.shape_cast %8 : vector<16x1xi1> to vector<16x1xi1>
    %245 = vector.broadcast %244 : vector<16x1xi1> to vector<16x32xi1>
    %246 = vector.broadcast %cst_105 : f32 to vector<16x32xf32>
    %247 = arith.select %245, %243, %246 : vector<16x32xi1>, vector<16x32xf32>
    %248 = arith.addf %234, %179 : vector<16x32xf32>
    %cst_106 = arith.constant 0.000000e+00 : f32
    %249 = vector.shape_cast %8 : vector<16x1xi1> to vector<16x1xi1>
    %250 = vector.broadcast %249 : vector<16x1xi1> to vector<16x32xi1>
    %251 = vector.broadcast %cst_106 : f32 to vector<16x32xf32>
    %252 = arith.select %250, %248, %251 : vector<16x32xi1>, vector<16x32xf32>
    %253 = arith.addf %242, %179 : vector<16x32xf32>
    %cst_107 = arith.constant 0.000000e+00 : f32
    %254 = vector.shape_cast %8 : vector<16x1xi1> to vector<16x1xi1>
    %255 = vector.broadcast %254 : vector<16x1xi1> to vector<16x32xi1>
    %256 = vector.broadcast %cst_107 : f32 to vector<16x32xf32>
    %257 = arith.select %255, %253, %256 : vector<16x32xi1>, vector<16x32xf32>
    %cst_108 = arith.constant 0.000000e+00 : f32
    %258 = vector.shape_cast %8 : vector<16x1xi1> to vector<16x1xi1>
    %259 = vector.broadcast %258 : vector<16x1xi1> to vector<16x32xi1>
    %260 = vector.broadcast %cst_108 : f32 to vector<16x32xf32>
    %261 = arith.select %259, %193, %260 : vector<16x32xi1>, vector<16x32xf32>
    %262 = tpu.concatenate %247, %252, %257, %261 in 1 : vector<16x32xf32>, vector<16x32xf32>, vector<16x32xf32>, vector<16x32xf32> -> vector<16x128xf32>
    %263 = vector.broadcast %18 : vector<16x1xf32> to vector<16x128xf32>
    %264 = arith.mulf %263, %262 : vector<16x128xf32>
    %265 = vector.broadcast %23 : vector<16x1xf32> to vector<16x128xf32>
    %266 = arith.mulf %265, %262 : vector<16x128xf32>
    %267 = tpu.concatenate %169, %262, %264, %266 in 1 : vector<16x32xf32>, vector<16x128xf32>, vector<16x128xf32>, vector<16x128xf32> -> vector<16x416xf32>
    %c1_109 = arith.constant 1 : index
    %c0_110 = arith.constant 0 : index
    %c0_111 = arith.constant 0 : index
    %268 = vector.load %arg9[%c1_109, %c0_110, %c0_111] : memref<2x416x32xf32, #tpu.memory_space<vmem>>, vector<1x416x32xf32>
    %269 = vector.shape_cast %268 : vector<1x416x32xf32> to vector<416x32xf32>
    %cst_112 = arith.constant dense<0.000000e+00> : vector<16x32xf32>
    %270 = tpu.matmul %267, %269, %cst_112 {dimension_numbers = #tpu.dot_dimension_numbers<[1], [0], [0], [1], [0, 0, 1, 1], [], []>} : vector<16x416xf32>, vector<416x32xf32>, vector<16x32xf32> -> vector<16x32xf32>
    %c1_113 = arith.constant 1 : index
    %c0_114 = arith.constant 0 : index
    %c0_115 = arith.constant 0 : index
    %271 = vector.load %arg10[%c1_113, %c0_114, %c0_115] : memref<2x1x32xf32, #tpu.memory_space<vmem>>, vector<1x1x32xf32>
    %272 = vector.shape_cast %271 : vector<1x1x32xf32> to vector<1x32xf32>
    %273 = vector.broadcast %272 : vector<1x32xf32> to vector<16x32xf32>
    %274 = arith.addf %270, %273 : vector<16x32xf32>
    %275 = vector.broadcast %3 : vector<16x1xf32> to vector<16x32xf32>
    %276 = arith.mulf %274, %275 : vector<16x32xf32>
    %cst_116 = arith.constant dense<0.000000e+00> : vector<32xf32>
    %277 = vector.multi_reduction <add>, %276, %cst_116 [0] : vector<16x32xf32> to vector<32xf32>
    %278 = vector.shape_cast %277 : vector<32xf32> to vector<1x32xf32>
    %cst_117 = arith.constant 1.600000e+01 : f32
    %279 = vector.broadcast %cst_117 : f32 to vector<1x32xf32>
    %280 = arith.divf %278, %279 : vector<1x32xf32>
    %281 = vector.broadcast %280 : vector<1x32xf32> to vector<16x32xf32>
    %282 = arith.subf %276, %281 : vector<16x32xf32>
    %283 = arith.mulf %282, %282 : vector<16x32xf32>
    %cst_118 = arith.constant dense<0.000000e+00> : vector<32xf32>
    %284 = vector.multi_reduction <add>, %283, %cst_118 [0] : vector<16x32xf32> to vector<32xf32>
    %285 = vector.shape_cast %284 : vector<32xf32> to vector<1x32xf32>
    %cst_119 = arith.constant 1.600000e+01 : f32
    %286 = vector.broadcast %cst_119 : f32 to vector<1x32xf32>
    %287 = arith.divf %285, %286 : vector<1x32xf32>
    %cst_120 = arith.constant 9.99999974E-6 : f32
    %288 = vector.broadcast %cst_120 : f32 to vector<1x32xf32>
    %289 = arith.addf %287, %288 : vector<1x32xf32>
    %290 = math.rsqrt %289 : vector<1x32xf32>
    %291 = vector.broadcast %290 : vector<1x32xf32> to vector<16x32xf32>
    %292 = arith.mulf %282, %291 : vector<16x32xf32>
    %c1_121 = arith.constant 1 : index
    %c0_122 = arith.constant 0 : index
    %c0_123 = arith.constant 0 : index
    %293 = vector.load %arg11[%c1_121, %c0_122, %c0_123] : memref<2x1x32xf32, #tpu.memory_space<vmem>>, vector<1x1x32xf32>
    %294 = vector.shape_cast %293 : vector<1x1x32xf32> to vector<1x32xf32>
    %295 = vector.broadcast %294 : vector<1x32xf32> to vector<16x32xf32>
    %296 = arith.mulf %292, %295 : vector<16x32xf32>
    %c1_124 = arith.constant 1 : index
    %c0_125 = arith.constant 0 : index
    %c0_126 = arith.constant 0 : index
    %297 = vector.load %arg12[%c1_124, %c0_125, %c0_126] : memref<2x1x32xf32, #tpu.memory_space<vmem>>, vector<1x1x32xf32>
    %298 = vector.shape_cast %297 : vector<1x1x32xf32> to vector<1x32xf32>
    %299 = vector.broadcast %298 : vector<1x32xf32> to vector<16x32xf32>
    %300 = arith.addf %296, %299 : vector<16x32xf32>
    %cst_127 = arith.constant 0.000000e+00 : f32
    %301 = vector.broadcast %cst_127 : f32 to vector<16x32xf32>
    %302 = arith.maximumf %300, %301 : vector<16x32xf32>
    %c1_128 = arith.constant 1 : index
    %c0_129 = arith.constant 0 : index
    %c0_130 = arith.constant 0 : index
    %303 = vector.load %arg13[%c1_128, %c0_129, %c0_130] : memref<2x32x32xf32, #tpu.memory_space<vmem>>, vector<1x32x32xf32>
    %304 = vector.shape_cast %303 : vector<1x32x32xf32> to vector<32x32xf32>
    %cst_131 = arith.constant dense<0.000000e+00> : vector<16x32xf32>
    %305 = tpu.matmul %302, %304, %cst_131 {dimension_numbers = #tpu.dot_dimension_numbers<[1], [0], [0], [1], [0, 0, 1, 1], [], []>} : vector<16x32xf32>, vector<32x32xf32>, vector<16x32xf32> -> vector<16x32xf32>
    %c1_132 = arith.constant 1 : index
    %c0_133 = arith.constant 0 : index
    %c0_134 = arith.constant 0 : index
    %306 = vector.load %arg14[%c1_132, %c0_133, %c0_134] : memref<2x1x32xf32, #tpu.memory_space<vmem>>, vector<1x1x32xf32>
    %307 = vector.shape_cast %306 : vector<1x1x32xf32> to vector<1x32xf32>
    %308 = vector.broadcast %307 : vector<1x32xf32> to vector<16x32xf32>
    %309 = arith.addf %305, %308 : vector<16x32xf32>
    %cst_135 = arith.constant 0.000000e+00 : f32
    %310 = vector.broadcast %cst_135 : f32 to vector<16x32xf32>
    %311 = arith.cmpf oge, %309, %310 : vector<16x32xf32>
    %cst_136 = arith.constant 0.00999999977 : f32
    %312 = vector.broadcast %cst_136 : f32 to vector<16x32xf32>
    %313 = arith.mulf %312, %309 : vector<16x32xf32>
    %314 = arith.select %311, %309, %313 : vector<16x32xi1>, vector<16x32xf32>
    %315 = arith.addf %169, %314 : vector<16x32xf32>
    %c0_137 = arith.constant 0 : index
    %c0_138 = arith.constant 0 : index
    %316 = vector.load %arg5[%c0_137, %c0_138] : memref<2x16xf32, #tpu.memory_space<vmem>>, vector<2x16xf32>
    %cst_139 = arith.constant dense<0.000000e+00> : vector<2x32xf32>
    %317 = tpu.matmul %316, %315, %cst_139 {dimension_numbers = #tpu.dot_dimension_numbers<[1], [0], [0], [1], [0, 0, 1, 1], [], []>} : vector<2x16xf32>, vector<16x32xf32>, vector<2x32xf32> -> vector<2x32xf32>
    %c0_140 = arith.constant 0 : index
    %c0_141 = arith.constant 0 : index
    %318 = vector.load %arg15[%c0_140, %c0_141] : memref<32x16xf32, #tpu.memory_space<vmem>>, vector<32x16xf32>
    %cst_142 = arith.constant dense<0.000000e+00> : vector<2x16xf32>
    %319 = tpu.matmul %317, %318, %cst_142 {dimension_numbers = #tpu.dot_dimension_numbers<[1], [0], [0], [1], [0, 0, 1, 1], [], []>} : vector<2x32xf32>, vector<32x16xf32>, vector<2x16xf32> -> vector<2x16xf32>
    %c0_143 = arith.constant 0 : index
    %c0_144 = arith.constant 0 : index
    %320 = vector.load %arg16[%c0_143, %c0_144] : memref<1x16xf32, #tpu.memory_space<vmem>>, vector<1x16xf32>
    %321 = vector.broadcast %320 : vector<1x16xf32> to vector<2x16xf32>
    %322 = arith.addf %319, %321 : vector<2x16xf32>
    %cst_145 = arith.constant 0.000000e+00 : f32
    %323 = vector.broadcast %cst_145 : f32 to vector<2x16xf32>
    %324 = arith.maximumf %322, %323 : vector<2x16xf32>
    %c0_146 = arith.constant 0 : index
    %c0_147 = arith.constant 0 : index
    %325 = vector.load %arg17[%c0_146, %c0_147] : memref<16x8xf32, #tpu.memory_space<vmem>>, vector<16x8xf32>
    %cst_148 = arith.constant dense<0.000000e+00> : vector<2x8xf32>
    %326 = tpu.matmul %324, %325, %cst_148 {dimension_numbers = #tpu.dot_dimension_numbers<[1], [0], [0], [1], [0, 0, 1, 1], [], []>} : vector<2x16xf32>, vector<16x8xf32>, vector<2x8xf32> -> vector<2x8xf32>
    %c0_149 = arith.constant 0 : index
    %c0_150 = arith.constant 0 : index
    %327 = vector.load %arg18[%c0_149, %c0_150] : memref<1x8xf32, #tpu.memory_space<vmem>>, vector<1x8xf32>
    %328 = vector.broadcast %327 : vector<1x8xf32> to vector<2x8xf32>
    %329 = arith.addf %326, %328 : vector<2x8xf32>
    %cst_151 = arith.constant 0.000000e+00 : f32
    %330 = vector.broadcast %cst_151 : f32 to vector<2x8xf32>
    %331 = arith.maximumf %329, %330 : vector<2x8xf32>
    %c0_152 = arith.constant 0 : index
    %c0_153 = arith.constant 0 : index
    %332 = vector.load %arg19[%c0_152, %c0_153] : memref<8x128xf32, #tpu.memory_space<vmem>>, vector<8x128xf32>
    %cst_154 = arith.constant dense<0.000000e+00> : vector<2x128xf32>
    %333 = tpu.matmul %331, %332, %cst_154 {dimension_numbers = #tpu.dot_dimension_numbers<[1], [0], [0], [1], [0, 0, 1, 1], [], []>} : vector<2x8xf32>, vector<8x128xf32>, vector<2x128xf32> -> vector<2x128xf32>
    %c0_155 = arith.constant 0 : index
    %c0_156 = arith.constant 0 : index
    %334 = vector.load %arg20[%c0_155, %c0_156] : memref<1x128xf32, #tpu.memory_space<vmem>>, vector<1x128xf32>
    %335 = vector.broadcast %334 : vector<1x128xf32> to vector<2x128xf32>
    %336 = arith.addf %333, %335 : vector<2x128xf32>
    %c0_157 = arith.constant 0 : index
    %c0_158 = arith.constant 0 : index
    %337 = vector.load %arg21[%c0_157, %c0_158] : memref<2x128xf32, #tpu.memory_space<vmem>>, vector<2x128xf32>
    tpu.vector_store %arg21[%c0_157, %c0_158], %336 {strides = array<i32>} : memref<2x128xf32, #tpu.memory_space<vmem>>, vector<2x128xf32>,
    return
  }
}

</mosaic_0001>

<llo_original>
// kernel: pna_net_forward.1
$region0: #{pna_net_forward.1}
  #allocation0 [shape = 'u32[]', space=smem, size = 0x4, offset = 0x4, fixed_abs, tag = 'smem constant byte address 0x4 - core index']
  #allocation1 [shape = 'u32[144,128]{1,0:T(1,128)}', space=vmem, size = 0x12000, scoped, tag = 'internal scratch']
  #allocation2 [shape = 'f32[1]{0:T(128)S(6)}', space=smem, size = 0x200, scoped, tag = 'scoped memory for pna_net_forward.1']
  %s0 = inlined_call_operand.<no memory space> [shape: f32[1], index: 0, kind: input, shape index: {}]
  %s1 = inlined_call_operand.vmem [shape: f32[16,32], index: 1, kind: input, shape index: {}]
  %s2 = inlined_call_operand.vmem [shape: f32[16,16], index: 2, kind: input, shape index: {}]
  %s3 = inlined_call_operand.vmem [shape: f32[16,16], index: 3, kind: input, shape index: {}]
  %s4 = inlined_call_operand.vmem [shape: f32[16,1], index: 4, kind: input, shape index: {}]
  %s5 = inlined_call_operand.vmem [shape: f32[2,16], index: 5, kind: input, shape index: {}]
  %s6 = inlined_call_operand.vmem [shape: f32[2,32,32], index: 6, kind: input, shape index: {}]
  %s7 = inlined_call_operand.vmem [shape: f32[2,32,32], index: 7, kind: input, shape index: {}]
  %s8 = inlined_call_operand.vmem [shape: f32[2,1,32], index: 8, kind: input, shape index: {}]
  %s9 = inlined_call_operand.vmem [shape: f32[2,416,32], index: 9, kind: input, shape index: {}]
  %s10 = inlined_call_operand.vmem [shape: f32[2,1,32], index: 10, kind: input, shape index: {}]
  %s11 = inlined_call_operand.vmem [shape: f32[2,1,32], index: 11, kind: input, shape index: {}]
  %s12 = inlined_call_operand.vmem [shape: f32[2,1,32], index: 12, kind: input, shape index: {}]
  %s13 = inlined_call_operand.vmem [shape: f32[2,32,32], index: 13, kind: input, shape index: {}]
  %s14 = inlined_call_operand.vmem [shape: f32[2,1,32], index: 14, kind: input, shape index: {}]
  %s15 = inlined_call_operand.vmem [shape: f32[32,16], index: 15, kind: input, shape index: {}]
  %s16 = inlined_call_operand.vmem [shape: f32[1,16], index: 16, kind: input, shape index: {}]
  %s17 = inlined_call_operand.vmem [shape: f32[16,8], index: 17, kind: input, shape index: {}]
  %s18 = inlined_call_operand.vmem [shape: f32[1,8], index: 18, kind: input, shape index: {}]
  %s19 = inlined_call_operand.vmem [shape: f32[8,128], index: 19, kind: input, shape index: {}]
  %s20 = inlined_call_operand.vmem [shape: f32[1,128], index: 20, kind: input, shape index: {}]
  %s21 = inlined_call_operand.vmem [shape: f32[2,128], index: 21, kind: output, shape index: {}]
  %s22 = sld [smem:[#allocation0]]
  $region94: #{pna_net_forward.1} parent=0
    _
  %s24 = ssub.s32 1, %s22
  %s25 = scalar_select 0, %s24, %s22
  %26 = sst [smem:[#allocation2]] %s0
  // Predicated region
  $region2: #{pna_net_forward.1} parent=0 // pred_check
    _
  $region3: #{pna_net_forward.1} parent=0 // pred_check_branch
    %28 = sbr.rel (0) target = $region5
  $region4: #{pna_net_forward.1} parent=0 // pred_region
    _
  $region5: #{pna_net_forward.1} parent=0 // pred_fallthru
    _
  // Predicated region
  $region6: #{pna_net_forward.1} parent=0 // pred_check
    _
  $region7: #{pna_net_forward.1} parent=0 // pred_check_branch
    %30 = sbr.rel (0) target = $region9
  $region8: #{pna_net_forward.1} parent=0 // pred_region
    _
  $region9: #{pna_net_forward.1} parent=0 // pred_fallthru
    _
  // Predicated region
  $region10: #{pna_net_forward.1} parent=0 // pred_check
    _
  $region11: #{pna_net_forward.1} parent=0 // pred_check_branch
    %32 = sbr.rel (0) target = $region13
  $region12: #{pna_net_forward.1} parent=0 // pred_region
    _
  $region13: #{pna_net_forward.1} parent=0 // pred_fallthru
    _
  // Predicated region
  $region14: #{pna_net_forward.1} parent=0 // pred_check
    _
  $region15: #{pna_net_forward.1} parent=0 // pred_check_branch
    %34 = sbr.rel (0) target = $region17
  $region16: #{pna_net_forward.1} parent=0 // pred_region
    _
  $region17: #{pna_net_forward.1} parent=0 // pred_fallthru
    _
  // Predicated region
  $region18: #{pna_net_forward.1} parent=0 // pred_check
    _
  $region19: #{pna_net_forward.1} parent=0 // pred_check_branch
    %36 = sbr.rel (0) target = $region21
  $region20: #{pna_net_forward.1} parent=0 // pred_region
    _
  $region21: #{pna_net_forward.1} parent=0 // pred_fallthru
    _
  // Predicated region
  $region22: #{pna_net_forward.1} parent=0 // pred_check
    _
  $region23: #{pna_net_forward.1} parent=0 // pred_check_branch
    %38 = sbr.rel (0) target = $region25
  $region24: #{pna_net_forward.1} parent=0 // pred_region
    _
  $region25: #{pna_net_forward.1} parent=0 // pred_fallthru
    _
  // Predicated region
  $region26: #{pna_net_forward.1} parent=0 // pred_check
    _
  $region27: #{pna_net_forward.1} parent=0 // pred_check_branch
    %40 = sbr.rel (0) target = $region29
  $region28: #{pna_net_forward.1} parent=0 // pred_region
    _
  $region29: #{pna_net_forward.1} parent=0 // pred_fallthru
    _
  // Predicated region
  $region30: #{pna_net_forward.1} parent=0 // pred_check
    _
  $region31: #{pna_net_forward.1} parent=0 // pred_check_branch
    %42 = sbr.rel (0) target = $region33
  $region32: #{pna_net_forward.1} parent=0 // pred_region
    _
  $region33: #{pna_net_forward.1} parent=0 // pred_fallthru
    _
  // Predicated region
  $region34: #{pna_net_forward.1} parent=0 // pred_check
    _
  $region35: #{pna_net_forward.1} parent=0 // pred_check_branch
    %44 = sbr.rel (0) target = $region37
  $region36: #{pna_net_forward.1} parent=0 // pred_region
    _
  $region37: #{pna_net_forward.1} parent=0 // pred_fallthru
    _
  // Predicated region
  $region38: #{pna_net_forward.1} parent=0 // pred_check
    _
  $region39: #{pna_net_forward.1} parent=0 // pred_check_branch
    %46 = sbr.rel (0) target = $region41
  $region40: #{pna_net_forward.1} parent=0 // pred_region
    _
  $region41: #{pna_net_forward.1} parent=0 // pred_fallthru
    _
  // Predicated region
  $region42: #{pna_net_forward.1} parent=0 // pred_check
    _
  $region43: #{pna_net_forward.1} parent=0 // pred_check_branch
    %48 = sbr.rel (0) target = $region45
  $region44: #{pna_net_forward.1} parent=0 // pred_region
    _
  $region45: #{pna_net_forward.1} parent=0 // pred_fallthru
    _
  // Predicated region
  $region46: #{pna_net_forward.1} parent=0 // pred_check
    _
  $region47: #{pna_net_forward.1} parent=0 // pred_check_branch
    %50 = sbr.rel (0) target = $region49
  $region48: #{pna_net_forward.1} parent=0 // pred_region
    _
  $region49: #{pna_net_forward.1} parent=0 // pred_fallthru
    _
  // Predicated region
  $region50: #{pna_net_forward.1} parent=0 // pred_check
    _
  $region51: #{pna_net_forward.1} parent=0 // pred_check_branch
    %52 = sbr.rel (0) target = $region53
  $region52: #{pna_net_forward.1} parent=0 // pred_region
    _
  $region53: #{pna_net_forward.1} parent=0 // pred_fallthru
    _
  // Predicated region
  $region54: #{pna_net_forward.1} parent=0 // pred_check
    _
  $region55: #{pna_net_forward.1} parent=0 // pred_check_branch
    %54 = sbr.rel (0) target = $region57
  $region56: #{pna_net_forward.1} parent=0 // pred_region
    _
  $region57: #{pna_net_forward.1} parent=0 // pred_fallthru
    _
  // Predicated region
  $region58: #{pna_net_forward.1} parent=0 // pred_check
    _
  $region59: #{pna_net_forward.1} parent=0 // pred_check_branch
    %56 = sbr.rel (0) target = $region61
  $region60: #{pna_net_forward.1} parent=0 // pred_region
    _
  $region61: #{pna_net_forward.1} parent=0 // pred_fallthru
    _
  // Predicated region
  $region62: #{pna_net_forward.1} parent=0 // pred_check
    _
  $region63: #{pna_net_forward.1} parent=0 // pred_check_branch
    %58 = sbr.rel (0) target = $region65
  $region64: #{pna_net_forward.1} parent=0 // pred_region
    _
  $region65: #{pna_net_forward.1} parent=0 // pred_fallthru
    _
  // Predicated region
  $region66: #{pna_net_forward.1} parent=0 // pred_check
    _
  $region67: #{pna_net_forward.1} parent=0 // pred_check_branch
    %60 = sbr.rel (0) target = $region69
  $region68: #{pna_net_forward.1} parent=0 // pred_region
    _
  $region69: #{pna_net_forward.1} parent=0 // pred_fallthru
    _
  // Predicated region
  $region70: #{pna_net_forward.1} parent=0 // pred_check
    _
  $region71: #{pna_net_forward.1} parent=0 // pred_check_branch
    %62 = sbr.rel (0) target = $region73
  $region72: #{pna_net_forward.1} parent=0 // pred_region
    _
  $region73: #{pna_net_forward.1} parent=0 // pred_fallthru
    _
  // Predicated region
  $region74: #{pna_net_forward.1} parent=0 // pred_check
    _
  $region75: #{pna_net_forward.1} parent=0 // pred_check_branch
    %64 = sbr.rel (0) target = $region77
  $region76: #{pna_net_forward.1} parent=0 // pred_region
    _
  $region77: #{pna_net_forward.1} parent=0 // pred_fallthru
    _
  // Predicated region
  $region78: #{pna_net_forward.1} parent=0 // pred_check
    _
  $region79: #{pna_net_forward.1} parent=0 // pred_check_branch
    %66 = sbr.rel (0) target = $region81
  $region80: #{pna_net_forward.1} parent=0 // pred_region
    _
  $region81: #{pna_net_forward.1} parent=0 // pred_fallthru
    _
  // Predicated region
  $region82: #{pna_net_forward.1} parent=0 // pred_check
    _
  $region83: #{pna_net_forward.1} parent=0 // pred_check_branch
    %68 = sbr.rel (0) target = $region85
  $region84: #{pna_net_forward.1} parent=0 // pred_region
    _
  $region85: #{pna_net_forward.1} parent=0 // pred_fallthru
    _
  %v69 = vld [vmem:[%s1] sm:$0xff]
  %v70 = vld [vmem:[%s1 + $0x8] sm:$0xff]
  %v71 = vld [vmem:[%s2] sm:$0xff]
  %v72 = vld [vmem:[%s2 + $0x8] sm:$0xff]
  %v73 = vld [vmem:[%s3] sm:$0xff]
  %v74 = vld [vmem:[%s3 + $0x8] sm:$0xff]
  %v75 = vld [vmem:[%s4] sm:$0xff]
  %v76 = vld [vmem:[%s4 + $0x8] sm:$0xff]
  %s77 = sld [smem:[#allocation2]]
  %vm78 = vcmask 130048
  %v79 = vsel %vm78, %v73, 0.0
  %80 = vadd.xlane.f32.xlu0 %v79
  %v81 = vpop.xlane.xlu0 %80
  %v82 = vsel %vm78, %v74, 0.0
  %83 = vadd.xlane.f32.xlu0 %v82
  %v84 = vpop.xlane.xlu0 %83
  %vm85 = vcmp.gt.f32.partialorder %v81, 0.0
  %vm86 = vcmp.gt.f32.partialorder %v84, 0.0
  %v87 = vmax.f32 %v81, 1.0
  %v88 = vmax.f32 %v84, 1.0
  %v89 = vrcp.pop %v87
  %v90 = vmul.f32 1.0, %v89
  %v91 = vrcp.pop %v88
  %v92 = vmul.f32 1.0, %v91
  %v93 = vadd.f32 %v81, 1.0
  %v94 = vadd.f32 %v84, 1.0
  %v95 = vlog2.pop %v93
  %v96 = vmul.f32 %v95, 0.6931472
  %v97 = vlog2.pop %v94
  %v98 = vmul.f32 %v97, 0.6931472
  %v99 = vstv %s77
  %v100 = vrcp.pop %v99
  %s101 = vtos %v100
  %v102 = vstv %s101
  %v103 = vmul.f32 %v96, %v102
  %v104 = vmul.f32 %v98, %v102
  %v105 = vsel %vm85, %v96, 1.0
  %v106 = vsel %vm86, %v98, 1.0
  %v107 = vrcp.pop %v105
  %v108 = vrcp.pop %v106
  %v109 = vstv %s77
  %v110 = vmul.f32 %v109, %v107
  %v111 = vmul.f32 %v109, %v108
  %v112 = vld [vmem:[%s6] sm:$0xff]
  %v113 = vld [vmem:[%s6 + $0x8] sm:$0xff]
  %v114 = vld [vmem:[%s6 + $0x10] sm:$0xff]
  %v115 = vld [vmem:[%s6 + $0x18] sm:$0xff]
  %vm116 = vcmask 261120
  %v118 = vsel %vm116, %v69, 0
  %v121 = vsel %vm116, %v70, 0
  %123 = vmatprep.subr.mxu0 0.0
  %124 = vmatpush1.msra.mxu0 %v112
  %125 = vmatprep.subr.mxu0 0.0
  %126 = vmatpush1.msra.mxu0 %v113
  %127 = vmatprep.subr.mxu0 0.0
  %128 = vmatpush1.msra.mxu0 %v114
  %129 = vmatprep.subr.mxu0 0.0
  %130 = vmatpush1.msra.mxu0 %v115
  %131 = vmatprep.subr.mxu0 0.0
  %132 = vmatpush1.msra.mxu0 0.0
  %133 = vmatprep.subr.mxu0 0.0
  %134 = vmatpush1.msra.mxu0 0.0
  %135 = vmatprep.subr.mxu0 0.0
  %136 = vmatpush1.msra.mxu0 0.0
  %137 = vmatprep.subr.mxu0 0.0
  %138 = vmatpush1.msra.mxu0 0.0
  %139 = vmatprep.subr.mxu0 0.0
  %140 = vmatpush1.msra.mxu0 0.0
  %141 = vmatprep.subr.mxu0 0.0
  %142 = vmatpush1.msra.mxu0 0.0
  %143 = vmatprep.subr.mxu0 0.0
  %144 = vmatpush1.msra.mxu0 0.0
  %145 = vmatprep.subr.mxu0 0.0
  %146 = vmatpush1.msra.mxu0 0.0
  %147 = vmatprep.subr.mxu0 0.0
  %148 = vmatpush1.msra.mxu0 0.0
  %149 = vmatprep.subr.mxu0 0.0
  %150 = vmatpush1.msra.mxu0 0.0
  %151 = vmatprep.subr.mxu0 0.0
  %152 = vmatpush1.msra.mxu0 0.0
  %153 = vmatprep.subr.mxu0 0.0
  %154 = vmatpush1.msra.mxu0 0.0
  %155 = vmatprep.subr.mxu0 0.0
  %156 = vmatpush1.msra.mxu0 0.0
  %157 = vmatprep.subr.mxu0 0.0
  %158 = vmatpush1.msra.mxu0 0.0
  %159 = vmatprep.subr.mxu0 0.0
  %160 = vmatpush1.msra.mxu0 0.0
  %161 = vmatprep.subr.mxu0 0.0
  %162 = vmatpush1.msra.mxu0 0.0
  %163 = vmatprep.subr.mxu0 0.0
  %164 = vmatpush1.msra.mxu0 0.0
  %165 = vmatprep.subr.mxu0 0.0
  %166 = vmatpush1.msra.mxu0 0.0
  %167 = vmatprep.subr.mxu0 0.0
  %168 = vmatpush1.msra.mxu0 0.0
  %169 = vmatprep.subr.mxu0 0.0
  %170 = vmatpush1.msra.mxu0 0.0
  %171 = vmatprep.subr.mxu0 0.0
  %172 = vmatpush1.msra.mxu0 0.0
  %173 = vmatprep.subr.mxu0 0.0
  %174 = vmatpush1.msra.mxu0 0.0
  %175 = vmatprep.subr.mxu0 0.0
  %176 = vmatpush1.msra.mxu0 0.0
  %177 = vmatprep.subr.mxu0 0.0
  %178 = vmatpush1.msra.mxu0 0.0
  %179 = vmatprep.subr.mxu0 0.0
  %180 = vmatpush1.msra.mxu0 0.0
  %181 = vmatprep.subr.mxu0 0.0
  %182 = vmatpush1.msra.mxu0 0.0
  %183 = vmatprep.subr.mxu0 0.0
  %184 = vmatpush1.msra.mxu0 0.0
  %185 = vmatprep.subr.mxu0 0.0
  %186 = vmatpush1.msra.mxu0 0.0
  %187 = vmatprep.mubr.f32.mxu0 0.0
  %188 = vmatmul.mubr.f32.gmra.mrb[0].mxu0 %v118
  %v189 = vpop.f32.mrb[0].mxu0
  %v190 = vadd.f32 0.0, %v189
  %v191 = vpop.f32.mrb[0].mxu0
  %192 = vmatprep.mubr.f32.mxu0 0.0
  %193 = vmatmul.mubr.f32.gmra.mrb[0].mxu0 %v121
  %v194 = vpop.f32.mrb[0].mxu0
  %v195 = vadd.f32 0.0, %v194
  %v196 = vpop.f32.mrb[0].mxu0
  %197 = vdwg.mxu0
  %v198 = vld [vmem:[%s7] sm:$0xff]
  %v199 = vld [vmem:[%s7 + $0x8] sm:$0xff]
  %v200 = vld [vmem:[%s7 + $0x10] sm:$0xff]
  %v201 = vld [vmem:[%s7 + $0x18] sm:$0xff]
  %v202 = vld [vmem:[%s8] sm:$0x1]
  %v204 = vlaneseq
  %v205 = vshrl.u32 %v204, 7
  %v206 = vsub.s32 0, %v205
  %v207 = vrot.slane %v202, %v206
  %209 = vmatprep.subr.mxu0 0.0
  %210 = vmatpush1.msra.mxu0 %v198
  %211 = vmatprep.subr.mxu0 0.0
  %212 = vmatpush1.msra.mxu0 %v199
  %213 = vmatprep.subr.mxu0 0.0
  %214 = vmatpush1.msra.mxu0 %v200
  %215 = vmatprep.subr.mxu0 0.0
  %216 = vmatpush1.msra.mxu0 %v201
  %217 = vmatprep.subr.mxu0 0.0
  %218 = vmatpush1.msra.mxu0 0.0
  %219 = vmatprep.subr.mxu0 0.0
  %220 = vmatpush1.msra.mxu0 0.0
  %221 = vmatprep.subr.mxu0 0.0
  %222 = vmatpush1.msra.mxu0 0.0
  %223 = vmatprep.subr.mxu0 0.0
  %224 = vmatpush1.msra.mxu0 0.0
  %225 = vmatprep.subr.mxu0 0.0
  %226 = vmatpush1.msra.mxu0 0.0
  %227 = vmatprep.subr.mxu0 0.0
  %228 = vmatpush1.msra.mxu0 0.0
  %229 = vmatprep.subr.mxu0 0.0
  %230 = vmatpush1.msra.mxu0 0.0
  %231 = vmatprep.subr.mxu0 0.0
  %232 = vmatpush1.msra.mxu0 0.0
  %233 = vmatprep.subr.mxu0 0.0
  %234 = vmatpush1.msra.mxu0 0.0
  %235 = vmatprep.subr.mxu0 0.0
  %236 = vmatpush1.msra.mxu0 0.0
  %237 = vmatprep.subr.mxu0 0.0
  %238 = vmatpush1.msra.mxu0 0.0
  %239 = vmatprep.subr.mxu0 0.0
  %240 = vmatpush1.msra.mxu0 0.0
  %241 = vmatprep.subr.mxu0 0.0
  %242 = vmatpush1.msra.mxu0 0.0
  %243 = vmatprep.subr.mxu0 0.0
  %244 = vmatpush1.msra.mxu0 0.0
  %245 = vmatprep.subr.mxu0 0.0
  %246 = vmatpush1.msra.mxu0 0.0
  %247 = vmatprep.subr.mxu0 0.0
  %248 = vmatpush1.msra.mxu0 0.0
  %249 = vmatprep.subr.mxu0 0.0
  %250 = vmatpush1.msra.mxu0 0.0
  %251 = vmatprep.subr.mxu0 0.0
  %252 = vmatpush1.msra.mxu0 0.0
  %253 = vmatprep.subr.mxu0 0.0
  %254 = vmatpush1.msra.mxu0 0.0
  %255 = vmatprep.subr.mxu0 0.0
  %256 = vmatpush1.msra.mxu0 0.0
  %257 = vmatprep.subr.mxu0 0.0
  %258 = vmatpush1.msra.mxu0 0.0
  %259 = vmatprep.subr.mxu0 0.0
  %260 = vmatpush1.msra.mxu0 0.0
  %261 = vmatprep.subr.mxu0 0.0
  %262 = vmatpush1.msra.mxu0 0.0
  %263 = vmatprep.subr.mxu0 0.0
  %264 = vmatpush1.msra.mxu0 0.0
  %265 = vmatprep.subr.mxu0 0.0
  %266 = vmatpush1.msra.mxu0 0.0
  %267 = vmatprep.subr.mxu0 0.0
  %268 = vmatpush1.msra.mxu0 0.0
  %269 = vmatprep.subr.mxu0 0.0
  %270 = vmatpush1.msra.mxu0 0.0
  %271 = vmatprep.subr.mxu0 0.0
  %272 = vmatpush1.msra.mxu0 0.0
  %273 = vmatprep.mubr.f32.mxu0 0.0
  %274 = vmatmul.mubr.f32.gmra.mrb[0].mxu0 %v118
  %v275 = vpop.f32.mrb[0].mxu0
  %v276 = vadd.f32 %v207, %v275
  %v277 = vpop.f32.mrb[0].mxu0
  %278 = vmatprep.mubr.f32.mxu0 0.0
  %279 = vmatmul.mubr.f32.gmra.mrb[0].mxu0 %v121
  %v280 = vpop.f32.mrb[0].mxu0
  %v281 = vadd.f32 %v207, %v280
  %v282 = vpop.f32.mrb[0].mxu0
  %283 = vdwg.mxu0
  %v285 = vsel %vm78, %v73, 0
  %v288 = vsel %vm78, %v74, 0
  %290 = vmatprep.subr.mxu0 0.0
  %291 = vmatpush1.msra.mxu0 %v190
  %292 = vmatprep.subr.mxu0 0.0
  %293 = vmatpush1.msra.mxu0 %v195
  %294 = vmatprep.subr.mxu0 0.0
  %295 = vmatpush1.msra.mxu0 0.0
  %296 = vmatprep.subr.mxu0 0.0
  %297 = vmatpush1.msra.mxu0 0.0
  %298 = vmatprep.subr.mxu0 0.0
  %299 = vmatpush1.msra.mxu0 0.0
  %300 = vmatprep.subr.mxu0 0.0
  %301 = vmatpush1.msra.mxu0 0.0
  %302 = vmatprep.subr.mxu0 0.0
  %303 = vmatpush1.msra.mxu0 0.0
  %304 = vmatprep.subr.mxu0 0.0
  %305 = vmatpush1.msra.mxu0 0.0
  %306 = vmatprep.subr.mxu0 0.0
  %307 = vmatpush1.msra.mxu0 0.0
  %308 = vmatprep.subr.mxu0 0.0
  %309 = vmatpush1.msra.mxu0 0.0
  %310 = vmatprep.subr.mxu0 0.0
  %311 = vmatpush1.msra.mxu0 0.0
  %312 = vmatprep.subr.mxu0 0.0
  %313 = vmatpush1.msra.mxu0 0.0
  %314 = vmatprep.subr.mxu0 0.0
  %315 = vmatpush1.msra.mxu0 0.0
  %316 = vmatprep.subr.mxu0 0.0
  %317 = vmatpush1.msra.mxu0 0.0
  %318 = vmatprep.subr.mxu0 0.0
  %319 = vmatpush1.msra.mxu0 0.0
  %320 = vmatprep.subr.mxu0 0.0
  %321 = vmatpush1.msra.mxu0 0.0
  %322 = vmatprep.subr.mxu0 0.0
  %323 = vmatpush1.msra.mxu0 0.0
  %324 = vmatprep.subr.mxu0 0.0
  %325 = vmatpush1.msra.mxu0 0.0
  %326 = vmatprep.subr.mxu0 0.0
  %327 = vmatpush1.msra.mxu0 0.0
  %328 = vmatprep.subr.mxu0 0.0
  %329 = vmatpush1.msra.mxu0 0.0
  %330 = vmatprep.subr.mxu0 0.0
  %331 = vmatpush1.msra.mxu0 0.0
  %332 = vmatprep.subr.mxu0 0.0
  %333 = vmatpush1.msra.mxu0 0.0
  %334 = vmatprep.subr.mxu0 0.0
  %335 = vmatpush1.msra.mxu0 0.0
  %336 = vmatprep.subr.mxu0 0.0
  %337 = vmatpush1.msra.mxu0 0.0
  %338 = vmatprep.subr.mxu0 0.0
  %339 = vmatpush1.msra.mxu0 0.0
  %340 = vmatprep.subr.mxu0 0.0
  %341 = vmatpush1.msra.mxu0 0.0
  %342 = vmatprep.subr.mxu0 0.0
  %343 = vmatpush1.msra.mxu0 0.0
  %344 = vmatprep.subr.mxu0 0.0
  %345 = vmatpush1.msra.mxu0 0.0
  %346 = vmatprep.subr.mxu0 0.0
  %347 = vmatpush1.msra.mxu0 0.0
  %348 = vmatprep.subr.mxu0 0.0
  %349 = vmatpush1.msra.mxu0 0.0
  %350 = vmatprep.subr.mxu0 0.0
  %351 = vmatpush1.msra.mxu0 0.0
  %352 = vmatprep.subr.mxu0 0.0
  %353 = vmatpush1.msra.mxu0 0.0
  %354 = vmatprep.mubr.f32.mxu0 0.0
  %355 = vmatmul.mubr.f32.gmra.mrb[0].mxu0 %v285
  %v356 = vpop.f32.mrb[0].mxu0
  %v357 = vadd.f32 0.0, %v356
  %v358 = vpop.f32.mrb[0].mxu0
  %359 = vmatprep.mubr.f32.mxu0 0.0
  %360 = vmatmul.mubr.f32.gmra.mrb[0].mxu0 %v288
  %v361 = vpop.f32.mrb[0].mxu0
  %v362 = vadd.f32 0.0, %v361
  %v363 = vpop.f32.mrb[0].mxu0
  %364 = vdwg.mxu0
  %v365 = vmul.f32 %v357, %v90
  %v366 = vmul.f32 %v362, %v92
  %v367 = vmul.f32 %v190, %v190
  %v368 = vmul.f32 %v195, %v195
  %369 = vmatprep.subr.mxu0 0.0
  %370 = vmatpush1.msra.mxu0 %v367
  %371 = vmatprep.subr.mxu0 0.0
  %372 = vmatpush1.msra.mxu0 %v368
  %373 = vmatprep.subr.mxu0 0.0
  %374 = vmatpush1.msra.mxu0 0.0
  %375 = vmatprep.subr.mxu0 0.0
  %376 = vmatpush1.msra.mxu0 0.0
  %377 = vmatprep.subr.mxu0 0.0
  %378 = vmatpush1.msra.mxu0 0.0
  %379 = vmatprep.subr.mxu0 0.0
  %380 = vmatpush1.msra.mxu0 0.0
  %381 = vmatprep.subr.mxu0 0.0
  %382 = vmatpush1.msra.mxu0 0.0
  %383 = vmatprep.subr.mxu0 0.0
  %384 = vmatpush1.msra.mxu0 0.0
  %385 = vmatprep.subr.mxu0 0.0
  %386 = vmatpush1.msra.mxu0 0.0
  %387 = vmatprep.subr.mxu0 0.0
  %388 = vmatpush1.msra.mxu0 0.0
  %389 = vmatprep.subr.mxu0 0.0
  %390 = vmatpush1.msra.mxu0 0.0
  %391 = vmatprep.subr.mxu0 0.0
  %392 = vmatpush1.msra.mxu0 0.0
  %393 = vmatprep.subr.mxu0 0.0
  %394 = vmatpush1.msra.mxu0 0.0
  %395 = vmatprep.subr.mxu0 0.0
  %396 = vmatpush1.msra.mxu0 0.0
  %397 = vmatprep.subr.mxu0 0.0
  %398 = vmatpush1.msra.mxu0 0.0
  %399 = vmatprep.subr.mxu0 0.0
  %400 = vmatpush1.msra.mxu0 0.0
  %401 = vmatprep.subr.mxu0 0.0
  %402 = vmatpush1.msra.mxu0 0.0
  %403 = vmatprep.subr.mxu0 0.0
  %404 = vmatpush1.msra.mxu0 0.0
  %405 = vmatprep.subr.mxu0 0.0
  %406 = vmatpush1.msra.mxu0 0.0
  %407 = vmatprep.subr.mxu0 0.0
  %408 = vmatpush1.msra.mxu0 0.0
  %409 = vmatprep.subr.mxu0 0.0
  %410 = vmatpush1.msra.mxu0 0.0
  %411 = vmatprep.subr.mxu0 0.0
  %412 = vmatpush1.msra.mxu0 0.0
  %413 = vmatprep.subr.mxu0 0.0
  %414 = vmatpush1.msra.mxu0 0.0
  %415 = vmatprep.subr.mxu0 0.0
  %416 = vmatpush1.msra.mxu0 0.0
  %417 = vmatprep.subr.mxu0 0.0
  %418 = vmatpush1.msra.mxu0 0.0
  %419 = vmatprep.subr.mxu0 0.0
  %420 = vmatpush1.msra.mxu0 0.0
  %421 = vmatprep.subr.mxu0 0.0
  %422 = vmatpush1.msra.mxu0 0.0
  %423 = vmatprep.subr.mxu0 0.0
  %424 = vmatpush1.msra.mxu0 0.0
  %425 = vmatprep.subr.mxu0 0.0
  %426 = vmatpush1.msra.mxu0 0.0
  %427 = vmatprep.subr.mxu0 0.0
  %428 = vmatpush1.msra.mxu0 0.0
  %429 = vmatprep.subr.mxu0 0.0
  %430 = vmatpush1.msra.mxu0 0.0
  %431 = vmatprep.subr.mxu0 0.0
  %432 = vmatpush1.msra.mxu0 0.0
  %433 = vmatprep.mubr.f32.mxu0 0.0
  %434 = vmatmul.mubr.f32.gmra.mrb[0].mxu0 %v285
  %v435 = vpop.f32.mrb[0].mxu0
  %v436 = vadd.f32 0.0, %v435
  %v437 = vpop.f32.mrb[0].mxu0
  %438 = vmatprep.mubr.f32.mxu0 0.0
  %439 = vmatmul.mubr.f32.gmra.mrb[0].mxu0 %v288
  %v440 = vpop.f32.mrb[0].mxu0
  %v441 = vadd.f32 0.0, %v440
  %v442 = vpop.f32.mrb[0].mxu0
  %443 = vdwg.mxu0
  %v444 = vmul.f32 %v436, %v90
  %v445 = vmul.f32 %v441, %v92
  %v446 = vmul.f32 %v365, %v365
  %v447 = vmul.f32 %v366, %v366
  %v448 = vsub.f32 %v444, %v446
  %v449 = vsub.f32 %v445, %v447
  %v450 = vmax.f32 %v448, 0.0
  %v451 = vmax.f32 %v449, 0.0
  %v452 = vadd.f32 %v450, 1e-05
  %v453 = vadd.f32 %v451, 1e-05
  %v454 = vrsqrt.pop %v452
  %v455 = vmul.f32 %v452, %v454
  %vm456 = vcmp.eq.f32.partialorder %v452, inf
  %v457 = vsel %vm456, %v452, %v455
  %vm458 = vcmp.eq.f32.partialorder %v452, 0.0
  %v459 = vand.u32 %v452, 2147483648
  %v460 = vsel %vm458, %v459, %v457
  %v461 = vrsqrt.pop %v453
  %v462 = vmul.f32 %v453, %v461
  %vm463 = vcmp.eq.f32.partialorder %v453, inf
  %v464 = vsel %vm463, %v453, %v462
  %vm465 = vcmp.eq.f32.partialorder %v453, 0.0
  %v466 = vand.u32 %v453, 2147483648
  %v467 = vsel %vm465, %v466, %v464
  %v468 = vlaneseq
  %v469 = vshrl.u32 %v468, 7
  %v470 = vsub.s32 0, %v469
  %v471 = vrot.slane %v71, %v470
  %473 = vbcast.lane.b32.xlu0 %v471, 256
  %v474 = vpop.permute.xlu0 %473
  %s476 = sor.u32 256, 8
  %477 = vbcast.lane.b32.xlu0 %v471, %s476
  %v478 = vpop.permute.xlu0 %477
  %v479 = vlaneseq
  %v480 = vshrl.u32 %v479, 7
  %v481 = vsub.s32 1, %v480
  %v482 = vrot.slane %v71, %v481
  %484 = vbcast.lane.b32.xlu0 %v482, 256
  %v485 = vpop.permute.xlu0 %484
  %s487 = sor.u32 256, 8
  %488 = vbcast.lane.b32.xlu0 %v482, %s487
  %v489 = vpop.permute.xlu0 %488
  %v490 = vlaneseq
  %v491 = vshrl.u32 %v490, 7
  %v492 = vsub.s32 2, %v491
  %v493 = vrot.slane %v71, %v492
  %495 = vbcast.lane.b32.xlu0 %v493, 256
  %v496 = vpop.permute.xlu0 %495
  %s498 = sor.u32 256, 8
  %499 = vbcast.lane.b32.xlu0 %v493, %s498
  %v500 = vpop.permute.xlu0 %499
  %v501 = vlaneseq
  %v502 = vshrl.u32 %v501, 7
  %v503 = vsub.s32 3, %v502
  %v504 = vrot.slane %v71, %v503
  %506 = vbcast.lane.b32.xlu0 %v504, 256
  %v507 = vpop.permute.xlu0 %506
  %s509 = sor.u32 256, 8
  %510 = vbcast.lane.b32.xlu0 %v504, %s509
  %v511 = vpop.permute.xlu0 %510
  %v512 = vlaneseq
  %v513 = vshrl.u32 %v512, 7
  %v514 = vsub.s32 4, %v513
  %v515 = vrot.slane %v71, %v514
  %517 = vbcast.lane.b32.xlu0 %v515, 256
  %v518 = vpop.permute.xlu0 %517
  %s520 = sor.u32 256, 8
  %521 = vbcast.lane.b32.xlu0 %v515, %s520
  %v522 = vpop.permute.xlu0 %521
  %v523 = vlaneseq
  %v524 = vshrl.u32 %v523, 7
  %v525 = vsub.s32 5, %v524
  %v526 = vrot.slane %v71, %v525
  %528 = vbcast.lane.b32.xlu0 %v526, 256
  %v529 = vpop.permute.xlu0 %528
  %s531 = sor.u32 256, 8
  %532 = vbcast.lane.b32.xlu0 %v526, %s531
  %v533 = vpop.permute.xlu0 %532
  %v534 = vlaneseq
  %v535 = vshrl.u32 %v534, 7
  %v536 = vsub.s32 6, %v535
  %v537 = vrot.slane %v71, %v536
  %539 = vbcast.lane.b32.xlu0 %v537, 256
  %v540 = vpop.permute.xlu0 %539
  %s542 = sor.u32 256, 8
  %543 = vbcast.lane.b32.xlu0 %v537, %s542
  %v544 = vpop.permute.xlu0 %543
  %v545 = vlaneseq
  %v546 = vshrl.u32 %v545, 7
  %v547 = vsub.s32 7, %v546
  %v548 = vrot.slane %v71, %v547
  %550 = vbcast.lane.b32.xlu0 %v548, 256
  %v551 = vpop.permute.xlu0 %550
  %s553 = sor.u32 256, 8
  %554 = vbcast.lane.b32.xlu0 %v548, %s553
  %v555 = vpop.permute.xlu0 %554
  %vm556 = vcmp.gt.f32.partialorder %v474, 0.0
  %vm557 = vcmp.gt.f32.partialorder %v478, 0.0
  %vm558 = vcmp.gt.f32.partialorder %v485, 0.0
  %vm559 = vcmp.gt.f32.partialorder %v489, 0.0
  %vm560 = vcmp.gt.f32.partialorder %v496, 0.0
  %vm561 = vcmp.gt.f32.partialorder %v500, 0.0
  %vm562 = vcmp.gt.f32.partialorder %v507, 0.0
  %vm563 = vcmp.gt.f32.partialorder %v511, 0.0
  %vm564 = vcmp.gt.f32.partialorder %v518, 0.0
  %vm565 = vcmp.gt.f32.partialorder %v522, 0.0
  %vm566 = vcmp.gt.f32.partialorder %v529, 0.0
  %vm567 = vcmp.gt.f32.partialorder %v533, 0.0
  %vm568 = vcmp.gt.f32.partialorder %v540, 0.0
  %vm569 = vcmp.gt.f32.partialorder %v544, 0.0
  %vm570 = vcmp.gt.f32.partialorder %v551, 0.0
  %vm571 = vcmp.gt.f32.partialorder %v555, 0.0
  %v573 = vcombine.high %v190, %v190
  %v575 = vunpack.c.l.s4 1966171168
  %v576 = vunpack.c.0.s8 %v575
  %v577 = vlaneseq
  %v578 = vshrl.u32 %v577, 7
  %v579 = vsub.s32 %v576, %v578
  %v580 = vrot.slane %v190, %v579
  %v582 = vunpack.c.l.s4 1966171168
  %v583 = vunpack.c.0.s8 %v582
  %v584 = vlaneseq
  %v585 = vshrl.u32 %v584, 7
  %v586 = vsub.s32 %v583, %v585
  %v587 = vrot.slane %v573, %v586
  %v588 = vcombine.high %v580, %v580
  %v589 = vcombine.high %v587, %v587
  %v591 = vunpack.c.l.s4 1966171168
  %v592 = vunpack.c.0.s8 %v591
  %v593 = vlaneseq
  %v594 = vshrl.u32 %v593, 7
  %v595 = vsub.s32 %v592, %v594
  %v596 = vrot.slane %v580, %v595
  %v598 = vunpack.c.l.s4 1966171168
  %v599 = vunpack.c.0.s8 %v598
  %v600 = vlaneseq
  %v601 = vshrl.u32 %v600, 7
  %v602 = vsub.s32 %v599, %v601
  %v603 = vrot.slane %v587, %v602
  %v605 = vunpack.c.l.s4 1966171168
  %v606 = vunpack.c.0.s8 %v605
  %v607 = vlaneseq
  %v608 = vshrl.u32 %v607, 7
  %v609 = vsub.s32 %v606, %v608
  %v610 = vrot.slane %v588, %v609
  %v612 = vunpack.c.l.s4 1966171168
  %v613 = vunpack.c.0.s8 %v612
  %v614 = vlaneseq
  %v615 = vshrl.u32 %v614, 7
  %v616 = vsub.s32 %v613, %v615
  %v617 = vrot.slane %v589, %v616
  %v618 = vcombine.high %v596, %v596
  %v619 = vcombine.high %v603, %v603
  %v620 = vcombine.high %v610, %v610
  %v621 = vcombine.high %v617, %v617
  %v622 = vsel %vm556, 1, 0
  %v623 = vsel %vm557, 1, 0
  %v624 = vsel %vm558, 1, 0
  %v625 = vsel %vm559, 1, 0
  %v626 = vsel %vm560, 1, 0
  %v627 = vsel %vm561, 1, 0
  %v628 = vsel %vm562, 1, 0
  %v629 = vsel %vm563, 1, 0
  %v630 = vsel %vm564, 1, 0
  %v631 = vsel %vm565, 1, 0
  %v632 = vsel %vm566, 1, 0
  %v633 = vsel %vm567, 1, 0
  %v634 = vsel %vm568, 1, 0
  %v635 = vsel %vm569, 1, 0
  %v636 = vsel %vm570, 1, 0
  %v637 = vsel %vm571, 1, 0
  %vm638 = vcmp.eq.s32.totalorder %v622, 1
  %vm639 = vcmp.eq.s32.totalorder %v623, 1
  %vm640 = vcmp.eq.s32.totalorder %v624, 1
  %vm641 = vcmp.eq.s32.totalorder %v625, 1
  %vm642 = vcmp.eq.s32.totalorder %v626, 1
  %vm643 = vcmp.eq.s32.totalorder %v627, 1
  %vm644 = vcmp.eq.s32.totalorder %v628, 1
  %vm645 = vcmp.eq.s32.totalorder %v629, 1
  %vm646 = vcmp.eq.s32.totalorder %v630, 1
  %vm647 = vcmp.eq.s32.totalorder %v631, 1
  %vm648 = vcmp.eq.s32.totalorder %v632, 1
  %vm649 = vcmp.eq.s32.totalorder %v633, 1
  %vm650 = vcmp.eq.s32.totalorder %v634, 1
  %vm651 = vcmp.eq.s32.totalorder %v635, 1
  %vm652 = vcmp.eq.s32.totalorder %v636, 1
  %vm653 = vcmp.eq.s32.totalorder %v637, 1
  %v654 = vlaneseq
  %v655 = vshrl.u32 %v654, 7
  %v656 = vsub.s32 0, %v655
  %v657 = vrot.slane %v596, %v656
  %v658 = vlaneseq
  %v659 = vshrl.u32 %v658, 7
  %v660 = vsub.s32 0, %v659
  %v661 = vrot.slane %v610, %v660
  %v662 = vlaneseq
  %v663 = vshrl.u32 %v662, 7
  %v664 = vsub.s32 0, %v663
  %v665 = vrot.slane %v618, %v664
  %v666 = vlaneseq
  %v667 = vshrl.u32 %v666, 7
  %v668 = vsub.s32 0, %v667
  %v669 = vrot.slane %v620, %v668
  %v670 = vlaneseq
  %v671 = vshrl.u32 %v670, 7
  %v672 = vsub.s32 0, %v671
  %v673 = vrot.slane %v603, %v672
  %v674 = vlaneseq
  %v675 = vshrl.u32 %v674, 7
  %v676 = vsub.s32 0, %v675
  %v677 = vrot.slane %v617, %v676
  %v678 = vlaneseq
  %v679 = vshrl.u32 %v678, 7
  %v680 = vsub.s32 0, %v679
  %v681 = vrot.slane %v619, %v680
  %v682 = vlaneseq
  %v683 = vshrl.u32 %v682, 7
  %v684 = vsub.s32 0, %v683
  %v685 = vrot.slane %v621, %v684
  %v694 = vsel %vm638, %v657, -1e+30
  %v695 = vsel %vm639, %v657, -1e+30
  %v696 = vsel %vm640, %v661, -1e+30
  %v697 = vsel %vm641, %v661, -1e+30
  %v698 = vsel %vm642, %v665, -1e+30
  %v699 = vsel %vm643, %v665, -1e+30
  %v700 = vsel %vm644, %v669, -1e+30
  %v701 = vsel %vm645, %v669, -1e+30
  %v702 = vsel %vm646, %v673, -1e+30
  %v703 = vsel %vm647, %v673, -1e+30
  %v704 = vsel %vm648, %v677, -1e+30
  %v705 = vsel %vm649, %v677, -1e+30
  %v706 = vsel %vm650, %v681, -1e+30
  %v707 = vsel %vm651, %v681, -1e+30
  %v708 = vsel %vm652, %v685, -1e+30
  %v709 = vsel %vm653, %v685, -1e+30
  %v710 = vsel %vm116, %v694, -inf
  %v711 = vsel %vm116, %v696, -inf
  %v712 = vsel %vm116, %v698, -inf
  %v713 = vmax.f32 %v710, %v712
  %v714 = vsel %vm116, %v700, -inf
  %v715 = vmax.f32 %v711, %v714
  %v716 = vsel %vm116, %v702, -inf
  %v717 = vmax.f32 %v713, %v716
  %v718 = vsel %vm116, %v704, -inf
  %v719 = vmax.f32 %v715, %v718
  %v720 = vsel %vm116, %v706, -inf
  %v721 = vmax.f32 %v717, %v720
  %v722 = vsel %vm116, %v708, -inf
  %v723 = vmax.f32 %v719, %v722
  %v724 = vmax.f32 %v721, %v723
  %v725 = vsel %vm116, %v695, -inf
  %v726 = vsel %vm116, %v697, -inf
  %v727 = vsel %vm116, %v699, -inf
  %v728 = vmax.f32 %v725, %v727
  %v729 = vsel %vm116, %v701, -inf
  %v730 = vmax.f32 %v726, %v729
  %v731 = vsel %vm116, %v703, -inf
  %v732 = vmax.f32 %v728, %v731
  %v733 = vsel %vm116, %v705, -inf
  %v734 = vmax.f32 %v730, %v733
  %v735 = vsel %vm116, %v707, -inf
  %v736 = vmax.f32 %v732, %v735
  %v737 = vsel %vm116, %v709, -inf
  %v738 = vmax.f32 %v734, %v737
  %v739 = vmax.f32 %v736, %v738
  %v740 = vmax.f32 %v724, -1e+30
  %v741 = vmax.f32 %v739, -1e+30
  %v742 = vsel %vm638, %v657, 1e+30
  %v743 = vsel %vm639, %v657, 1e+30
  %v744 = vsel %vm640, %v661, 1e+30
  %v745 = vsel %vm641, %v661, 1e+30
  %v746 = vsel %vm642, %v665, 1e+30
  %v747 = vsel %vm643, %v665, 1e+30
  %v748 = vsel %vm644, %v669, 1e+30
  %v749 = vsel %vm645, %v669, 1e+30
  %v750 = vsel %vm646, %v673, 1e+30
  %v751 = vsel %vm647, %v673, 1e+30
  %v752 = vsel %vm648, %v677, 1e+30
  %v753 = vsel %vm649, %v677, 1e+30
  %v754 = vsel %vm650, %v681, 1e+30
  %v755 = vsel %vm651, %v681, 1e+30
  %v756 = vsel %vm652, %v685, 1e+30
  %v757 = vsel %vm653, %v685, 1e+30
  %v758 = vsel %vm116, %v742, inf
  %v759 = vsel %vm116, %v744, inf
  %v760 = vsel %vm116, %v746, inf
  %v761 = vmin.f32 %v758, %v760
  %v762 = vsel %vm116, %v748, inf
  %v763 = vmin.f32 %v759, %v762
  %v764 = vsel %vm116, %v750, inf
  %v765 = vmin.f32 %v761, %v764
  %v766 = vsel %vm116, %v752, inf
  %v767 = vmin.f32 %v763, %v766
  %v768 = vsel %vm116, %v754, inf
  %v769 = vmin.f32 %v765, %v768
  %v770 = vsel %vm116, %v756, inf
  %v771 = vmin.f32 %v767, %v770
  %v772 = vmin.f32 %v769, %v771
  %v773 = vsel %vm116, %v743, inf
  %v774 = vsel %vm116, %v745, inf
  %v775 = vsel %vm116, %v747, inf
  %v776 = vmin.f32 %v773, %v775
  %v777 = vsel %vm116, %v749, inf
  %v778 = vmin.f32 %v774, %v777
  %v779 = vsel %vm116, %v751, inf
  %v780 = vmin.f32 %v776, %v779
  %v781 = vsel %vm116, %v753, inf
  %v782 = vmin.f32 %v778, %v781
  %v783 = vsel %vm116, %v755, inf
  %v784 = vmin.f32 %v780, %v783
  %v785 = vsel %vm116, %v757, inf
  %v786 = vmin.f32 %v782, %v785
  %v787 = vmin.f32 %v784, %v786
  %v788 = vmin.f32 %v772, 1e+30
  %v789 = vmin.f32 %v787, 1e+30
  %v790 = vlaneseq
  %v791 = vshrl.u32 %v790, 7
  %v792 = vsub.s32 0, %v791
  %v793 = vrot.slane %v72, %v792
  %795 = vbcast.lane.b32.xlu0 %v793, 256
  %v796 = vpop.permute.xlu0 %795
  %s798 = sor.u32 256, 8
  %799 = vbcast.lane.b32.xlu0 %v793, %s798
  %v800 = vpop.permute.xlu0 %799
  %v801 = vlaneseq
  %v802 = vshrl.u32 %v801, 7
  %v803 = vsub.s32 1, %v802
  %v804 = vrot.slane %v72, %v803
  %806 = vbcast.lane.b32.xlu0 %v804, 256
  %v807 = vpop.permute.xlu0 %806
  %s809 = sor.u32 256, 8
  %810 = vbcast.lane.b32.xlu0 %v804, %s809
  %v811 = vpop.permute.xlu0 %810
  %v812 = vlaneseq
  %v813 = vshrl.u32 %v812, 7
  %v814 = vsub.s32 2, %v813
  %v815 = vrot.slane %v72, %v814
  %817 = vbcast.lane.b32.xlu0 %v815, 256
  %v818 = vpop.permute.xlu0 %817
  %s820 = sor.u32 256, 8
  %821 = vbcast.lane.b32.xlu0 %v815, %s820
  %v822 = vpop.permute.xlu0 %821
  %v823 = vlaneseq
  %v824 = vshrl.u32 %v823, 7
  %v825 = vsub.s32 3, %v824
  %v826 = vrot.slane %v72, %v825
  %828 = vbcast.lane.b32.xlu0 %v826, 256
  %v829 = vpop.permute.xlu0 %828
  %s831 = sor.u32 256, 8
  %832 = vbcast.lane.b32.xlu0 %v826, %s831
  %v833 = vpop.permute.xlu0 %832
  %v834 = vlaneseq
  %v835 = vshrl.u32 %v834, 7
  %v836 = vsub.s32 4, %v835
  %v837 = vrot.slane %v72, %v836
  %839 = vbcast.lane.b32.xlu0 %v837, 256
  %v840 = vpop.permute.xlu0 %839
  %s842 = sor.u32 256, 8
  %843 = vbcast.lane.b32.xlu0 %v837, %s842
  %v844 = vpop.permute.xlu0 %843
  %v845 = vlaneseq
  %v846 = vshrl.u32 %v845, 7
  %v847 = vsub.s32 5, %v846
  %v848 = vrot.slane %v72, %v847
  %850 = vbcast.lane.b32.xlu0 %v848, 256
  %v851 = vpop.permute.xlu0 %850
  %s853 = sor.u32 256, 8
  %854 = vbcast.lane.b32.xlu0 %v848, %s853
  %v855 = vpop.permute.xlu0 %854
  %v856 = vlaneseq
  %v857 = vshrl.u32 %v856, 7
  %v858 = vsub.s32 6, %v857
  %v859 = vrot.slane %v72, %v858
  %861 = vbcast.lane.b32.xlu0 %v859, 256
  %v862 = vpop.permute.xlu0 %861
  %s864 = sor.u32 256, 8
  %865 = vbcast.lane.b32.xlu0 %v859, %s864
  %v866 = vpop.permute.xlu0 %865
  %v867 = vlaneseq
  %v868 = vshrl.u32 %v867, 7
  %v869 = vsub.s32 7, %v868
  %v870 = vrot.slane %v72, %v869
  %872 = vbcast.lane.b32.xlu0 %v870, 256
  %v873 = vpop.permute.xlu0 %872
  %s875 = sor.u32 256, 8
  %876 = vbcast.lane.b32.xlu0 %v870, %s875
  %v877 = vpop.permute.xlu0 %876
  %vm878 = vcmp.gt.f32.partialorder %v796, 0.0
  %vm879 = vcmp.gt.f32.partialorder %v800, 0.0
  %vm880 = vcmp.gt.f32.partialorder %v807, 0.0
  %vm881 = vcmp.gt.f32.partialorder %v811, 0.0
  %vm882 = vcmp.gt.f32.partialorder %v818, 0.0
  %vm883 = vcmp.gt.f32.partialorder %v822, 0.0
  %vm884 = vcmp.gt.f32.partialorder %v829, 0.0
  %vm885 = vcmp.gt.f32.partialorder %v833, 0.0
  %vm886 = vcmp.gt.f32.partialorder %v840, 0.0
  %vm887 = vcmp.gt.f32.partialorder %v844, 0.0
  %vm888 = vcmp.gt.f32.partialorder %v851, 0.0
  %vm889 = vcmp.gt.f32.partialorder %v855, 0.0
  %vm890 = vcmp.gt.f32.partialorder %v862, 0.0
  %vm891 = vcmp.gt.f32.partialorder %v866, 0.0
  %vm892 = vcmp.gt.f32.partialorder %v873, 0.0
  %vm893 = vcmp.gt.f32.partialorder %v877, 0.0
  %v895 = vcombine.high %v195, %v195
  %v897 = vunpack.c.l.s4 1966171168
  %v898 = vunpack.c.0.s8 %v897
  %v899 = vlaneseq
  %v900 = vshrl.u32 %v899, 7
  %v901 = vsub.s32 %v898, %v900
  %v902 = vrot.slane %v195, %v901
  %v904 = vunpack.c.l.s4 1966171168
  %v905 = vunpack.c.0.s8 %v904
  %v906 = vlaneseq
  %v907 = vshrl.u32 %v906, 7
  %v908 = vsub.s32 %v905, %v907
  %v909 = vrot.slane %v895, %v908
  %v910 = vcombine.high %v902, %v902
  %v911 = vcombine.high %v909, %v909
  %v913 = vunpack.c.l.s4 1966171168
  %v914 = vunpack.c.0.s8 %v913
  %v915 = vlaneseq
  %v916 = vshrl.u32 %v915, 7
  %v917 = vsub.s32 %v914, %v916
  %v918 = vrot.slane %v902, %v917
  %v920 = vunpack.c.l.s4 1966171168
  %v921 = vunpack.c.0.s8 %v920
  %v922 = vlaneseq
  %v923 = vshrl.u32 %v922, 7
  %v924 = vsub.s32 %v921, %v923
  %v925 = vrot.slane %v909, %v924
  %v927 = vunpack.c.l.s4 1966171168
  %v928 = vunpack.c.0.s8 %v927
  %v929 = vlaneseq
  %v930 = vshrl.u32 %v929, 7
  %v931 = vsub.s32 %v928, %v930
  %v932 = vrot.slane %v910, %v931
  %v934 = vunpack.c.l.s4 1966171168
  %v935 = vunpack.c.0.s8 %v934
  %v936 = vlaneseq
  %v937 = vshrl.u32 %v936, 7
  %v938 = vsub.s32 %v935, %v937
  %v939 = vrot.slane %v911, %v938
  %v940 = vcombine.high %v918, %v918
  %v941 = vcombine.high %v925, %v925
  %v942 = vcombine.high %v932, %v932
  %v943 = vcombine.high %v939, %v939
  %v944 = vsel %vm878, 1, 0
  %v945 = vsel %vm879, 1, 0
  %v946 = vsel %vm880, 1, 0
  %v947 = vsel %vm881, 1, 0
  %v948 = vsel %vm882, 1, 0
  %v949 = vsel %vm883, 1, 0
  %v950 = vsel %vm884, 1, 0
  %v951 = vsel %vm885, 1, 0
  %v952 = vsel %vm886, 1, 0
  %v953 = vsel %vm887, 1, 0
  %v954 = vsel %vm888, 1, 0
  %v955 = vsel %vm889, 1, 0
  %v956 = vsel %vm890, 1, 0
  %v957 = vsel %vm891, 1, 0
  %v958 = vsel %vm892, 1, 0
  %v959 = vsel %vm893, 1, 0
  %vm960 = vcmp.eq.s32.totalorder %v944, 1
  %vm961 = vcmp.eq.s32.totalorder %v945, 1
  %vm962 = vcmp.eq.s32.totalorder %v946, 1
  %vm963 = vcmp.eq.s32.totalorder %v947, 1
  %vm964 = vcmp.eq.s32.totalorder %v948, 1
  %vm965 = vcmp.eq.s32.totalorder %v949, 1
  %vm966 = vcmp.eq.s32.totalorder %v950, 1
  %vm967 = vcmp.eq.s32.totalorder %v951, 1
  %vm968 = vcmp.eq.s32.totalorder %v952, 1
  %vm969 = vcmp.eq.s32.totalorder %v953, 1
  %vm970 = vcmp.eq.s32.totalorder %v954, 1
  %vm971 = vcmp.eq.s32.totalorder %v955, 1
  %vm972 = vcmp.eq.s32.totalorder %v956, 1
  %vm973 = vcmp.eq.s32.totalorder %v957, 1
  %vm974 = vcmp.eq.s32.totalorder %v958, 1
  %vm975 = vcmp.eq.s32.totalorder %v959, 1
  %v976 = vlaneseq
  %v977 = vshrl.u32 %v976, 7
  %v978 = vsub.s32 0, %v977
  %v979 = vrot.slane %v918, %v978
  %v980 = vlaneseq
  %v981 = vshrl.u32 %v980, 7
  %v982 = vsub.s32 0, %v981
  %v983 = vrot.slane %v932, %v982
  %v984 = vlaneseq
  %v985 = vshrl.u32 %v984, 7
  %v986 = vsub.s32 0, %v985
  %v987 = vrot.slane %v940, %v986
  %v988 = vlaneseq
  %v989 = vshrl.u32 %v988, 7
  %v990 = vsub.s32 0, %v989
  %v991 = vrot.slane %v942, %v990
  %v992 = vlaneseq
  %v993 = vshrl.u32 %v992, 7
  %v994 = vsub.s32 0, %v993
  %v995 = vrot.slane %v925, %v994
  %v996 = vlaneseq
  %v997 = vshrl.u32 %v996, 7
  %v998 = vsub.s32 0, %v997
  %v999 = vrot.slane %v939, %v998
  %v1000 = vlaneseq
  %v1001 = vshrl.u32 %v1000, 7
  %v1002 = vsub.s32 0, %v1001
  %v1003 = vrot.slane %v941, %v1002
  %v1004 = vlaneseq
  %v1005 = vshrl.u32 %v1004, 7
  %v1006 = vsub.s32 0, %v1005
  %v1007 = vrot.slane %v943, %v1006
  %v1016 = vsel %vm960, %v979, -1e+30
  %v1017 = vsel %vm961, %v979, -1e+30
  %v1018 = vsel %vm962, %v983, -1e+30
  %v1019 = vsel %vm963, %v983, -1e+30
  %v1020 = vsel %vm964, %v987, -1e+30
  %v1021 = vsel %vm965, %v987, -1e+30
  %v1022 = vsel %vm966, %v991, -1e+30
  %v1023 = vsel %vm967, %v991, -1e+30
  %v1024 = vsel %vm968, %v995, -1e+30
  %v1025 = vsel %vm969, %v995, -1e+30
  %v1026 = vsel %vm970, %v999, -1e+30
  %v1027 = vsel %vm971, %v999, -1e+30
  %v1028 = vsel %vm972, %v1003, -1e+30
  %v1029 = vsel %vm973, %v1003, -1e+30
  %v1030 = vsel %vm974, %v1007, -1e+30
  %v1031 = vsel %vm975, %v1007, -1e+30
  %v1032 = vsel %vm116, %v1016, -inf
  %v1033 = vsel %vm116, %v1018, -inf
  %v1034 = vsel %vm116, %v1020, -inf
  %v1035 = vmax.f32 %v1032, %v1034
  %v1036 = vsel %vm116, %v1022, -inf
  %v1037 = vmax.f32 %v1033, %v1036
  %v1038 = vsel %vm116, %v1024, -inf
  %v1039 = vmax.f32 %v1035, %v1038
  %v1040 = vsel %vm116, %v1026, -inf
  %v1041 = vmax.f32 %v1037, %v1040
  %v1042 = vsel %vm116, %v1028, -inf
  %v1043 = vmax.f32 %v1039, %v1042
  %v1044 = vsel %vm116, %v1030, -inf
  %v1045 = vmax.f32 %v1041, %v1044
  %v1046 = vmax.f32 %v1043, %v1045
  %v1047 = vsel %vm116, %v1017, -inf
  %v1048 = vsel %vm116, %v1019, -inf
  %v1049 = vsel %vm116, %v1021, -inf
  %v1050 = vmax.f32 %v1047, %v1049
  %v1051 = vsel %vm116, %v1023, -inf
  %v1052 = vmax.f32 %v1048, %v1051
  %v1053 = vsel %vm116, %v1025, -inf
  %v1054 = vmax.f32 %v1050, %v1053
  %v1055 = vsel %vm116, %v1027, -inf
  %v1056 = vmax.f32 %v1052, %v1055
  %v1057 = vsel %vm116, %v1029, -inf
  %v1058 = vmax.f32 %v1054, %v1057
  %v1059 = vsel %vm116, %v1031, -inf
  %v1060 = vmax.f32 %v1056, %v1059
  %v1061 = vmax.f32 %v1058, %v1060
  %v1062 = vmax.f32 %v740, %v1046
  %v1063 = vmax.f32 %v741, %v1061
  %v1064 = vsel %vm960, %v979, 1e+30
  %v1065 = vsel %vm961, %v979, 1e+30
  %v1066 = vsel %vm962, %v983, 1e+30
  %v1067 = vsel %vm963, %v983, 1e+30
  %v1068 = vsel %vm964, %v987, 1e+30
  %v1069 = vsel %vm965, %v987, 1e+30
  %v1070 = vsel %vm966, %v991, 1e+30
  %v1071 = vsel %vm967, %v991, 1e+30
  %v1072 = vsel %vm968, %v995, 1e+30
  %v1073 = vsel %vm969, %v995, 1e+30
  %v1074 = vsel %vm970, %v999, 1e+30
  %v1075 = vsel %vm971, %v999, 1e+30
  %v1076 = vsel %vm972, %v1003, 1e+30
  %v1077 = vsel %vm973, %v1003, 1e+30
  %v1078 = vsel %vm974, %v1007, 1e+30
  %v1079 = vsel %vm975, %v1007, 1e+30
  %v1080 = vsel %vm116, %v1064, inf
  %v1081 = vsel %vm116, %v1066, inf
  %v1082 = vsel %vm116, %v1068, inf
  %v1083 = vmin.f32 %v1080, %v1082
  %v1084 = vsel %vm116, %v1070, inf
  %v1085 = vmin.f32 %v1081, %v1084
  %v1086 = vsel %vm116, %v1072, inf
  %v1087 = vmin.f32 %v1083, %v1086
  %v1088 = vsel %vm116, %v1074, inf
  %v1089 = vmin.f32 %v1085, %v1088
  %v1090 = vsel %vm116, %v1076, inf
  %v1091 = vmin.f32 %v1087, %v1090
  %v1092 = vsel %vm116, %v1078, inf
  %v1093 = vmin.f32 %v1089, %v1092
  %v1094 = vmin.f32 %v1091, %v1093
  %v1095 = vsel %vm116, %v1065, inf
  %v1096 = vsel %vm116, %v1067, inf
  %v1097 = vsel %vm116, %v1069, inf
  %v1098 = vmin.f32 %v1095, %v1097
  %v1099 = vsel %vm116, %v1071, inf
  %v1100 = vmin.f32 %v1096, %v1099
  %v1101 = vsel %vm116, %v1073, inf
  %v1102 = vmin.f32 %v1098, %v1101
  %v1103 = vsel %vm116, %v1075, inf
  %v1104 = vmin.f32 %v1100, %v1103
  %v1105 = vsel %vm116, %v1077, inf
  %v1106 = vmin.f32 %v1102, %v1105
  %v1107 = vsel %vm116, %v1079, inf
  %v1108 = vmin.f32 %v1104, %v1107
  %v1109 = vmin.f32 %v1106, %v1108
  %v1110 = vmin.f32 %v788, %v1094
  %v1111 = vmin.f32 %v789, %v1109
  %v1112 = vadd.f32 %v365, %v276
  %v1113 = vadd.f32 %v366, %v281
  %v1114 = vsel %vm85, 1, 0
  %v1115 = vsel %vm86, 1, 0
  %vm1116 = vcmp.eq.s32.totalorder %v1114, 1
  %vm1117 = vcmp.eq.s32.totalorder %v1115, 1
  %v1118 = vsel %vm1116, %v1112, 0.0
  %v1119 = vsel %vm1117, %v1113, 0.0
  %v1120 = vadd.f32 %v1062, %v276
  %v1121 = vadd.f32 %v1063, %v281
  %v1122 = vsel %vm1116, %v1120, 0.0
  %v1123 = vsel %vm1117, %v1121, 0.0
  %v1124 = vadd.f32 %v1110, %v276
  %v1125 = vadd.f32 %v1111, %v281
  %v1126 = vsel %vm1116, %v1124, 0.0
  %v1127 = vsel %vm1117, %v1125, 0.0
  %v1128 = vsel %vm1116, %v460, 0.0
  %v1129 = vsel %vm1117, %v467, 0.0
  %1132 = vrot.lane.b32.xlu0 %v1122, 32
  %v1133 = vpop.permute.xlu0 %1132
  %1134 = vrot.lane.b32.xlu0 %v1123, 32
  %v1135 = vpop.permute.xlu0 %1134
  %1140 = vrot.lane.b32.xlu0 %v1126, 64
  %v1141 = vpop.permute.xlu0 %1140
  %1142 = vrot.lane.b32.xlu0 %v1127, 64
  %v1143 = vpop.permute.xlu0 %1142
  %1148 = vrot.lane.b32.xlu0 %v1128, 96
  %v1149 = vpop.permute.xlu0 %1148
  %1150 = vrot.lane.b32.xlu0 %v1129, 96
  %v1151 = vpop.permute.xlu0 %1150
  %v1154 = vsel %vm116, %v1118, %v1133
  %v1155 = vsel %vm116, %v1119, %v1135
  %vm1156 = vcmask 523264
  %v1157 = vsel %vm1156, %v1154, %v1141
  %v1158 = vsel %vm1156, %v1155, %v1143
  %vm1159 = vcmask 785408
  %v1160 = vsel %vm1159, %v1157, %v1149
  %v1161 = vsel %vm1159, %v1158, %v1151
  %v1162 = vmul.f32 %v103, %v1160
  %v1163 = vmul.f32 %v104, %v1161
  %v1164 = vmul.f32 %v110, %v1160
  %v1165 = vmul.f32 %v111, %v1161
  %1168 = vrot.lane.b32.xlu0 %v1160, 32
  %v1169 = vpop.permute.xlu0 %1168
  %1170 = vrot.lane.b32.xlu0 %v1161, 32
  %v1171 = vpop.permute.xlu0 %1170
  %1176 = vrot.lane.b32.xlu0 %v1162, 32
  %v1177 = vpop.permute.xlu0 %1176
  %1178 = vrot.lane.b32.xlu0 %v1163, 32
  %v1179 = vpop.permute.xlu0 %1178
  %1184 = vrot.lane.b32.xlu0 %v1164, 32
  %v1185 = vpop.permute.xlu0 %1184
  %1186 = vrot.lane.b32.xlu0 %v1165, 32
  %v1187 = vpop.permute.xlu0 %1186
  %v1190 = vsel %vm116, %v69, %v1169
  %v1191 = vsel %vm116, %v70, %v1171
  %v1192 = vsel %vm116, %v1169, %v1177
  %v1193 = vsel %vm116, %v1171, %v1179
  %v1194 = vsel %vm116, %v1177, %v1185
  %v1195 = vsel %vm116, %v1179, %v1187
  %v1196 = vld [vmem:[%s9] sm:$0xff]
  %v1197 = vld [vmem:[%s9 + $0x8] sm:$0xff]
  %v1198 = vld [vmem:[%s9 + $0x10] sm:$0xff]
  %v1199 = vld [vmem:[%s9 + $0x18] sm:$0xff]
  %v1200 = vld [vmem:[%s9 + $0x20] sm:$0xff]
  %v1201 = vld [vmem:[%s9 + $0x28] sm:$0xff]
  %v1202 = vld [vmem:[%s9 + $0x30] sm:$0xff]
  %v1203 = vld [vmem:[%s9 + $0x38] sm:$0xff]
  %v1204 = vld [vmem:[%s9 + $0x40] sm:$0xff]
  %v1205 = vld [vmem:[%s9 + $0x48] sm:$0xff]
  %v1206 = vld [vmem:[%s9 + $0x50] sm:$0xff]
  %v1207 = vld [vmem:[%s9 + $0x58] sm:$0xff]
  %v1208 = vld [vmem:[%s9 + $0x60] sm:$0xff]
  %v1209 = vld [vmem:[%s9 + $0x68] sm:$0xff]
  %v1210 = vld [vmem:[%s9 + $0x70] sm:$0xff]
  %v1211 = vld [vmem:[%s9 + $0x78] sm:$0xff]
  %v1212 = vld [vmem:[%s9 + $0x80] sm:$0xff]
  %v1213 = vld [vmem:[%s9 + $0x88] sm:$0xff]
  %v1214 = vld [vmem:[%s9 + $0x90] sm:$0xff]
  %v1215 = vld [vmem:[%s9 + $0x98] sm:$0xff]
  %v1216 = vld [vmem:[%s9 + $0xa0] sm:$0xff]
  %v1217 = vld [vmem:[%s9 + $0xa8] sm:$0xff]
  %v1218 = vld [vmem:[%s9 + $0xb0] sm:$0xff]
  %v1219 = vld [vmem:[%s9 + $0xb8] sm:$0xff]
  %v1220 = vld [vmem:[%s9 + $0xc0] sm:$0xff]
  %v1221 = vld [vmem:[%s9 + $0xc8] sm:$0xff]
  %v1222 = vld [vmem:[%s9 + $0xd0] sm:$0xff]
  %v1223 = vld [vmem:[%s9 + $0xd8] sm:$0xff]
  %v1224 = vld [vmem:[%s9 + $0xe0] sm:$0xff]
  %v1225 = vld [vmem:[%s9 + $0xe8] sm:$0xff]
  %v1226 = vld [vmem:[%s9 + $0xf0] sm:$0xff]
  %v1227 = vld [vmem:[%s9 + $0xf8] sm:$0xff]
  %v1228 = vld [vmem:[%s9 + $0x100] sm:$0xff]
  %v1229 = vld [vmem:[%s9 + $0x108] sm:$0xff]
  %v1230 = vld [vmem:[%s9 + $0x110] sm:$0xff]
  %v1231 = vld [vmem:[%s9 + $0x118] sm:$0xff]
  %v1232 = vld [vmem:[%s9 + $0x120] sm:$0xff]
  %v1233 = vld [vmem:[%s9 + $0x128] sm:$0xff]
  %v1234 = vld [vmem:[%s9 + $0x130] sm:$0xff]
  %v1235 = vld [vmem:[%s9 + $0x138] sm:$0xff]
  %v1236 = vld [vmem:[%s9 + $0x140] sm:$0xff]
  %v1237 = vld [vmem:[%s9 + $0x148] sm:$0xff]
  %v1238 = vld [vmem:[%s9 + $0x150] sm:$0xff]
  %v1239 = vld [vmem:[%s9 + $0x158] sm:$0xff]
  %v1240 = vld [vmem:[%s9 + $0x160] sm:$0xff]
  %v1241 = vld [vmem:[%s9 + $0x168] sm:$0xff]
  %v1242 = vld [vmem:[%s9 + $0x170] sm:$0xff]
  %v1243 = vld [vmem:[%s9 + $0x178] sm:$0xff]
  %v1244 = vld [vmem:[%s9 + $0x180] sm:$0xff]
  %v1245 = vld [vmem:[%s9 + $0x188] sm:$0xff]
  %v1246 = vld [vmem:[%s9 + $0x190] sm:$0xff]
  %v1247 = vld [vmem:[%s9 + $0x198] sm:$0xff]
  %v1248 = vld [vmem:[%s10] sm:$0x1]
  %v1250 = vlaneseq
  %v1251 = vshrl.u32 %v1250, 7
  %v1252 = vsub.s32 0, %v1251
  %v1253 = vrot.slane %v1248, %v1252
  %v1255 = vsel %vm116, %v1185, 0
  %v1257 = vsel %vm116, %v1187, 0
  %1259 = vmatprep.subr.mxu0 0.0
  %1260 = vmatpush1.msra.mxu0 %v1196
  %1261 = vmatprep.subr.mxu0 0.0
  %1262 = vmatpush1.msra.mxu0 %v1197
  %1263 = vmatprep.subr.mxu0 0.0
  %1264 = vmatpush1.msra.mxu0 %v1198
  %1265 = vmatprep.subr.mxu0 0.0
  %1266 = vmatpush1.msra.mxu0 %v1199
  %1267 = vmatprep.subr.mxu0 0.0
  %1268 = vmatpush1.msra.mxu0 %v1200
  %1269 = vmatprep.subr.mxu0 0.0
  %1270 = vmatpush1.msra.mxu0 %v1201
  %1271 = vmatprep.subr.mxu0 0.0
  %1272 = vmatpush1.msra.mxu0 %v1202
  %1273 = vmatprep.subr.mxu0 0.0
  %1274 = vmatpush1.msra.mxu0 %v1203
  %1275 = vmatprep.subr.mxu0 0.0
  %1276 = vmatpush1.msra.mxu0 %v1204
  %1277 = vmatprep.subr.mxu0 0.0
  %1278 = vmatpush1.msra.mxu0 %v1205
  %1279 = vmatprep.subr.mxu0 0.0
  %1280 = vmatpush1.msra.mxu0 %v1206
  %1281 = vmatprep.subr.mxu0 0.0
  %1282 = vmatpush1.msra.mxu0 %v1207
  %1283 = vmatprep.subr.mxu0 0.0
  %1284 = vmatpush1.msra.mxu0 %v1208
  %1285 = vmatprep.subr.mxu0 0.0
  %1286 = vmatpush1.msra.mxu0 %v1209
  %1287 = vmatprep.subr.mxu0 0.0
  %1288 = vmatpush1.msra.mxu0 %v1210
  %1289 = vmatprep.subr.mxu0 0.0
  %1290 = vmatpush1.msra.mxu0 %v1211
  %1291 = vmatprep.subr.mxu0 0.0
  %1292 = vmatpush1.msra.mxu0 %v1212
  %1293 = vmatprep.subr.mxu0 0.0
  %1294 = vmatpush1.msra.mxu0 %v1213
  %1295 = vmatprep.subr.mxu0 0.0
  %1296 = vmatpush1.msra.mxu0 %v1214
  %1297 = vmatprep.subr.mxu0 0.0
  %1298 = vmatpush1.msra.mxu0 %v1215
  %1299 = vmatprep.subr.mxu0 0.0
  %1300 = vmatpush1.msra.mxu0 %v1216
  %1301 = vmatprep.subr.mxu0 0.0
  %1302 = vmatpush1.msra.mxu0 %v1217
  %1303 = vmatprep.subr.mxu0 0.0
  %1304 = vmatpush1.msra.mxu0 %v1218
  %1305 = vmatprep.subr.mxu0 0.0
  %1306 = vmatpush1.msra.mxu0 %v1219
  %1307 = vmatprep.subr.mxu0 0.0
  %1308 = vmatpush1.msra.mxu0 %v1220
  %1309 = vmatprep.subr.mxu0 0.0
  %1310 = vmatpush1.msra.mxu0 %v1221
  %1311 = vmatprep.subr.mxu0 0.0
  %1312 = vmatpush1.msra.mxu0 %v1222
  %1313 = vmatprep.subr.mxu0 0.0
  %1314 = vmatpush1.msra.mxu0 %v1223
  %1315 = vmatprep.subr.mxu0 0.0
  %1316 = vmatpush1.msra.mxu0 %v1224
  %1317 = vmatprep.subr.mxu0 0.0
  %1318 = vmatpush1.msra.mxu0 %v1225
  %1319 = vmatprep.subr.mxu0 0.0
  %1320 = vmatpush1.msra.mxu0 %v1226
  %1321 = vmatprep.subr.mxu0 0.0
  %1322 = vmatpush1.msra.mxu0 %v1227
  %1323 = vmatprep.mubr.f32.mxu0 %v1192
  %1324 = vmatmul.mubr.f32.gmra.mrb[0].mxu0 %v1190
  %v1325 = vpop.f32.mrb[0].mxu0
  %v1326 = vadd.f32 %v1253, %v1325
  %v1327 = vpop.f32.mrb[0].mxu0
  %1328 = vmatprep.mubr.f32.mxu0 %v1193
  %1329 = vmatmul.mubr.f32.gmra.mrb[0].mxu0 %v1191
  %v1330 = vpop.f32.mrb[0].mxu0
  %v1331 = vadd.f32 %v1253, %v1330
  %v1332 = vpop.f32.mrb[0].mxu0
  %1333 = vdwg.mxu0
  %1334 = vmatprep.subr.mxu0 0.0
  %1335 = vmatpush1.msra.mxu0 %v1228
  %1336 = vmatprep.subr.mxu0 0.0
  %1337 = vmatpush1.msra.mxu0 %v1229
  %1338 = vmatprep.subr.mxu0 0.0
  %1339 = vmatpush1.msra.mxu0 %v1230
  %1340 = vmatprep.subr.mxu0 0.0
  %1341 = vmatpush1.msra.mxu0 %v1231
  %1342 = vmatprep.subr.mxu0 0.0
  %1343 = vmatpush1.msra.mxu0 %v1232
  %1344 = vmatprep.subr.mxu0 0.0
  %1345 = vmatpush1.msra.mxu0 %v1233
  %1346 = vmatprep.subr.mxu0 0.0
  %1347 = vmatpush1.msra.mxu0 %v1234
  %1348 = vmatprep.subr.mxu0 0.0
  %1349 = vmatpush1.msra.mxu0 %v1235
  %1350 = vmatprep.subr.mxu0 0.0
  %1351 = vmatpush1.msra.mxu0 %v1236
  %1352 = vmatprep.subr.mxu0 0.0
  %1353 = vmatpush1.msra.mxu0 %v1237
  %1354 = vmatprep.subr.mxu0 0.0
  %1355 = vmatpush1.msra.mxu0 %v1238
  %1356 = vmatprep.subr.mxu0 0.0
  %1357 = vmatpush1.msra.mxu0 %v1239
  %1358 = vmatprep.subr.mxu0 0.0
  %1359 = vmatpush1.msra.mxu0 %v1240
  %1360 = vmatprep.subr.mxu0 0.0
  %1361 = vmatpush1.msra.mxu0 %v1241
  %1362 = vmatprep.subr.mxu0 0.0
  %1363 = vmatpush1.msra.mxu0 %v1242
  %1364 = vmatprep.subr.mxu0 0.0
  %1365 = vmatpush1.msra.mxu0 %v1243
  %1366 = vmatprep.subr.mxu0 0.0
  %1367 = vmatpush1.msra.mxu0 %v1244
  %1368 = vmatprep.subr.mxu0 0.0
  %1369 = vmatpush1.msra.mxu0 %v1245
  %1370 = vmatprep.subr.mxu0 0.0
  %1371 = vmatpush1.msra.mxu0 %v1246
  %1372 = vmatprep.subr.mxu0 0.0
  %1373 = vmatpush1.msra.mxu0 %v1247
  %1374 = vmatprep.subr.mxu0 0.0
  %1375 = vmatpush1.msra.mxu0 0.0
  %1376 = vmatprep.subr.mxu0 0.0
  %1377 = vmatpush1.msra.mxu0 0.0
  %1378 = vmatprep.subr.mxu0 0.0
  %1379 = vmatpush1.msra.mxu0 0.0
  %1380 = vmatprep.subr.mxu0 0.0
  %1381 = vmatpush1.msra.mxu0 0.0
  %1382 = vmatprep.subr.mxu0 0.0
  %1383 = vmatpush1.msra.mxu0 0.0
  %1384 = vmatprep.subr.mxu0 0.0
  %1385 = vmatpush1.msra.mxu0 0.0
  %1386 = vmatprep.subr.mxu0 0.0
  %1387 = vmatpush1.msra.mxu0 0.0
  %1388 = vmatprep.subr.mxu0 0.0
  %1389 = vmatpush1.msra.mxu0 0.0
  %1390 = vmatprep.subr.mxu0 0.0
  %1391 = vmatpush1.msra.mxu0 0.0
  %1392 = vmatprep.subr.mxu0 0.0
  %1393 = vmatpush1.msra.mxu0 0.0
  %1394 = vmatprep.subr.mxu0 0.0
  %1395 = vmatpush1.msra.mxu0 0.0
  %1396 = vmatprep.subr.mxu0 0.0
  %1397 = vmatpush1.msra.mxu0 0.0
  %1398 = vmatprep.mubr.f32.mxu0 %v1255
  %1399 = vmatmul.mubr.f32.gmra.mrb[0].mxu0 %v1194
  %v1400 = vpop.f32.mrb[0].mxu0
  %v1401 = vadd.f32 %v1326, %v1400
  %v1402 = vpop.f32.mrb[0].mxu0
  %1403 = vmatprep.mubr.f32.mxu0 %v1257
  %1404 = vmatmul.mubr.f32.gmra.mrb[0].mxu0 %v1195
  %v1405 = vpop.f32.mrb[0].mxu0
  %v1406 = vadd.f32 %v1331, %v1405
  %v1407 = vpop.f32.mrb[0].mxu0
  %1408 = vdwg.mxu0
  %1410 = vset.pattern.permute.xlu0 0
  %1411 = vperm.xlu0 %1410, %v75
  %v1412 = vpop.permute.xlu0 %1411
  %1415 = vset.pattern.permute.xlu0 0
  %1416 = vperm.xlu0 %1415, %v76
  %v1417 = vpop.permute.xlu0 %1416
  %v1419 = vmul.f32 %v1401, %v1412
  %v1420 = vmul.f32 %v1406, %v1417
  %v1421 = vsel %vm116, %v1419, 0.0
  %v1422 = vsel %vm116, %v1420, 0.0
  %v1423 = vadd.f32 %v1421, %v1422
  %v1424 = vrot.slane %v1423, 4
  %v1425 = vadd.f32 %v1423, %v1424
  %v1426 = vrot.slane %v1425, 2
  %v1427 = vadd.f32 %v1425, %v1426
  %v1428 = vrot.slane %v1427, 1
  %v1429 = vadd.f32 %v1427, %v1428
  %v1430 = vrcp.pop 16.0
  %v1431 = vmul.f32 %v1429, %v1430
  %v1432 = vsub.f32 %v1419, %v1431
  %v1433 = vsub.f32 %v1420, %v1431
  %v1434 = vmul.f32 %v1432, %v1432
  %v1435 = vmul.f32 %v1433, %v1433
  %v1436 = vsel %vm116, %v1434, 0.0
  %v1437 = vsel %vm116, %v1435, 0.0
  %v1438 = vadd.f32 %v1436, %v1437
  %v1439 = vrot.slane %v1438, 4
  %v1440 = vadd.f32 %v1438, %v1439
  %v1441 = vrot.slane %v1440, 2
  %v1442 = vadd.f32 %v1440, %v1441
  %v1443 = vrot.slane %v1442, 1
  %v1444 = vadd.f32 %v1442, %v1443
  %v1445 = vmul.f32 %v1444, %v1430
  %v1446 = vadd.f32 %v1445, 1e-05
  %v1447 = vrsqrt.pop %v1446
  %v1448 = vmul.f32 %v1432, %v1447
  %v1449 = vmul.f32 %v1433, %v1447
  %v1450 = vld [vmem:[%s11] sm:$0x1]
  %v1452 = vlaneseq
  %v1453 = vshrl.u32 %v1452, 7
  %v1454 = vsub.s32 0, %v1453
  %v1455 = vrot.slane %v1450, %v1454
  %v1457 = vmul.f32 %v1448, %v1455
  %v1458 = vmul.f32 %v1449, %v1455
  %v1459 = vld [vmem:[%s12] sm:$0x1]
  %v1461 = vlaneseq
  %v1462 = vshrl.u32 %v1461, 7
  %v1463 = vsub.s32 0, %v1462
  %v1464 = vrot.slane %v1459, %v1463
  %v1466 = vadd.f32 %v1457, %v1464
  %v1467 = vadd.f32 %v1458, %v1464
  %v1468 = vmax.f32 %v1466, 0.0
  %v1469 = vmax.f32 %v1467, 0.0
  %v1470 = vld [vmem:[%s13] sm:$0xff]
  %v1471 = vld [vmem:[%s13 + $0x8] sm:$0xff]
  %v1472 = vld [vmem:[%s13 + $0x10] sm:$0xff]
  %v1473 = vld [vmem:[%s13 + $0x18] sm:$0xff]
  %v1474 = vld [vmem:[%s14] sm:$0x1]
  %v1476 = vlaneseq
  %v1477 = vshrl.u32 %v1476, 7
  %v1478 = vsub.s32 0, %v1477
  %v1479 = vrot.slane %v1474, %v1478
  %v1482 = vsel %vm116, %v1468, 0
  %v1485 = vsel %vm116, %v1469, 0
  %1487 = vmatprep.subr.mxu0 0.0
  %1488 = vmatpush1.msra.mxu0 %v1470
  %1489 = vmatprep.subr.mxu0 0.0
  %1490 = vmatpush1.msra.mxu0 %v1471
  %1491 = vmatprep.subr.mxu0 0.0
  %1492 = vmatpush1.msra.mxu0 %v1472
  %1493 = vmatprep.subr.mxu0 0.0
  %1494 = vmatpush1.msra.mxu0 %v1473
  %1495 = vmatprep.subr.mxu0 0.0
  %1496 = vmatpush1.msra.mxu0 0.0
  %1497 = vmatprep.subr.mxu0 0.0
  %1498 = vmatpush1.msra.mxu0 0.0
  %1499 = vmatprep.subr.mxu0 0.0
  %1500 = vmatpush1.msra.mxu0 0.0
  %1501 = vmatprep.subr.mxu0 0.0
  %1502 = vmatpush1.msra.mxu0 0.0
  %1503 = vmatprep.subr.mxu0 0.0
  %1504 = vmatpush1.msra.mxu0 0.0
  %1505 = vmatprep.subr.mxu0 0.0
  %1506 = vmatpush1.msra.mxu0 0.0
  %1507 = vmatprep.subr.mxu0 0.0
  %1508 = vmatpush1.msra.mxu0 0.0
  %1509 = vmatprep.subr.mxu0 0.0
  %1510 = vmatpush1.msra.mxu0 0.0
  %1511 = vmatprep.subr.mxu0 0.0
  %1512 = vmatpush1.msra.mxu0 0.0
  %1513 = vmatprep.subr.mxu0 0.0
  %1514 = vmatpush1.msra.mxu0 0.0
  %1515 = vmatprep.subr.mxu0 0.0
  %1516 = vmatpush1.msra.mxu0 0.0
  %1517 = vmatprep.subr.mxu0 0.0
  %1518 = vmatpush1.msra.mxu0 0.0
  %1519 = vmatprep.subr.mxu0 0.0
  %1520 = vmatpush1.msra.mxu0 0.0
  %1521 = vmatprep.subr.mxu0 0.0
  %1522 = vmatpush1.msra.mxu0 0.0
  %1523 = vmatprep.subr.mxu0 0.0
  %1524 = vmatpush1.msra.mxu0 0.0
  %1525 = vmatprep.subr.mxu0 0.0
  %1526 = vmatpush1.msra.mxu0 0.0
  %1527 = vmatprep.subr.mxu0 0.0
  %1528 = vmatpush1.msra.mxu0 0.0
  %1529 = vmatprep.subr.mxu0 0.0
  %1530 = vmatpush1.msra.mxu0 0.0
  %1531 = vmatprep.subr.mxu0 0.0
  %1532 = vmatpush1.msra.mxu0 0.0
  %1533 = vmatprep.subr.mxu0 0.0
  %1534 = vmatpush1.msra.mxu0 0.0
  %1535 = vmatprep.subr.mxu0 0.0
  %1536 = vmatpush1.msra.mxu0 0.0
  %1537 = vmatprep.subr.mxu0 0.0
  %1538 = vmatpush1.msra.mxu0 0.0
  %1539 = vmatprep.subr.mxu0 0.0
  %1540 = vmatpush1.msra.mxu0 0.0
  %1541 = vmatprep.subr.mxu0 0.0
  %1542 = vmatpush1.msra.mxu0 0.0
  %1543 = vmatprep.subr.mxu0 0.0
  %1544 = vmatpush1.msra.mxu0 0.0
  %1545 = vmatprep.subr.mxu0 0.0
  %1546 = vmatpush1.msra.mxu0 0.0
  %1547 = vmatprep.subr.mxu0 0.0
  %1548 = vmatpush1.msra.mxu0 0.0
  %1549 = vmatprep.subr.mxu0 0.0
  %1550 = vmatpush1.msra.mxu0 0.0
  %1551 = vmatprep.mubr.f32.mxu0 0.0
  %1552 = vmatmul.mubr.f32.gmra.mrb[0].mxu0 %v1482
  %v1553 = vpop.f32.mrb[0].mxu0
  %v1554 = vadd.f32 %v1479, %v1553
  %v1555 = vpop.f32.mrb[0].mxu0
  %1556 = vmatprep.mubr.f32.mxu0 0.0
  %1557 = vmatmul.mubr.f32.gmra.mrb[0].mxu0 %v1485
  %v1558 = vpop.f32.mrb[0].mxu0
  %v1559 = vadd.f32 %v1479, %v1558
  %v1560 = vpop.f32.mrb[0].mxu0
  %1561 = vdwg.mxu0
  %vm1562 = vcmp.ge.f32.partialorder %v1554, 0.0
  %vm1563 = vcmp.ge.f32.partialorder %v1559, 0.0
  %v1564 = vmul.f32 %v1554, 0.01
  %v1565 = vmul.f32 %v1559, 0.01
  %v1566 = vsel %vm1562, %v1554, %v1564
  %v1567 = vsel %vm1563, %v1559, %v1565
  %v1568 = vadd.f32 %v69, %v1566
  %v1569 = vadd.f32 %v70, %v1567
  %s1570 = scalar_lea.vmem %s6, 32
  %v1571 = vld [vmem:[%s1570] sm:$0xff]
  %v1572 = vld [vmem:[%s1570 + $0x8] sm:$0xff]
  %v1573 = vld [vmem:[%s1570 + $0x10] sm:$0xff]
  %v1574 = vld [vmem:[%s1570 + $0x18] sm:$0xff]
  %v1576 = vsel %vm116, %v1568, 0
  %v1579 = vsel %vm116, %v1569, 0
  %1581 = vmatprep.subr.mxu0 0.0
  %1582 = vmatpush1.msra.mxu0 %v1571
  %1583 = vmatprep.subr.mxu0 0.0
  %1584 = vmatpush1.msra.mxu0 %v1572
  %1585 = vmatprep.subr.mxu0 0.0
  %1586 = vmatpush1.msra.mxu0 %v1573
  %1587 = vmatprep.subr.mxu0 0.0
  %1588 = vmatpush1.msra.mxu0 %v1574
  %1589 = vmatprep.subr.mxu0 0.0
  %1590 = vmatpush1.msra.mxu0 0.0
  %1591 = vmatprep.subr.mxu0 0.0
  %1592 = vmatpush1.msra.mxu0 0.0
  %1593 = vmatprep.subr.mxu0 0.0
  %1594 = vmatpush1.msra.mxu0 0.0
  %1595 = vmatprep.subr.mxu0 0.0
  %1596 = vmatpush1.msra.mxu0 0.0
  %1597 = vmatprep.subr.mxu0 0.0
  %1598 = vmatpush1.msra.mxu0 0.0
  %1599 = vmatprep.subr.mxu0 0.0
  %1600 = vmatpush1.msra.mxu0 0.0
  %1601 = vmatprep.subr.mxu0 0.0
  %1602 = vmatpush1.msra.mxu0 0.0
  %1603 = vmatprep.subr.mxu0 0.0
  %1604 = vmatpush1.msra.mxu0 0.0
  %1605 = vmatprep.subr.mxu0 0.0
  %1606 = vmatpush1.msra.mxu0 0.0
  %1607 = vmatprep.subr.mxu0 0.0
  %1608 = vmatpush1.msra.mxu0 0.0
  %1609 = vmatprep.subr.mxu0 0.0
  %1610 = vmatpush1.msra.mxu0 0.0
  %1611 = vmatprep.subr.mxu0 0.0
  %1612 = vmatpush1.msra.mxu0 0.0
  %1613 = vmatprep.subr.mxu0 0.0
  %1614 = vmatpush1.msra.mxu0 0.0
  %1615 = vmatprep.subr.mxu0 0.0
  %1616 = vmatpush1.msra.mxu0 0.0
  %1617 = vmatprep.subr.mxu0 0.0
  %1618 = vmatpush1.msra.mxu0 0.0
  %1619 = vmatprep.subr.mxu0 0.0
  %1620 = vmatpush1.msra.mxu0 0.0
  %1621 = vmatprep.subr.mxu0 0.0
  %1622 = vmatpush1.msra.mxu0 0.0
  %1623 = vmatprep.subr.mxu0 0.0
  %1624 = vmatpush1.msra.mxu0 0.0
  %1625 = vmatprep.subr.mxu0 0.0
  %1626 = vmatpush1.msra.mxu0 0.0
  %1627 = vmatprep.subr.mxu0 0.0
  %1628 = vmatpush1.msra.mxu0 0.0
  %1629 = vmatprep.subr.mxu0 0.0
  %1630 = vmatpush1.msra.mxu0 0.0
  %1631 = vmatprep.subr.mxu0 0.0
  %1632 = vmatpush1.msra.mxu0 0.0
  %1633 = vmatprep.subr.mxu0 0.0
  %1634 = vmatpush1.msra.mxu0 0.0
  %1635 = vmatprep.subr.mxu0 0.0
  %1636 = vmatpush1.msra.mxu0 0.0
  %1637 = vmatprep.subr.mxu0 0.0
  %1638 = vmatpush1.msra.mxu0 0.0
  %1639 = vmatprep.subr.mxu0 0.0
  %1640 = vmatpush1.msra.mxu0 0.0
  %1641 = vmatprep.subr.mxu0 0.0
  %1642 = vmatpush1.msra.mxu0 0.0
  %1643 = vmatprep.subr.mxu0 0.0
  %1644 = vmatpush1.msra.mxu0 0.0
  %1645 = vmatprep.mubr.f32.mxu0 0.0
  %1646 = vmatmul.mubr.f32.gmra.mrb[0].mxu0 %v1576
  %v1647 = vpop.f32.mrb[0].mxu0
  %v1648 = vadd.f32 0.0, %v1647
  %v1649 = vpop.f32.mrb[0].mxu0
  %1650 = vmatprep.mubr.f32.mxu0 0.0
  %1651 = vmatmul.mubr.f32.gmra.mrb[0].mxu0 %v1579
  %v1652 = vpop.f32.mrb[0].mxu0
  %v1653 = vadd.f32 0.0, %v1652
  %v1654 = vpop.f32.mrb[0].mxu0
  %1655 = vdwg.mxu0
  %s1656 = scalar_lea.vmem %s7, 32
  %v1657 = vld [vmem:[%s1656] sm:$0xff]
  %v1658 = vld [vmem:[%s1656 + $0x8] sm:$0xff]
  %v1659 = vld [vmem:[%s1656 + $0x10] sm:$0xff]
  %v1660 = vld [vmem:[%s1656 + $0x18] sm:$0xff]
  %s1661 = scalar_lea.vmem %s8, 1
  %v1662 = vld [vmem:[%s1661] sm:$0x1]
  %v1664 = vlaneseq
  %v1665 = vshrl.u32 %v1664, 7
  %v1666 = vsub.s32 0, %v1665
  %v1667 = vrot.slane %v1662, %v1666
  %1669 = vmatprep.subr.mxu0 0.0
  %1670 = vmatpush1.msra.mxu0 %v1657
  %1671 = vmatprep.subr.mxu0 0.0
  %1672 = vmatpush1.msra.mxu0 %v1658
  %1673 = vmatprep.subr.mxu0 0.0
  %1674 = vmatpush1.msra.mxu0 %v1659
  %1675 = vmatprep.subr.mxu0 0.0
  %1676 = vmatpush1.msra.mxu0 %v1660
  %1677 = vmatprep.subr.mxu0 0.0
  %1678 = vmatpush1.msra.mxu0 0.0
  %1679 = vmatprep.subr.mxu0 0.0
  %1680 = vmatpush1.msra.mxu0 0.0
  %1681 = vmatprep.subr.mxu0 0.0
  %1682 = vmatpush1.msra.mxu0 0.0
  %1683 = vmatprep.subr.mxu0 0.0
  %1684 = vmatpush1.msra.mxu0 0.0
  %1685 = vmatprep.subr.mxu0 0.0
  %1686 = vmatpush1.msra.mxu0 0.0
  %1687 = vmatprep.subr.mxu0 0.0
  %1688 = vmatpush1.msra.mxu0 0.0
  %1689 = vmatprep.subr.mxu0 0.0
  %1690 = vmatpush1.msra.mxu0 0.0
  %1691 = vmatprep.subr.mxu0 0.0
  %1692 = vmatpush1.msra.mxu0 0.0
  %1693 = vmatprep.subr.mxu0 0.0
  %1694 = vmatpush1.msra.mxu0 0.0
  %1695 = vmatprep.subr.mxu0 0.0
  %1696 = vmatpush1.msra.mxu0 0.0
  %1697 = vmatprep.subr.mxu0 0.0
  %1698 = vmatpush1.msra.mxu0 0.0
  %1699 = vmatprep.subr.mxu0 0.0
  %1700 = vmatpush1.msra.mxu0 0.0
  %1701 = vmatprep.subr.mxu0 0.0
  %1702 = vmatpush1.msra.mxu0 0.0
  %1703 = vmatprep.subr.mxu0 0.0
  %1704 = vmatpush1.msra.mxu0 0.0
  %1705 = vmatprep.subr.mxu0 0.0
  %1706 = vmatpush1.msra.mxu0 0.0
  %1707 = vmatprep.subr.mxu0 0.0
  %1708 = vmatpush1.msra.mxu0 0.0
  %1709 = vmatprep.subr.mxu0 0.0
  %1710 = vmatpush1.msra.mxu0 0.0
  %1711 = vmatprep.subr.mxu0 0.0
  %1712 = vmatpush1.msra.mxu0 0.0
  %1713 = vmatprep.subr.mxu0 0.0
  %1714 = vmatpush1.msra.mxu0 0.0
  %1715 = vmatprep.subr.mxu0 0.0
  %1716 = vmatpush1.msra.mxu0 0.0
  %1717 = vmatprep.subr.mxu0 0.0
  %1718 = vmatpush1.msra.mxu0 0.0
  %1719 = vmatprep.subr.mxu0 0.0
  %1720 = vmatpush1.msra.mxu0 0.0
  %1721 = vmatprep.subr.mxu0 0.0
  %1722 = vmatpush1.msra.mxu0 0.0
  %1723 = vmatprep.subr.mxu0 0.0
  %1724 = vmatpush1.msra.mxu0 0.0
  %1725 = vmatprep.subr.mxu0 0.0
  %1726 = vmatpush1.msra.mxu0 0.0
  %1727 = vmatprep.subr.mxu0 0.0
  %1728 = vmatpush1.msra.mxu0 0.0
  %1729 = vmatprep.subr.mxu0 0.0
  %1730 = vmatpush1.msra.mxu0 0.0
  %1731 = vmatprep.subr.mxu0 0.0
  %1732 = vmatpush1.msra.mxu0 0.0
  %1733 = vmatprep.mubr.f32.mxu0 0.0
  %1734 = vmatmul.mubr.f32.gmra.mrb[0].mxu0 %v1576
  %v1735 = vpop.f32.mrb[0].mxu0
  %v1736 = vadd.f32 %v1667, %v1735
  %v1737 = vpop.f32.mrb[0].mxu0
  %1738 = vmatprep.mubr.f32.mxu0 0.0
  %1739 = vmatmul.mubr.f32.gmra.mrb[0].mxu0 %v1579
  %v1740 = vpop.f32.mrb[0].mxu0
  %v1741 = vadd.f32 %v1667, %v1740
  %v1742 = vpop.f32.mrb[0].mxu0
  %1743 = vdwg.mxu0
  %1744 = vmatprep.subr.mxu0 0.0
  %1745 = vmatpush1.msra.mxu0 %v1648
  %1746 = vmatprep.subr.mxu0 0.0
  %1747 = vmatpush1.msra.mxu0 %v1653
  %1748 = vmatprep.subr.mxu0 0.0
  %1749 = vmatpush1.msra.mxu0 0.0
  %1750 = vmatprep.subr.mxu0 0.0
  %1751 = vmatpush1.msra.mxu0 0.0
  %1752 = vmatprep.subr.mxu0 0.0
  %1753 = vmatpush1.msra.mxu0 0.0
  %1754 = vmatprep.subr.mxu0 0.0
  %1755 = vmatpush1.msra.mxu0 0.0
  %1756 = vmatprep.subr.mxu0 0.0
  %1757 = vmatpush1.msra.mxu0 0.0
  %1758 = vmatprep.subr.mxu0 0.0
  %1759 = vmatpush1.msra.mxu0 0.0
  %1760 = vmatprep.subr.mxu0 0.0
  %1761 = vmatpush1.msra.mxu0 0.0
  %1762 = vmatprep.subr.mxu0 0.0
  %1763 = vmatpush1.msra.mxu0 0.0
  %1764 = vmatprep.subr.mxu0 0.0
  %1765 = vmatpush1.msra.mxu0 0.0
  %1766 = vmatprep.subr.mxu0 0.0
  %1767 = vmatpush1.msra.mxu0 0.0
  %1768 = vmatprep.subr.mxu0 0.0
  %1769 = vmatpush1.msra.mxu0 0.0
  %1770 = vmatprep.subr.mxu0 0.0
  %1771 = vmatpush1.msra.mxu0 0.0
  %1772 = vmatprep.subr.mxu0 0.0
  %1773 = vmatpush1.msra.mxu0 0.0
  %1774 = vmatprep.subr.mxu0 0.0
  %1775 = vmatpush1.msra.mxu0 0.0
  %1776 = vmatprep.subr.mxu0 0.0
  %1777 = vmatpush1.msra.mxu0 0.0
  %1778 = vmatprep.subr.mxu0 0.0
  %1779 = vmatpush1.msra.mxu0 0.0
  %1780 = vmatprep.subr.mxu0 0.0
  %1781 = vmatpush1.msra.mxu0 0.0
  %1782 = vmatprep.subr.mxu0 0.0
  %1783 = vmatpush1.msra.mxu0 0.0
  %1784 = vmatprep.subr.mxu0 0.0
  %1785 = vmatpush1.msra.mxu0 0.0
  %1786 = vmatprep.subr.mxu0 0.0
  %1787 = vmatpush1.msra.mxu0 0.0
  %1788 = vmatprep.subr.mxu0 0.0
  %1789 = vmatpush1.msra.mxu0 0.0
  %1790 = vmatprep.subr.mxu0 0.0
  %1791 = vmatpush1.msra.mxu0 0.0
  %1792 = vmatprep.subr.mxu0 0.0
  %1793 = vmatpush1.msra.mxu0 0.0
  %1794 = vmatprep.subr.mxu0 0.0
  %1795 = vmatpush1.msra.mxu0 0.0
  %1796 = vmatprep.subr.mxu0 0.0
  %1797 = vmatpush1.msra.mxu0 0.0
  %1798 = vmatprep.subr.mxu0 0.0
  %1799 = vmatpush1.msra.mxu0 0.0
  %1800 = vmatprep.subr.mxu0 0.0
  %1801 = vmatpush1.msra.mxu0 0.0
  %1802 = vmatprep.subr.mxu0 0.0
  %1803 = vmatpush1.msra.mxu0 0.0
  %1804 = vmatprep.subr.mxu0 0.0
  %1805 = vmatpush1.msra.mxu0 0.0
  %1806 = vmatprep.subr.mxu0 0.0
  %1807 = vmatpush1.msra.mxu0 0.0
  %1808 = vmatprep.mubr.f32.mxu0 0.0
  %1809 = vmatmul.mubr.f32.gmra.mrb[0].mxu0 %v285
  %v1810 = vpop.f32.mrb[0].mxu0
  %v1811 = vadd.f32 0.0, %v1810
  %v1812 = vpop.f32.mrb[0].mxu0
  %1813 = vmatprep.mubr.f32.mxu0 0.0
  %1814 = vmatmul.mubr.f32.gmra.mrb[0].mxu0 %v288
  %v1815 = vpop.f32.mrb[0].mxu0
  %v1816 = vadd.f32 0.0, %v1815
  %v1817 = vpop.f32.mrb[0].mxu0
  %1818 = vdwg.mxu0
  %v1819 = vmul.f32 %v1811, %v90
  %v1820 = vmul.f32 %v1816, %v92
  %v1821 = vmul.f32 %v1648, %v1648
  %v1822 = vmul.f32 %v1653, %v1653
  %1823 = vmatprep.subr.mxu0 0.0
  %1824 = vmatpush1.msra.mxu0 %v1821
  %1825 = vmatprep.subr.mxu0 0.0
  %1826 = vmatpush1.msra.mxu0 %v1822
  %1827 = vmatprep.subr.mxu0 0.0
  %1828 = vmatpush1.msra.mxu0 0.0
  %1829 = vmatprep.subr.mxu0 0.0
  %1830 = vmatpush1.msra.mxu0 0.0
  %1831 = vmatprep.subr.mxu0 0.0
  %1832 = vmatpush1.msra.mxu0 0.0
  %1833 = vmatprep.subr.mxu0 0.0
  %1834 = vmatpush1.msra.mxu0 0.0
  %1835 = vmatprep.subr.mxu0 0.0
  %1836 = vmatpush1.msra.mxu0 0.0
  %1837 = vmatprep.subr.mxu0 0.0
  %1838 = vmatpush1.msra.mxu0 0.0
  %1839 = vmatprep.subr.mxu0 0.0
  %1840 = vmatpush1.msra.mxu0 0.0
  %1841 = vmatprep.subr.mxu0 0.0
  %1842 = vmatpush1.msra.mxu0 0.0
  %1843 = vmatprep.subr.mxu0 0.0
  %1844 = vmatpush1.msra.mxu0 0.0
  %1845 = vmatprep.subr.mxu0 0.0
  %1846 = vmatpush1.msra.mxu0 0.0
  %1847 = vmatprep.subr.mxu0 0.0
  %1848 = vmatpush1.msra.mxu0 0.0
  %1849 = vmatprep.subr.mxu0 0.0
  %1850 = vmatpush1.msra.mxu0 0.0
  %1851 = vmatprep.subr.mxu0 0.0
  %1852 = vmatpush1.msra.mxu0 0.0
  %1853 = vmatprep.subr.mxu0 0.0
  %1854 = vmatpush1.msra.mxu0 0.0
  %1855 = vmatprep.subr.mxu0 0.0
  %1856 = vmatpush1.msra.mxu0 0.0
  %1857 = vmatprep.subr.mxu0 0.0
  %1858 = vmatpush1.msra.mxu0 0.0
  %1859 = vmatprep.subr.mxu0 0.0
  %1860 = vmatpush1.msra.mxu0 0.0
  %1861 = vmatprep.subr.mxu0 0.0
  %1862 = vmatpush1.msra.mxu0 0.0
  %1863 = vmatprep.subr.mxu0 0.0
  %1864 = vmatpush1.msra.mxu0 0.0
  %1865 = vmatprep.subr.mxu0 0.0
  %1866 = vmatpush1.msra.mxu0 0.0
  %1867 = vmatprep.subr.mxu0 0.0
  %1868 = vmatpush1.msra.mxu0 0.0
  %1869 = vmatprep.subr.mxu0 0.0
  %1870 = vmatpush1.msra.mxu0 0.0
  %1871 = vmatprep.subr.mxu0 0.0
  %1872 = vmatpush1.msra.mxu0 0.0
  %1873 = vmatprep.subr.mxu0 0.0
  %1874 = vmatpush1.msra.mxu0 0.0
  %1875 = vmatprep.subr.mxu0 0.0
  %1876 = vmatpush1.msra.mxu0 0.0
  %1877 = vmatprep.subr.mxu0 0.0
  %1878 = vmatpush1.msra.mxu0 0.0
  %1879 = vmatprep.subr.mxu0 0.0
  %1880 = vmatpush1.msra.mxu0 0.0
  %1881 = vmatprep.subr.mxu0 0.0
  %1882 = vmatpush1.msra.mxu0 0.0
  %1883 = vmatprep.subr.mxu0 0.0
  %1884 = vmatpush1.msra.mxu0 0.0
  %1885 = vmatprep.subr.mxu0 0.0
  %1886 = vmatpush1.msra.mxu0 0.0
  %1887 = vmatprep.mubr.f32.mxu0 0.0
  %1888 = vmatmul.mubr.f32.gmra.mrb[0].mxu0 %v285
  %v1889 = vpop.f32.mrb[0].mxu0
  %v1890 = vadd.f32 0.0, %v1889
  %v1891 = vpop.f32.mrb[0].mxu0
  %1892 = vmatprep.mubr.f32.mxu0 0.0
  %1893 = vmatmul.mubr.f32.gmra.mrb[0].mxu0 %v288
  %v1894 = vpop.f32.mrb[0].mxu0
  %v1895 = vadd.f32 0.0, %v1894
  %v1896 = vpop.f32.mrb[0].mxu0
  %1897 = vdwg.mxu0
  %v1898 = vmul.f32 %v1890, %v90
  %v1899 = vmul.f32 %v1895, %v92
  %v1900 = vmul.f32 %v1819, %v1819
  %v1901 = vmul.f32 %v1820, %v1820
  %v1902 = vsub.f32 %v1898, %v1900
  %v1903 = vsub.f32 %v1899, %v1901
  %v1904 = vmax.f32 %v1902, 0.0
  %v1905 = vmax.f32 %v1903, 0.0
  %v1906 = vadd.f32 %v1904, 1e-05
  %v1907 = vadd.f32 %v1905, 1e-05
  %v1908 = vrsqrt.pop %v1906
  %v1909 = vmul.f32 %v1906, %v1908
  %vm1910 = vcmp.eq.f32.partialorder %v1906, inf
  %v1911 = vsel %vm1910, %v1906, %v1909
  %vm1912 = vcmp.eq.f32.partialorder %v1906, 0.0
  %v1913 = vand.u32 %v1906, 2147483648
  %v1914 = vsel %vm1912, %v1913, %v1911
  %v1915 = vrsqrt.pop %v1907
  %v1916 = vmul.f32 %v1907, %v1915
  %vm1917 = vcmp.eq.f32.partialorder %v1907, inf
  %v1918 = vsel %vm1917, %v1907, %v1916
  %vm1919 = vcmp.eq.f32.partialorder %v1907, 0.0
  %v1920 = vand.u32 %v1907, 2147483648
  %v1921 = vsel %vm1919, %v1920, %v1918
  %v1923 = vcombine.high %v1648, %v1648
  %v1925 = vunpack.c.l.s4 1966171168
  %v1926 = vunpack.c.0.s8 %v1925
  %v1927 = vlaneseq
  %v1928 = vshrl.u32 %v1927, 7
  %v1929 = vsub.s32 %v1926, %v1928
  %v1930 = vrot.slane %v1648, %v1929
  %v1932 = vunpack.c.l.s4 1966171168
  %v1933 = vunpack.c.0.s8 %v1932
  %v1934 = vlaneseq
  %v1935 = vshrl.u32 %v1934, 7
  %v1936 = vsub.s32 %v1933, %v1935
  %v1937 = vrot.slane %v1923, %v1936
  %v1938 = vcombine.high %v1930, %v1930
  %v1939 = vcombine.high %v1937, %v1937
  %v1941 = vunpack.c.l.s4 1966171168
  %v1942 = vunpack.c.0.s8 %v1941
  %v1943 = vlaneseq
  %v1944 = vshrl.u32 %v1943, 7
  %v1945 = vsub.s32 %v1942, %v1944
  %v1946 = vrot.slane %v1930, %v1945
  %v1948 = vunpack.c.l.s4 1966171168
  %v1949 = vunpack.c.0.s8 %v1948
  %v1950 = vlaneseq
  %v1951 = vshrl.u32 %v1950, 7
  %v1952 = vsub.s32 %v1949, %v1951
  %v1953 = vrot.slane %v1937, %v1952
  %v1955 = vunpack.c.l.s4 1966171168
  %v1956 = vunpack.c.0.s8 %v1955
  %v1957 = vlaneseq
  %v1958 = vshrl.u32 %v1957, 7
  %v1959 = vsub.s32 %v1956, %v1958
  %v1960 = vrot.slane %v1938, %v1959
  %v1962 = vunpack.c.l.s4 1966171168
  %v1963 = vunpack.c.0.s8 %v1962
  %v1964 = vlaneseq
  %v1965 = vshrl.u32 %v1964, 7
  %v1966 = vsub.s32 %v1963, %v1965
  %v1967 = vrot.slane %v1939, %v1966
  %v1968 = vcombine.high %v1946, %v1946
  %v1969 = vcombine.high %v1953, %v1953
  %v1970 = vcombine.high %v1960, %v1960
  %v1971 = vcombine.high %v1967, %v1967
  %v1972 = vlaneseq
  %v1973 = vshrl.u32 %v1972, 7
  %v1974 = vsub.s32 0, %v1973
  %v1975 = vrot.slane %v1946, %v1974
  %v1976 = vlaneseq
  %v1977 = vshrl.u32 %v1976, 7
  %v1978 = vsub.s32 0, %v1977
  %v1979 = vrot.slane %v1960, %v1978
  %v1980 = vlaneseq
  %v1981 = vshrl.u32 %v1980, 7
  %v1982 = vsub.s32 0, %v1981
  %v1983 = vrot.slane %v1968, %v1982
  %v1984 = vlaneseq
  %v1985 = vshrl.u32 %v1984, 7
  %v1986 = vsub.s32 0, %v1985
  %v1987 = vrot.slane %v1970, %v1986
  %v1988 = vlaneseq
  %v1989 = vshrl.u32 %v1988, 7
  %v1990 = vsub.s32 0, %v1989
  %v1991 = vrot.slane %v1953, %v1990
  %v1992 = vlaneseq
  %v1993 = vshrl.u32 %v1992, 7
  %v1994 = vsub.s32 0, %v1993
  %v1995 = vrot.slane %v1967, %v1994
  %v1996 = vlaneseq
  %v1997 = vshrl.u32 %v1996, 7
  %v1998 = vsub.s32 0, %v1997
  %v1999 = vrot.slane %v1969, %v1998
  %v2000 = vlaneseq
  %v2001 = vshrl.u32 %v2000, 7
  %v2002 = vsub.s32 0, %v2001
  %v2003 = vrot.slane %v1971, %v2002
  %v2012 = vsel %vm638, %v1975, -1e+30
  %v2013 = vsel %vm639, %v1975, -1e+30
  %v2014 = vsel %vm640, %v1979, -1e+30
  %v2015 = vsel %vm641, %v1979, -1e+30
  %v2016 = vsel %vm642, %v1983, -1e+30
  %v2017 = vsel %vm643, %v1983, -1e+30
  %v2018 = vsel %vm644, %v1987, -1e+30
  %v2019 = vsel %vm645, %v1987, -1e+30
  %v2020 = vsel %vm646, %v1991, -1e+30
  %v2021 = vsel %vm647, %v1991, -1e+30
  %v2022 = vsel %vm648, %v1995, -1e+30
  %v2023 = vsel %vm649, %v1995, -1e+30
  %v2024 = vsel %vm650, %v1999, -1e+30
  %v2025 = vsel %vm651, %v1999, -1e+30
  %v2026 = vsel %vm652, %v2003, -1e+30
  %v2027 = vsel %vm653, %v2003, -1e+30
  %v2028 = vsel %vm116, %v2012, -inf
  %v2029 = vsel %vm116, %v2014, -inf
  %v2030 = vsel %vm116, %v2016, -inf
  %v2031 = vmax.f32 %v2028, %v2030
  %v2032 = vsel %vm116, %v2018, -inf
  %v2033 = vmax.f32 %v2029, %v2032
  %v2034 = vsel %vm116, %v2020, -inf
  %v2035 = vmax.f32 %v2031, %v2034
  %v2036 = vsel %vm116, %v2022, -inf
  %v2037 = vmax.f32 %v2033, %v2036
  %v2038 = vsel %vm116, %v2024, -inf
  %v2039 = vmax.f32 %v2035, %v2038
  %v2040 = vsel %vm116, %v2026, -inf
  %v2041 = vmax.f32 %v2037, %v2040
  %v2042 = vmax.f32 %v2039, %v2041
  %v2043 = vsel %vm116, %v2013, -inf
  %v2044 = vsel %vm116, %v2015, -inf
  %v2045 = vsel %vm116, %v2017, -inf
  %v2046 = vmax.f32 %v2043, %v2045
  %v2047 = vsel %vm116, %v2019, -inf
  %v2048 = vmax.f32 %v2044, %v2047
  %v2049 = vsel %vm116, %v2021, -inf
  %v2050 = vmax.f32 %v2046, %v2049
  %v2051 = vsel %vm116, %v2023, -inf
  %v2052 = vmax.f32 %v2048, %v2051
  %v2053 = vsel %vm116, %v2025, -inf
  %v2054 = vmax.f32 %v2050, %v2053
  %v2055 = vsel %vm116, %v2027, -inf
  %v2056 = vmax.f32 %v2052, %v2055
  %v2057 = vmax.f32 %v2054, %v2056
  %v2058 = vmax.f32 %v2042, -1e+30
  %v2059 = vmax.f32 %v2057, -1e+30
  %v2060 = vsel %vm638, %v1975, 1e+30
  %v2061 = vsel %vm639, %v1975, 1e+30
  %v2062 = vsel %vm640, %v1979, 1e+30
  %v2063 = vsel %vm641, %v1979, 1e+30
  %v2064 = vsel %vm642, %v1983, 1e+30
  %v2065 = vsel %vm643, %v1983, 1e+30
  %v2066 = vsel %vm644, %v1987, 1e+30
  %v2067 = vsel %vm645, %v1987, 1e+30
  %v2068 = vsel %vm646, %v1991, 1e+30
  %v2069 = vsel %vm647, %v1991, 1e+30
  %v2070 = vsel %vm648, %v1995, 1e+30
  %v2071 = vsel %vm649, %v1995, 1e+30
  %v2072 = vsel %vm650, %v1999, 1e+30
  %v2073 = vsel %vm651, %v1999, 1e+30
  %v2074 = vsel %vm652, %v2003, 1e+30
  %v2075 = vsel %vm653, %v2003, 1e+30
  %v2076 = vsel %vm116, %v2060, inf
  %v2077 = vsel %vm116, %v2062, inf
  %v2078 = vsel %vm116, %v2064, inf
  %v2079 = vmin.f32 %v2076, %v2078
  %v2080 = vsel %vm116, %v2066, inf
  %v2081 = vmin.f32 %v2077, %v2080
  %v2082 = vsel %vm116, %v2068, inf
  %v2083 = vmin.f32 %v2079, %v2082
  %v2084 = vsel %vm116, %v2070, inf
  %v2085 = vmin.f32 %v2081, %v2084
  %v2086 = vsel %vm116, %v2072, inf
  %v2087 = vmin.f32 %v2083, %v2086
  %v2088 = vsel %vm116, %v2074, inf
  %v2089 = vmin.f32 %v2085, %v2088
  %v2090 = vmin.f32 %v2087, %v2089
  %v2091 = vsel %vm116, %v2061, inf
  %v2092 = vsel %vm116, %v2063, inf
  %v2093 = vsel %vm116, %v2065, inf
  %v2094 = vmin.f32 %v2091, %v2093
  %v2095 = vsel %vm116, %v2067, inf
  %v2096 = vmin.f32 %v2092, %v2095
  %v2097 = vsel %vm116, %v2069, inf
  %v2098 = vmin.f32 %v2094, %v2097
  %v2099 = vsel %vm116, %v2071, inf
  %v2100 = vmin.f32 %v2096, %v2099
  %v2101 = vsel %vm116, %v2073, inf
  %v2102 = vmin.f32 %v2098, %v2101
  %v2103 = vsel %vm116, %v2075, inf
  %v2104 = vmin.f32 %v2100, %v2103
  %v2105 = vmin.f32 %v2102, %v2104
  %v2106 = vmin.f32 %v2090, 1e+30
  %v2107 = vmin.f32 %v2105, 1e+30
  %v2109 = vcombine.high %v1653, %v1653
  %v2111 = vunpack.c.l.s4 1966171168
  %v2112 = vunpack.c.0.s8 %v2111
  %v2113 = vlaneseq
  %v2114 = vshrl.u32 %v2113, 7
  %v2115 = vsub.s32 %v2112, %v2114
  %v2116 = vrot.slane %v1653, %v2115
  %v2118 = vunpack.c.l.s4 1966171168
  %v2119 = vunpack.c.0.s8 %v2118
  %v2120 = vlaneseq
  %v2121 = vshrl.u32 %v2120, 7
  %v2122 = vsub.s32 %v2119, %v2121
  %v2123 = vrot.slane %v2109, %v2122
  %v2124 = vcombine.high %v2116, %v2116
  %v2125 = vcombine.high %v2123, %v2123
  %v2127 = vunpack.c.l.s4 1966171168
  %v2128 = vunpack.c.0.s8 %v2127
  %v2129 = vlaneseq
  %v2130 = vshrl.u32 %v2129, 7
  %v2131 = vsub.s32 %v2128, %v2130
  %v2132 = vrot.slane %v2116, %v2131
  %v2134 = vunpack.c.l.s4 1966171168
  %v2135 = vunpack.c.0.s8 %v2134
  %v2136 = vlaneseq
  %v2137 = vshrl.u32 %v2136, 7
  %v2138 = vsub.s32 %v2135, %v2137
  %v2139 = vrot.slane %v2123, %v2138
  %v2141 = vunpack.c.l.s4 1966171168
  %v2142 = vunpack.c.0.s8 %v2141
  %v2143 = vlaneseq
  %v2144 = vshrl.u32 %v2143, 7
  %v2145 = vsub.s32 %v2142, %v2144
  %v2146 = vrot.slane %v2124, %v2145
  %v2148 = vunpack.c.l.s4 1966171168
  %v2149 = vunpack.c.0.s8 %v2148
  %v2150 = vlaneseq
  %v2151 = vshrl.u32 %v2150, 7
  %v2152 = vsub.s32 %v2149, %v2151
  %v2153 = vrot.slane %v2125, %v2152
  %v2154 = vcombine.high %v2132, %v2132
  %v2155 = vcombine.high %v2139, %v2139
  %v2156 = vcombine.high %v2146, %v2146
  %v2157 = vcombine.high %v2153, %v2153
  %v2158 = vlaneseq
  %v2159 = vshrl.u32 %v2158, 7
  %v2160 = vsub.s32 0, %v2159
  %v2161 = vrot.slane %v2132, %v2160
  %v2162 = vlaneseq
  %v2163 = vshrl.u32 %v2162, 7
  %v2164 = vsub.s32 0, %v2163
  %v2165 = vrot.slane %v2146, %v2164
  %v2166 = vlaneseq
  %v2167 = vshrl.u32 %v2166, 7
  %v2168 = vsub.s32 0, %v2167
  %v2169 = vrot.slane %v2154, %v2168
  %v2170 = vlaneseq
  %v2171 = vshrl.u32 %v2170, 7
  %v2172 = vsub.s32 0, %v2171
  %v2173 = vrot.slane %v2156, %v2172
  %v2174 = vlaneseq
  %v2175 = vshrl.u32 %v2174, 7
  %v2176 = vsub.s32 0, %v2175
  %v2177 = vrot.slane %v2139, %v2176
  %v2178 = vlaneseq
  %v2179 = vshrl.u32 %v2178, 7
  %v2180 = vsub.s32 0, %v2179
  %v2181 = vrot.slane %v2153, %v2180
  %v2182 = vlaneseq
  %v2183 = vshrl.u32 %v2182, 7
  %v2184 = vsub.s32 0, %v2183
  %v2185 = vrot.slane %v2155, %v2184
  %v2186 = vlaneseq
  %v2187 = vshrl.u32 %v2186, 7
  %v2188 = vsub.s32 0, %v2187
  %v2189 = vrot.slane %v2157, %v2188
  %v2198 = vsel %vm960, %v2161, -1e+30
  %v2199 = vsel %vm961, %v2161, -1e+30
  %v2200 = vsel %vm962, %v2165, -1e+30
  %v2201 = vsel %vm963, %v2165, -1e+30
  %v2202 = vsel %vm964, %v2169, -1e+30
  %v2203 = vsel %vm965, %v2169, -1e+30
  %v2204 = vsel %vm966, %v2173, -1e+30
  %v2205 = vsel %vm967, %v2173, -1e+30
  %v2206 = vsel %vm968, %v2177, -1e+30
  %v2207 = vsel %vm969, %v2177, -1e+30
  %v2208 = vsel %vm970, %v2181, -1e+30
  %v2209 = vsel %vm971, %v2181, -1e+30
  %v2210 = vsel %vm972, %v2185, -1e+30
  %v2211 = vsel %vm973, %v2185, -1e+30
  %v2212 = vsel %vm974, %v2189, -1e+30
  %v2213 = vsel %vm975, %v2189, -1e+30
  %v2214 = vsel %vm116, %v2198, -inf
  %v2215 = vsel %vm116, %v2200, -inf
  %v2216 = vsel %vm116, %v2202, -inf
  %v2217 = vmax.f32 %v2214, %v2216
  %v2218 = vsel %vm116, %v2204, -inf
  %v2219 = vmax.f32 %v2215, %v2218
  %v2220 = vsel %vm116, %v2206, -inf
  %v2221 = vmax.f32 %v2217, %v2220
  %v2222 = vsel %vm116, %v2208, -inf
  %v2223 = vmax.f32 %v2219, %v2222
  %v2224 = vsel %vm116, %v2210, -inf
  %v2225 = vmax.f32 %v2221, %v2224
  %v2226 = vsel %vm116, %v2212, -inf
  %v2227 = vmax.f32 %v2223, %v2226
  %v2228 = vmax.f32 %v2225, %v2227
  %v2229 = vsel %vm116, %v2199, -inf
  %v2230 = vsel %vm116, %v2201, -inf
  %v2231 = vsel %vm116, %v2203, -inf
  %v2232 = vmax.f32 %v2229, %v2231
  %v2233 = vsel %vm116, %v2205, -inf
  %v2234 = vmax.f32 %v2230, %v2233
  %v2235 = vsel %vm116, %v2207, -inf
  %v2236 = vmax.f32 %v2232, %v2235
  %v2237 = vsel %vm116, %v2209, -inf
  %v2238 = vmax.f32 %v2234, %v2237
  %v2239 = vsel %vm116, %v2211, -inf
  %v2240 = vmax.f32 %v2236, %v2239
  %v2241 = vsel %vm116, %v2213, -inf
  %v2242 = vmax.f32 %v2238, %v2241
  %v2243 = vmax.f32 %v2240, %v2242
  %v2244 = vmax.f32 %v2058, %v2228
  %v2245 = vmax.f32 %v2059, %v2243
  %v2246 = vsel %vm960, %v2161, 1e+30
  %v2247 = vsel %vm961, %v2161, 1e+30
  %v2248 = vsel %vm962, %v2165, 1e+30
  %v2249 = vsel %vm963, %v2165, 1e+30
  %v2250 = vsel %vm964, %v2169, 1e+30
  %v2251 = vsel %vm965, %v2169, 1e+30
  %v2252 = vsel %vm966, %v2173, 1e+30
  %v2253 = vsel %vm967, %v2173, 1e+30
  %v2254 = vsel %vm968, %v2177, 1e+30
  %v2255 = vsel %vm969, %v2177, 1e+30
  %v2256 = vsel %vm970, %v2181, 1e+30
  %v2257 = vsel %vm971, %v2181, 1e+30
  %v2258 = vsel %vm972, %v2185, 1e+30
  %v2259 = vsel %vm973, %v2185, 1e+30
  %v2260 = vsel %vm974, %v2189, 1e+30
  %v2261 = vsel %vm975, %v2189, 1e+30
  %v2262 = vsel %vm116, %v2246, inf
  %v2263 = vsel %vm116, %v2248, inf
  %v2264 = vsel %vm116, %v2250, inf
  %v2265 = vmin.f32 %v2262, %v2264
  %v2266 = vsel %vm116, %v2252, inf
  %v2267 = vmin.f32 %v2263, %v2266
  %v2268 = vsel %vm116, %v2254, inf
  %v2269 = vmin.f32 %v2265, %v2268
  %v2270 = vsel %vm116, %v2256, inf
  %v2271 = vmin.f32 %v2267, %v2270
  %v2272 = vsel %vm116, %v2258, inf
  %v2273 = vmin.f32 %v2269, %v2272
  %v2274 = vsel %vm116, %v2260, inf
  %v2275 = vmin.f32 %v2271, %v2274
  %v2276 = vmin.f32 %v2273, %v2275
  %v2277 = vsel %vm116, %v2247, inf
  %v2278 = vsel %vm116, %v2249, inf
  %v2279 = vsel %vm116, %v2251, inf
  %v2280 = vmin.f32 %v2277, %v2279
  %v2281 = vsel %vm116, %v2253, inf
  %v2282 = vmin.f32 %v2278, %v2281
  %v2283 = vsel %vm116, %v2255, inf
  %v2284 = vmin.f32 %v2280, %v2283
  %v2285 = vsel %vm116, %v2257, inf
  %v2286 = vmin.f32 %v2282, %v2285
  %v2287 = vsel %vm116, %v2259, inf
  %v2288 = vmin.f32 %v2284, %v2287
  %v2289 = vsel %vm116, %v2261, inf
  %v2290 = vmin.f32 %v2286, %v2289
  %v2291 = vmin.f32 %v2288, %v2290
  %v2292 = vmin.f32 %v2106, %v2276
  %v2293 = vmin.f32 %v2107, %v2291
  %v2294 = vadd.f32 %v1819, %v1736
  %v2295 = vadd.f32 %v1820, %v1741
  %v2296 = vsel %vm1116, %v2294, 0.0
  %v2297 = vsel %vm1117, %v2295, 0.0
  %v2298 = vadd.f32 %v2244, %v1736
  %v2299 = vadd.f32 %v2245, %v1741
  %v2300 = vsel %vm1116, %v2298, 0.0
  %v2301 = vsel %vm1117, %v2299, 0.0
  %v2302 = vadd.f32 %v2292, %v1736
  %v2303 = vadd.f32 %v2293, %v1741
  %v2304 = vsel %vm1116, %v2302, 0.0
  %v2305 = vsel %vm1117, %v2303, 0.0
  %v2306 = vsel %vm1116, %v1914, 0.0
  %v2307 = vsel %vm1117, %v1921, 0.0
  %2310 = vrot.lane.b32.xlu0 %v2300, 32
  %v2311 = vpop.permute.xlu0 %2310
  %2312 = vrot.lane.b32.xlu0 %v2301, 32
  %v2313 = vpop.permute.xlu0 %2312
  %2318 = vrot.lane.b32.xlu0 %v2304, 64
  %v2319 = vpop.permute.xlu0 %2318
  %2320 = vrot.lane.b32.xlu0 %v2305, 64
  %v2321 = vpop.permute.xlu0 %2320
  %2326 = vrot.lane.b32.xlu0 %v2306, 96
  %v2327 = vpop.permute.xlu0 %2326
  %2328 = vrot.lane.b32.xlu0 %v2307, 96
  %v2329 = vpop.permute.xlu0 %2328
  %v2332 = vsel %vm116, %v2296, %v2311
  %v2333 = vsel %vm116, %v2297, %v2313
  %v2334 = vsel %vm1156, %v2332, %v2319
  %v2335 = vsel %vm1156, %v2333, %v2321
  %v2336 = vsel %vm1159, %v2334, %v2327
  %v2337 = vsel %vm1159, %v2335, %v2329
  %v2338 = vmul.f32 %v103, %v2336
  %v2339 = vmul.f32 %v104, %v2337
  %v2340 = vmul.f32 %v110, %v2336
  %v2341 = vmul.f32 %v111, %v2337
  %2344 = vrot.lane.b32.xlu0 %v2336, 32
  %v2345 = vpop.permute.xlu0 %2344
  %2346 = vrot.lane.b32.xlu0 %v2337, 32
  %v2347 = vpop.permute.xlu0 %2346
  %2352 = vrot.lane.b32.xlu0 %v2338, 32
  %v2353 = vpop.permute.xlu0 %2352
  %2354 = vrot.lane.b32.xlu0 %v2339, 32
  %v2355 = vpop.permute.xlu0 %2354
  %2360 = vrot.lane.b32.xlu0 %v2340, 32
  %v2361 = vpop.permute.xlu0 %2360
  %2362 = vrot.lane.b32.xlu0 %v2341, 32
  %v2363 = vpop.permute.xlu0 %2362
  %v2366 = vsel %vm116, %v1568, %v2345
  %v2367 = vsel %vm116, %v1569, %v2347
  %v2368 = vsel %vm116, %v2345, %v2353
  %v2369 = vsel %vm116, %v2347, %v2355
  %v2370 = vsel %vm116, %v2353, %v2361
  %v2371 = vsel %vm116, %v2355, %v2363
  %s2372 = scalar_lea.vmem %s9, 416
  %v2373 = vld [vmem:[%s2372] sm:$0xff]
  %v2374 = vld [vmem:[%s2372 + $0x8] sm:$0xff]
  %v2375 = vld [vmem:[%s2372 + $0x10] sm:$0xff]
  %v2376 = vld [vmem:[%s2372 + $0x18] sm:$0xff]
  %v2377 = vld [vmem:[%s2372 + $0x20] sm:$0xff]
  %v2378 = vld [vmem:[%s2372 + $0x28] sm:$0xff]
  %v2379 = vld [vmem:[%s2372 + $0x30] sm:$0xff]
  %v2380 = vld [vmem:[%s2372 + $0x38] sm:$0xff]
  %v2381 = vld [vmem:[%s2372 + $0x40] sm:$0xff]
  %v2382 = vld [vmem:[%s2372 + $0x48] sm:$0xff]
  %v2383 = vld [vmem:[%s2372 + $0x50] sm:$0xff]
  %v2384 = vld [vmem:[%s2372 + $0x58] sm:$0xff]
  %v2385 = vld [vmem:[%s2372 + $0x60] sm:$0xff]
  %v2386 = vld [vmem:[%s2372 + $0x68] sm:$0xff]
  %v2387 = vld [vmem:[%s2372 + $0x70] sm:$0xff]
  %v2388 = vld [vmem:[%s2372 + $0x78] sm:$0xff]
  %v2389 = vld [vmem:[%s2372 + $0x80] sm:$0xff]
  %v2390 = vld [vmem:[%s2372 + $0x88] sm:$0xff]
  %v2391 = vld [vmem:[%s2372 + $0x90] sm:$0xff]
  %v2392 = vld [vmem:[%s2372 + $0x98] sm:$0xff]
  %v2393 = vld [vmem:[%s2372 + $0xa0] sm:$0xff]
  %v2394 = vld [vmem:[%s2372 + $0xa8] sm:$0xff]
  %v2395 = vld [vmem:[%s2372 + $0xb0] sm:$0xff]
  %v2396 = vld [vmem:[%s2372 + $0xb8] sm:$0xff]
  %v2397 = vld [vmem:[%s2372 + $0xc0] sm:$0xff]
  %v2398 = vld [vmem:[%s2372 + $0xc8] sm:$0xff]
  %v2399 = vld [vmem:[%s2372 + $0xd0] sm:$0xff]
  %v2400 = vld [vmem:[%s2372 + $0xd8] sm:$0xff]
  %v2401 = vld [vmem:[%s2372 + $0xe0] sm:$0xff]
  %v2402 = vld [vmem:[%s2372 + $0xe8] sm:$0xff]
  %v2403 = vld [vmem:[%s2372 + $0xf0] sm:$0xff]
  %v2404 = vld [vmem:[%s2372 + $0xf8] sm:$0xff]
  %v2405 = vld [vmem:[%s2372 + $0x100] sm:$0xff]
  %v2406 = vld [vmem:[%s2372 + $0x108] sm:$0xff]
  %v2407 = vld [vmem:[%s2372 + $0x110] sm:$0xff]
  %v2408 = vld [vmem:[%s2372 + $0x118] sm:$0xff]
  %v2409 = vld [vmem:[%s2372 + $0x120] sm:$0xff]
  %v2410 = vld [vmem:[%s2372 + $0x128] sm:$0xff]
  %v2411 = vld [vmem:[%s2372 + $0x130] sm:$0xff]
  %v2412 = vld [vmem:[%s2372 + $0x138] sm:$0xff]
  %v2413 = vld [vmem:[%s2372 + $0x140] sm:$0xff]
  %v2414 = vld [vmem:[%s2372 + $0x148] sm:$0xff]
  %v2415 = vld [vmem:[%s2372 + $0x150] sm:$0xff]
  %v2416 = vld [vmem:[%s2372 + $0x158] sm:$0xff]
  %v2417 = vld [vmem:[%s2372 + $0x160] sm:$0xff]
  %v2418 = vld [vmem:[%s2372 + $0x168] sm:$0xff]
  %v2419 = vld [vmem:[%s2372 + $0x170] sm:$0xff]
  %v2420 = vld [vmem:[%s2372 + $0x178] sm:$0xff]
  %v2421 = vld [vmem:[%s2372 + $0x180] sm:$0xff]
  %v2422 = vld [vmem:[%s2372 + $0x188] sm:$0xff]
  %v2423 = vld [vmem:[%s2372 + $0x190] sm:$0xff]
  %v2424 = vld [vmem:[%s2372 + $0x198] sm:$0xff]
  %s2425 = scalar_lea.vmem %s10, 1
  %v2426 = vld [vmem:[%s2425] sm:$0x1]
  %v2428 = vlaneseq
  %v2429 = vshrl.u32 %v2428, 7
  %v2430 = vsub.s32 0, %v2429
  %v2431 = vrot.slane %v2426, %v2430
  %v2433 = vsel %vm116, %v2361, 0
  %v2435 = vsel %vm116, %v2363, 0
  %2437 = vmatprep.subr.mxu0 0.0
  %2438 = vmatpush1.msra.mxu0 %v2373
  %2439 = vmatprep.subr.mxu0 0.0
  %2440 = vmatpush1.msra.mxu0 %v2374
  %2441 = vmatprep.subr.mxu0 0.0
  %2442 = vmatpush1.msra.mxu0 %v2375
  %2443 = vmatprep.subr.mxu0 0.0
  %2444 = vmatpush1.msra.mxu0 %v2376
  %2445 = vmatprep.subr.mxu0 0.0
  %2446 = vmatpush1.msra.mxu0 %v2377
  %2447 = vmatprep.subr.mxu0 0.0
  %2448 = vmatpush1.msra.mxu0 %v2378
  %2449 = vmatprep.subr.mxu0 0.0
  %2450 = vmatpush1.msra.mxu0 %v2379
  %2451 = vmatprep.subr.mxu0 0.0
  %2452 = vmatpush1.msra.mxu0 %v2380
  %2453 = vmatprep.subr.mxu0 0.0
  %2454 = vmatpush1.msra.mxu0 %v2381
  %2455 = vmatprep.subr.mxu0 0.0
  %2456 = vmatpush1.msra.mxu0 %v2382
  %2457 = vmatprep.subr.mxu0 0.0
  %2458 = vmatpush1.msra.mxu0 %v2383
  %2459 = vmatprep.subr.mxu0 0.0
  %2460 = vmatpush1.msra.mxu0 %v2384
  %2461 = vmatprep.subr.mxu0 0.0
  %2462 = vmatpush1.msra.mxu0 %v2385
  %2463 = vmatprep.subr.mxu0 0.0
  %2464 = vmatpush1.msra.mxu0 %v2386
  %2465 = vmatprep.subr.mxu0 0.0
  %2466 = vmatpush1.msra.mxu0 %v2387
  %2467 = vmatprep.subr.mxu0 0.0
  %2468 = vmatpush1.msra.mxu0 %v2388
  %2469 = vmatprep.subr.mxu0 0.0
  %2470 = vmatpush1.msra.mxu0 %v2389
  %2471 = vmatprep.subr.mxu0 0.0
  %2472 = vmatpush1.msra.mxu0 %v2390
  %2473 = vmatprep.subr.mxu0 0.0
  %2474 = vmatpush1.msra.mxu0 %v2391
  %2475 = vmatprep.subr.mxu0 0.0
  %2476 = vmatpush1.msra.mxu0 %v2392
  %2477 = vmatprep.subr.mxu0 0.0
  %2478 = vmatpush1.msra.mxu0 %v2393
  %2479 = vmatprep.subr.mxu0 0.0
  %2480 = vmatpush1.msra.mxu0 %v2394
  %2481 = vmatprep.subr.mxu0 0.0
  %2482 = vmatpush1.msra.mxu0 %v2395
  %2483 = vmatprep.subr.mxu0 0.0
  %2484 = vmatpush1.msra.mxu0 %v2396
  %2485 = vmatprep.subr.mxu0 0.0
  %2486 = vmatpush1.msra.mxu0 %v2397
  %2487 = vmatprep.subr.mxu0 0.0
  %2488 = vmatpush1.msra.mxu0 %v2398
  %2489 = vmatprep.subr.mxu0 0.0
  %2490 = vmatpush1.msra.mxu0 %v2399
  %2491 = vmatprep.subr.mxu0 0.0
  %2492 = vmatpush1.msra.mxu0 %v2400
  %2493 = vmatprep.subr.mxu0 0.0
  %2494 = vmatpush1.msra.mxu0 %v2401
  %2495 = vmatprep.subr.mxu0 0.0
  %2496 = vmatpush1.msra.mxu0 %v2402
  %2497 = vmatprep.subr.mxu0 0.0
  %2498 = vmatpush1.msra.mxu0 %v2403
  %2499 = vmatprep.subr.mxu0 0.0
  %2500 = vmatpush1.msra.mxu0 %v2404
  %2501 = vmatprep.mubr.f32.mxu0 %v2368
  %2502 = vmatmul.mubr.f32.gmra.mrb[0].mxu0 %v2366
  %v2503 = vpop.f32.mrb[0].mxu0
  %v2504 = vadd.f32 %v2431, %v2503
  %v2505 = vpop.f32.mrb[0].mxu0
  %2506 = vmatprep.mubr.f32.mxu0 %v2369
  %2507 = vmatmul.mubr.f32.gmra.mrb[0].mxu0 %v2367
  %v2508 = vpop.f32.mrb[0].mxu0
  %v2509 = vadd.f32 %v2431, %v2508
  %v2510 = vpop.f32.mrb[0].mxu0
  %2511 = vdwg.mxu0
  %2512 = vmatprep.subr.mxu0 0.0
  %2513 = vmatpush1.msra.mxu0 %v2405
  %2514 = vmatprep.subr.mxu0 0.0
  %2515 = vmatpush1.msra.mxu0 %v2406
  %2516 = vmatprep.subr.mxu0 0.0
  %2517 = vmatpush1.msra.mxu0 %v2407
  %2518 = vmatprep.subr.mxu0 0.0
  %2519 = vmatpush1.msra.mxu0 %v2408
  %2520 = vmatprep.subr.mxu0 0.0
  %2521 = vmatpush1.msra.mxu0 %v2409
  %2522 = vmatprep.subr.mxu0 0.0
  %2523 = vmatpush1.msra.mxu0 %v2410
  %2524 = vmatprep.subr.mxu0 0.0
  %2525 = vmatpush1.msra.mxu0 %v2411
  %2526 = vmatprep.subr.mxu0 0.0
  %2527 = vmatpush1.msra.mxu0 %v2412
  %2528 = vmatprep.subr.mxu0 0.0
  %2529 = vmatpush1.msra.mxu0 %v2413
  %2530 = vmatprep.subr.mxu0 0.0
  %2531 = vmatpush1.msra.mxu0 %v2414
  %2532 = vmatprep.subr.mxu0 0.0
  %2533 = vmatpush1.msra.mxu0 %v2415
  %2534 = vmatprep.subr.mxu0 0.0
  %2535 = vmatpush1.msra.mxu0 %v2416
  %2536 = vmatprep.subr.mxu0 0.0
  %2537 = vmatpush1.msra.mxu0 %v2417
  %2538 = vmatprep.subr.mxu0 0.0
  %2539 = vmatpush1.msra.mxu0 %v2418
  %2540 = vmatprep.subr.mxu0 0.0
  %2541 = vmatpush1.msra.mxu0 %v2419
  %2542 = vmatprep.subr.mxu0 0.0
  %2543 = vmatpush1.msra.mxu0 %v2420
  %2544 = vmatprep.subr.mxu0 0.0
  %2545 = vmatpush1.msra.mxu0 %v2421
  %2546 = vmatprep.subr.mxu0 0.0
  %2547 = vmatpush1.msra.mxu0 %v2422
  %2548 = vmatprep.subr.mxu0 0.0
  %2549 = vmatpush1.msra.mxu0 %v2423
  %2550 = vmatprep.subr.mxu0 0.0
  %2551 = vmatpush1.msra.mxu0 %v2424
  %2552 = vmatprep.subr.mxu0 0.0
  %2553 = vmatpush1.msra.mxu0 0.0
  %2554 = vmatprep.subr.mxu0 0.0
  %2555 = vmatpush1.msra.mxu0 0.0
  %2556 = vmatprep.subr.mxu0 0.0
  %2557 = vmatpush1.msra.mxu0 0.0
  %2558 = vmatprep.subr.mxu0 0.0
  %2559 = vmatpush1.msra.mxu0 0.0
  %2560 = vmatprep.subr.mxu0 0.0
  %2561 = vmatpush1.msra.mxu0 0.0
  %2562 = vmatprep.subr.mxu0 0.0
  %2563 = vmatpush1.msra.mxu0 0.0
  %2564 = vmatprep.subr.mxu0 0.0
  %2565 = vmatpush1.msra.mxu0 0.0
  %2566 = vmatprep.subr.mxu0 0.0
  %2567 = vmatpush1.msra.mxu0 0.0
  %2568 = vmatprep.subr.mxu0 0.0
  %2569 = vmatpush1.msra.mxu0 0.0
  %2570 = vmatprep.subr.mxu0 0.0
  %2571 = vmatpush1.msra.mxu0 0.0
  %2572 = vmatprep.subr.mxu0 0.0
  %2573 = vmatpush1.msra.mxu0 0.0
  %2574 = vmatprep.subr.mxu0 0.0
  %2575 = vmatpush1.msra.mxu0 0.0
  %2576 = vmatprep.mubr.f32.mxu0 %v2433
  %2577 = vmatmul.mubr.f32.gmra.mrb[0].mxu0 %v2370
  %v2578 = vpop.f32.mrb[0].mxu0
  %v2579 = vadd.f32 %v2504, %v2578
  %v2580 = vpop.f32.mrb[0].mxu0
  %2581 = vmatprep.mubr.f32.mxu0 %v2435
  %2582 = vmatmul.mubr.f32.gmra.mrb[0].mxu0 %v2371
  %v2583 = vpop.f32.mrb[0].mxu0
  %v2584 = vadd.f32 %v2509, %v2583
  %v2585 = vpop.f32.mrb[0].mxu0
  %2586 = vdwg.mxu0
  %v2587 = vmul.f32 %v2579, %v1412
  %v2588 = vmul.f32 %v2584, %v1417
  %v2589 = vsel %vm116, %v2587, 0.0
  %v2590 = vsel %vm116, %v2588, 0.0
  %v2591 = vadd.f32 %v2589, %v2590
  %v2592 = vrot.slane %v2591, 4
  %v2593 = vadd.f32 %v2591, %v2592
  %v2594 = vrot.slane %v2593, 2
  %v2595 = vadd.f32 %v2593, %v2594
  %v2596 = vrot.slane %v2595, 1
  %v2597 = vadd.f32 %v2595, %v2596
  %v2598 = vmul.f32 %v2597, %v1430
  %v2599 = vsub.f32 %v2587, %v2598
  %v2600 = vsub.f32 %v2588, %v2598
  %v2601 = vmul.f32 %v2599, %v2599
  %v2602 = vmul.f32 %v2600, %v2600
  %v2603 = vsel %vm116, %v2601, 0.0
  %v2604 = vsel %vm116, %v2602, 0.0
  %v2605 = vadd.f32 %v2603, %v2604
  %v2606 = vrot.slane %v2605, 4
  %v2607 = vadd.f32 %v2605, %v2606
  %v2608 = vrot.slane %v2607, 2
  %v2609 = vadd.f32 %v2607, %v2608
  %v2610 = vrot.slane %v2609, 1
  %v2611 = vadd.f32 %v2609, %v2610
  %v2612 = vmul.f32 %v2611, %v1430
  %v2613 = vadd.f32 %v2612, 1e-05
  %v2614 = vrsqrt.pop %v2613
  %v2615 = vmul.f32 %v2599, %v2614
  %v2616 = vmul.f32 %v2600, %v2614
  %s2617 = scalar_lea.vmem %s11, 1
  %v2618 = vld [vmem:[%s2617] sm:$0x1]
  %v2620 = vlaneseq
  %v2621 = vshrl.u32 %v2620, 7
  %v2622 = vsub.s32 0, %v2621
  %v2623 = vrot.slane %v2618, %v2622
  %v2625 = vmul.f32 %v2615, %v2623
  %v2626 = vmul.f32 %v2616, %v2623
  %s2627 = scalar_lea.vmem %s12, 1
  %v2628 = vld [vmem:[%s2627] sm:$0x1]
  %v2630 = vlaneseq
  %v2631 = vshrl.u32 %v2630, 7
  %v2632 = vsub.s32 0, %v2631
  %v2633 = vrot.slane %v2628, %v2632
  %v2635 = vadd.f32 %v2625, %v2633
  %v2636 = vadd.f32 %v2626, %v2633
  %v2637 = vmax.f32 %v2635, 0.0
  %v2638 = vmax.f32 %v2636, 0.0
  %s2639 = scalar_lea.vmem %s13, 32
  %v2640 = vld [vmem:[%s2639] sm:$0xff]
  %v2641 = vld [vmem:[%s2639 + $0x8] sm:$0xff]
  %v2642 = vld [vmem:[%s2639 + $0x10] sm:$0xff]
  %v2643 = vld [vmem:[%s2639 + $0x18] sm:$0xff]
  %s2644 = scalar_lea.vmem %s14, 1
  %v2645 = vld [vmem:[%s2644] sm:$0x1]
  %v2647 = vlaneseq
  %v2648 = vshrl.u32 %v2647, 7
  %v2649 = vsub.s32 0, %v2648
  %v2650 = vrot.slane %v2645, %v2649
  %v2653 = vsel %vm116, %v2637, 0
  %v2656 = vsel %vm116, %v2638, 0
  %2658 = vmatprep.subr.mxu0 0.0
  %2659 = vmatpush1.msra.mxu0 %v2640
  %2660 = vmatprep.subr.mxu0 0.0
  %2661 = vmatpush1.msra.mxu0 %v2641
  %2662 = vmatprep.subr.mxu0 0.0
  %2663 = vmatpush1.msra.mxu0 %v2642
  %2664 = vmatprep.subr.mxu0 0.0
  %2665 = vmatpush1.msra.mxu0 %v2643
  %2666 = vmatprep.subr.mxu0 0.0
  %2667 = vmatpush1.msra.mxu0 0.0
  %2668 = vmatprep.subr.mxu0 0.0
  %2669 = vmatpush1.msra.mxu0 0.0
  %2670 = vmatprep.subr.mxu0 0.0
  %2671 = vmatpush1.msra.mxu0 0.0
  %2672 = vmatprep.subr.mxu0 0.0
  %2673 = vmatpush1.msra.mxu0 0.0
  %2674 = vmatprep.subr.mxu0 0.0
  %2675 = vmatpush1.msra.mxu0 0.0
  %2676 = vmatprep.subr.mxu0 0.0
  %2677 = vmatpush1.msra.mxu0 0.0
  %2678 = vmatprep.subr.mxu0 0.0
  %2679 = vmatpush1.msra.mxu0 0.0
  %2680 = vmatprep.subr.mxu0 0.0
  %2681 = vmatpush1.msra.mxu0 0.0
  %2682 = vmatprep.subr.mxu0 0.0
  %2683 = vmatpush1.msra.mxu0 0.0
  %2684 = vmatprep.subr.mxu0 0.0
  %2685 = vmatpush1.msra.mxu0 0.0
  %2686 = vmatprep.subr.mxu0 0.0
  %2687 = vmatpush1.msra.mxu0 0.0
  %2688 = vmatprep.subr.mxu0 0.0
  %2689 = vmatpush1.msra.mxu0 0.0
  %2690 = vmatprep.subr.mxu0 0.0
  %2691 = vmatpush1.msra.mxu0 0.0
  %2692 = vmatprep.subr.mxu0 0.0
  %2693 = vmatpush1.msra.mxu0 0.0
  %2694 = vmatprep.subr.mxu0 0.0
  %2695 = vmatpush1.msra.mxu0 0.0
  %2696 = vmatprep.subr.mxu0 0.0
  %2697 = vmatpush1.msra.mxu0 0.0
  %2698 = vmatprep.subr.mxu0 0.0
  %2699 = vmatpush1.msra.mxu0 0.0
  %2700 = vmatprep.subr.mxu0 0.0
  %2701 = vmatpush1.msra.mxu0 0.0
  %2702 = vmatprep.subr.mxu0 0.0
  %2703 = vmatpush1.msra.mxu0 0.0
  %2704 = vmatprep.subr.mxu0 0.0
  %2705 = vmatpush1.msra.mxu0 0.0
  %2706 = vmatprep.subr.mxu0 0.0
  %2707 = vmatpush1.msra.mxu0 0.0
  %2708 = vmatprep.subr.mxu0 0.0
  %2709 = vmatpush1.msra.mxu0 0.0
  %2710 = vmatprep.subr.mxu0 0.0
  %2711 = vmatpush1.msra.mxu0 0.0
  %2712 = vmatprep.subr.mxu0 0.0
  %2713 = vmatpush1.msra.mxu0 0.0
  %2714 = vmatprep.subr.mxu0 0.0
  %2715 = vmatpush1.msra.mxu0 0.0
  %2716 = vmatprep.subr.mxu0 0.0
  %2717 = vmatpush1.msra.mxu0 0.0
  %2718 = vmatprep.subr.mxu0 0.0
  %2719 = vmatpush1.msra.mxu0 0.0
  %2720 = vmatprep.subr.mxu0 0.0
  %2721 = vmatpush1.msra.mxu0 0.0
  %2722 = vmatprep.mubr.f32.mxu0 0.0
  %2723 = vmatmul.mubr.f32.gmra.mrb[0].mxu0 %v2653
  %v2724 = vpop.f32.mrb[0].mxu0
  %v2725 = vadd.f32 %v2650, %v2724
  %v2726 = vpop.f32.mrb[0].mxu0
  %2727 = vmatprep.mubr.f32.mxu0 0.0
  %2728 = vmatmul.mubr.f32.gmra.mrb[0].mxu0 %v2656
  %v2729 = vpop.f32.mrb[0].mxu0
  %v2730 = vadd.f32 %v2650, %v2729
  %v2731 = vpop.f32.mrb[0].mxu0
  %2732 = vdwg.mxu0
  %vm2733 = vcmp.ge.f32.partialorder %v2725, 0.0
  %vm2734 = vcmp.ge.f32.partialorder %v2730, 0.0
  %v2735 = vmul.f32 %v2725, 0.01
  %v2736 = vmul.f32 %v2730, 0.01
  %v2737 = vsel %vm2733, %v2725, %v2735
  %v2738 = vsel %vm2734, %v2730, %v2736
  %v2739 = vadd.f32 %v1568, %v2737
  %v2740 = vadd.f32 %v1569, %v2738
  %v2741 = vld [vmem:[%s5] sm:$0x3]
  %v2743 = vsel %vm78, %v2741, 0
  %2745 = vmatprep.subr.mxu0 0.0
  %2746 = vmatpush1.msra.mxu0 %v2739
  %2747 = vmatprep.subr.mxu0 0.0
  %2748 = vmatpush1.msra.mxu0 %v2740
  %2749 = vmatprep.subr.mxu0 0.0
  %2750 = vmatpush1.msra.mxu0 0.0
  %2751 = vmatprep.subr.mxu0 0.0
  %2752 = vmatpush1.msra.mxu0 0.0
  %2753 = vmatprep.subr.mxu0 0.0
  %2754 = vmatpush1.msra.mxu0 0.0
  %2755 = vmatprep.subr.mxu0 0.0
  %2756 = vmatpush1.msra.mxu0 0.0
  %2757 = vmatprep.subr.mxu0 0.0
  %2758 = vmatpush1.msra.mxu0 0.0
  %2759 = vmatprep.subr.mxu0 0.0
  %2760 = vmatpush1.msra.mxu0 0.0
  %2761 = vmatprep.subr.mxu0 0.0
  %2762 = vmatpush1.msra.mxu0 0.0
  %2763 = vmatprep.subr.mxu0 0.0
  %2764 = vmatpush1.msra.mxu0 0.0
  %2765 = vmatprep.subr.mxu0 0.0
  %2766 = vmatpush1.msra.mxu0 0.0
  %2767 = vmatprep.subr.mxu0 0.0
  %2768 = vmatpush1.msra.mxu0 0.0
  %2769 = vmatprep.subr.mxu0 0.0
  %2770 = vmatpush1.msra.mxu0 0.0
  %2771 = vmatprep.subr.mxu0 0.0
  %2772 = vmatpush1.msra.mxu0 0.0
  %2773 = vmatprep.subr.mxu0 0.0
  %2774 = vmatpush1.msra.mxu0 0.0
  %2775 = vmatprep.subr.mxu0 0.0
  %2776 = vmatpush1.msra.mxu0 0.0
  %2777 = vmatprep.subr.mxu0 0.0
  %2778 = vmatpush1.msra.mxu0 0.0
  %2779 = vmatprep.subr.mxu0 0.0
  %2780 = vmatpush1.msra.mxu0 0.0
  %2781 = vmatprep.subr.mxu0 0.0
  %2782 = vmatpush1.msra.mxu0 0.0
  %2783 = vmatprep.subr.mxu0 0.0
  %2784 = vmatpush1.msra.mxu0 0.0
  %2785 = vmatprep.subr.mxu0 0.0
  %2786 = vmatpush1.msra.mxu0 0.0
  %2787 = vmatprep.subr.mxu0 0.0
  %2788 = vmatpush1.msra.mxu0 0.0
  %2789 = vmatprep.subr.mxu0 0.0
  %2790 = vmatpush1.msra.mxu0 0.0
  %2791 = vmatprep.subr.mxu0 0.0
  %2792 = vmatpush1.msra.mxu0 0.0
  %2793 = vmatprep.subr.mxu0 0.0
  %2794 = vmatpush1.msra.mxu0 0.0
  %2795 = vmatprep.subr.mxu0 0.0
  %2796 = vmatpush1.msra.mxu0 0.0
  %2797 = vmatprep.subr.mxu0 0.0
  %2798 = vmatpush1.msra.mxu0 0.0
  %2799 = vmatprep.subr.mxu0 0.0
  %2800 = vmatpush1.msra.mxu0 0.0
  %2801 = vmatprep.subr.mxu0 0.0
  %2802 = vmatpush1.msra.mxu0 0.0
  %2803 = vmatprep.subr.mxu0 0.0
  %2804 = vmatpush1.msra.mxu0 0.0
  %2805 = vmatprep.subr.mxu0 0.0
  %2806 = vmatpush1.msra.mxu0 0.0
  %2807 = vmatprep.subr.mxu0 0.0
  %2808 = vmatpush1.msra.mxu0 0.0
  %2809 = vmatprep.mubr.f32.mxu0 0.0
  %2810 = vmatmul.mubr.f32.gmra.mrb[0].mxu0 %v2743
  %v2811 = vpop.f32.mrb[0].mxu0
  %v2812 = vadd.f32 0.0, %v2811
  %v2813 = vpop.f32.mrb[0].mxu0
  %2814 = vdwg.mxu0
  %v2815 = vld [vmem:[%s15] sm:$0xff]
  %v2816 = vld [vmem:[%s15 + $0x8] sm:$0xff]
  %v2817 = vld [vmem:[%s15 + $0x10] sm:$0xff]
  %v2818 = vld [vmem:[%s15 + $0x18] sm:$0xff]
  %v2819 = vld [vmem:[%s16] sm:$0x1]
  %v2821 = vlaneseq
  %v2822 = vshrl.u32 %v2821, 7
  %v2823 = vsub.s32 0, %v2822
  %v2824 = vrot.slane %v2819, %v2823
  %v2827 = vsel %vm116, %v2812, 0
  %2829 = vmatprep.subr.mxu0 0.0
  %2830 = vmatpush1.msra.mxu0 %v2815
  %2831 = vmatprep.subr.mxu0 0.0
  %2832 = vmatpush1.msra.mxu0 %v2816
  %2833 = vmatprep.subr.mxu0 0.0
  %2834 = vmatpush1.msra.mxu0 %v2817
  %2835 = vmatprep.subr.mxu0 0.0
  %2836 = vmatpush1.msra.mxu0 %v2818
  %2837 = vmatprep.subr.mxu0 0.0
  %2838 = vmatpush1.msra.mxu0 0.0
  %2839 = vmatprep.subr.mxu0 0.0
  %2840 = vmatpush1.msra.mxu0 0.0
  %2841 = vmatprep.subr.mxu0 0.0
  %2842 = vmatpush1.msra.mxu0 0.0
  %2843 = vmatprep.subr.mxu0 0.0
  %2844 = vmatpush1.msra.mxu0 0.0
  %2845 = vmatprep.subr.mxu0 0.0
  %2846 = vmatpush1.msra.mxu0 0.0
  %2847 = vmatprep.subr.mxu0 0.0
  %2848 = vmatpush1.msra.mxu0 0.0
  %2849 = vmatprep.subr.mxu0 0.0
  %2850 = vmatpush1.msra.mxu0 0.0
  %2851 = vmatprep.subr.mxu0 0.0
  %2852 = vmatpush1.msra.mxu0 0.0
  %2853 = vmatprep.subr.mxu0 0.0
  %2854 = vmatpush1.msra.mxu0 0.0
  %2855 = vmatprep.subr.mxu0 0.0
  %2856 = vmatpush1.msra.mxu0 0.0
  %2857 = vmatprep.subr.mxu0 0.0
  %2858 = vmatpush1.msra.mxu0 0.0
  %2859 = vmatprep.subr.mxu0 0.0
  %2860 = vmatpush1.msra.mxu0 0.0
  %2861 = vmatprep.subr.mxu0 0.0
  %2862 = vmatpush1.msra.mxu0 0.0
  %2863 = vmatprep.subr.mxu0 0.0
  %2864 = vmatpush1.msra.mxu0 0.0
  %2865 = vmatprep.subr.mxu0 0.0
  %2866 = vmatpush1.msra.mxu0 0.0
  %2867 = vmatprep.subr.mxu0 0.0
  %2868 = vmatpush1.msra.mxu0 0.0
  %2869 = vmatprep.subr.mxu0 0.0
  %2870 = vmatpush1.msra.mxu0 0.0
  %2871 = vmatprep.subr.mxu0 0.0
  %2872 = vmatpush1.msra.mxu0 0.0
  %2873 = vmatprep.subr.mxu0 0.0
  %2874 = vmatpush1.msra.mxu0 0.0
  %2875 = vmatprep.subr.mxu0 0.0
  %2876 = vmatpush1.msra.mxu0 0.0
  %2877 = vmatprep.subr.mxu0 0.0
  %2878 = vmatpush1.msra.mxu0 0.0
  %2879 = vmatprep.subr.mxu0 0.0
  %2880 = vmatpush1.msra.mxu0 0.0
  %2881 = vmatprep.subr.mxu0 0.0
  %2882 = vmatpush1.msra.mxu0 0.0
  %2883 = vmatprep.subr.mxu0 0.0
  %2884 = vmatpush1.msra.mxu0 0.0
  %2885 = vmatprep.subr.mxu0 0.0
  %2886 = vmatpush1.msra.mxu0 0.0
  %2887 = vmatprep.subr.mxu0 0.0
  %2888 = vmatpush1.msra.mxu0 0.0
  %2889 = vmatprep.subr.mxu0 0.0
  %2890 = vmatpush1.msra.mxu0 0.0
  %2891 = vmatprep.subr.mxu0 0.0
  %2892 = vmatpush1.msra.mxu0 0.0
  %2893 = vmatprep.mubr.f32.mxu0 0.0
  %2894 = vmatmul.mubr.f32.gmra.mrb[0].mxu0 %v2827
  %v2895 = vpop.f32.mrb[0].mxu0
  %v2896 = vadd.f32 %v2824, %v2895
  %v2897 = vpop.f32.mrb[0].mxu0
  %2898 = vdwg.mxu0
  %v2899 = vmax.f32 %v2896, 0.0
  %v2900 = vld [vmem:[%s17] sm:$0xff]
  %v2901 = vld [vmem:[%s17 + $0x8] sm:$0xff]
  %v2902 = vld [vmem:[%s18] sm:$0x1]
  %v2904 = vlaneseq
  %v2905 = vshrl.u32 %v2904, 7
  %v2906 = vsub.s32 0, %v2905
  %v2907 = vrot.slane %v2902, %v2906
  %v2910 = vsel %vm78, %v2899, 0
  %2912 = vmatprep.subr.mxu0 0.0
  %2913 = vmatpush1.msra.mxu0 %v2900
  %2914 = vmatprep.subr.mxu0 0.0
  %2915 = vmatpush1.msra.mxu0 %v2901
  %2916 = vmatprep.subr.mxu0 0.0
  %2917 = vmatpush1.msra.mxu0 0.0
  %2918 = vmatprep.subr.mxu0 0.0
  %2919 = vmatpush1.msra.mxu0 0.0
  %2920 = vmatprep.subr.mxu0 0.0
  %2921 = vmatpush1.msra.mxu0 0.0
  %2922 = vmatprep.subr.mxu0 0.0
  %2923 = vmatpush1.msra.mxu0 0.0
  %2924 = vmatprep.subr.mxu0 0.0
  %2925 = vmatpush1.msra.mxu0 0.0
  %2926 = vmatprep.subr.mxu0 0.0
  %2927 = vmatpush1.msra.mxu0 0.0
  %2928 = vmatprep.subr.mxu0 0.0
  %2929 = vmatpush1.msra.mxu0 0.0
  %2930 = vmatprep.subr.mxu0 0.0
  %2931 = vmatpush1.msra.mxu0 0.0
  %2932 = vmatprep.subr.mxu0 0.0
  %2933 = vmatpush1.msra.mxu0 0.0
  %2934 = vmatprep.subr.mxu0 0.0
  %2935 = vmatpush1.msra.mxu0 0.0
  %2936 = vmatprep.subr.mxu0 0.0
  %2937 = vmatpush1.msra.mxu0 0.0
  %2938 = vmatprep.subr.mxu0 0.0
  %2939 = vmatpush1.msra.mxu0 0.0
  %2940 = vmatprep.subr.mxu0 0.0
  %2941 = vmatpush1.msra.mxu0 0.0
  %2942 = vmatprep.subr.mxu0 0.0
  %2943 = vmatpush1.msra.mxu0 0.0
  %2944 = vmatprep.subr.mxu0 0.0
  %2945 = vmatpush1.msra.mxu0 0.0
  %2946 = vmatprep.subr.mxu0 0.0
  %2947 = vmatpush1.msra.mxu0 0.0
  %2948 = vmatprep.subr.mxu0 0.0
  %2949 = vmatpush1.msra.mxu0 0.0
  %2950 = vmatprep.subr.mxu0 0.0
  %2951 = vmatpush1.msra.mxu0 0.0
  %2952 = vmatprep.subr.mxu0 0.0
  %2953 = vmatpush1.msra.mxu0 0.0
  %2954 = vmatprep.subr.mxu0 0.0
  %2955 = vmatpush1.msra.mxu0 0.0
  %2956 = vmatprep.subr.mxu0 0.0
  %2957 = vmatpush1.msra.mxu0 0.0
  %2958 = vmatprep.subr.mxu0 0.0
  %2959 = vmatpush1.msra.mxu0 0.0
  %2960 = vmatprep.subr.mxu0 0.0
  %2961 = vmatpush1.msra.mxu0 0.0
  %2962 = vmatprep.subr.mxu0 0.0
  %2963 = vmatpush1.msra.mxu0 0.0
  %2964 = vmatprep.subr.mxu0 0.0
  %2965 = vmatpush1.msra.mxu0 0.0
  %2966 = vmatprep.subr.mxu0 0.0
  %2967 = vmatpush1.msra.mxu0 0.0
  %2968 = vmatprep.subr.mxu0 0.0
  %2969 = vmatpush1.msra.mxu0 0.0
  %2970 = vmatprep.subr.mxu0 0.0
  %2971 = vmatpush1.msra.mxu0 0.0
  %2972 = vmatprep.subr.mxu0 0.0
  %2973 = vmatpush1.msra.mxu0 0.0
  %2974 = vmatprep.subr.mxu0 0.0
  %2975 = vmatpush1.msra.mxu0 0.0
  %2976 = vmatprep.mubr.f32.mxu0 0.0
  %2977 = vmatmul.mubr.f32.gmra.mrb[0].mxu0 %v2910
  %v2978 = vpop.f32.mrb[0].mxu0
  %v2979 = vadd.f32 %v2907, %v2978
  %v2980 = vpop.f32.mrb[0].mxu0
  %2981 = vdwg.mxu0
  %v2982 = vmax.f32 %v2979, 0.0
  %v2983 = vld [vmem:[%s19] sm:$0xff]
  %v2984 = vld [vmem:[%s20] sm:$0x1]
  %v2986 = vlaneseq
  %v2987 = vshrl.u32 %v2986, 7
  %v2988 = vsub.s32 0, %v2987
  %v2989 = vrot.slane %v2984, %v2988
  %vm2991 = vcmask 64512
  %v2993 = vsel %vm2991, %v2982, 0
  %2995 = vmatprep.subr.mxu0 0.0
  %2996 = vmatpush1.msra.mxu0 %v2983
  %2997 = vmatprep.subr.mxu0 0.0
  %2998 = vmatpush1.msra.mxu0 0.0
  %2999 = vmatprep.subr.mxu0 0.0
  %3000 = vmatpush1.msra.mxu0 0.0
  %3001 = vmatprep.subr.mxu0 0.0
  %3002 = vmatpush1.msra.mxu0 0.0
  %3003 = vmatprep.subr.mxu0 0.0
  %3004 = vmatpush1.msra.mxu0 0.0
  %3005 = vmatprep.subr.mxu0 0.0
  %3006 = vmatpush1.msra.mxu0 0.0
  %3007 = vmatprep.subr.mxu0 0.0
  %3008 = vmatpush1.msra.mxu0 0.0
  %3009 = vmatprep.subr.mxu0 0.0
  %3010 = vmatpush1.msra.mxu0 0.0
  %3011 = vmatprep.subr.mxu0 0.0
  %3012 = vmatpush1.msra.mxu0 0.0
  %3013 = vmatprep.subr.mxu0 0.0
  %3014 = vmatpush1.msra.mxu0 0.0
  %3015 = vmatprep.subr.mxu0 0.0
  %3016 = vmatpush1.msra.mxu0 0.0
  %3017 = vmatprep.subr.mxu0 0.0
  %3018 = vmatpush1.msra.mxu0 0.0
  %3019 = vmatprep.subr.mxu0 0.0
  %3020 = vmatpush1.msra.mxu0 0.0
  %3021 = vmatprep.subr.mxu0 0.0
  %3022 = vmatpush1.msra.mxu0 0.0
  %3023 = vmatprep.subr.mxu0 0.0
  %3024 = vmatpush1.msra.mxu0 0.0
  %3025 = vmatprep.subr.mxu0 0.0
  %3026 = vmatpush1.msra.mxu0 0.0
  %3027 = vmatprep.subr.mxu0 0.0
  %3028 = vmatpush1.msra.mxu0 0.0
  %3029 = vmatprep.subr.mxu0 0.0
  %3030 = vmatpush1.msra.mxu0 0.0
  %3031 = vmatprep.subr.mxu0 0.0
  %3032 = vmatpush1.msra.mxu0 0.0
  %3033 = vmatprep.subr.mxu0 0.0
  %3034 = vmatpush1.msra.mxu0 0.0
  %3035 = vmatprep.subr.mxu0 0.0
  %3036 = vmatpush1.msra.mxu0 0.0
  %3037 = vmatprep.subr.mxu0 0.0
  %3038 = vmatpush1.msra.mxu0 0.0
  %3039 = vmatprep.subr.mxu0 0.0
  %3040 = vmatpush1.msra.mxu0 0.0
  %3041 = vmatprep.subr.mxu0 0.0
  %3042 = vmatpush1.msra.mxu0 0.0
  %3043 = vmatprep.subr.mxu0 0.0
  %3044 = vmatpush1.msra.mxu0 0.0
  %3045 = vmatprep.subr.mxu0 0.0
  %3046 = vmatpush1.msra.mxu0 0.0
  %3047 = vmatprep.subr.mxu0 0.0
  %3048 = vmatpush1.msra.mxu0 0.0
  %3049 = vmatprep.subr.mxu0 0.0
  %3050 = vmatpush1.msra.mxu0 0.0
  %3051 = vmatprep.subr.mxu0 0.0
  %3052 = vmatpush1.msra.mxu0 0.0
  %3053 = vmatprep.subr.mxu0 0.0
  %3054 = vmatpush1.msra.mxu0 0.0
  %3055 = vmatprep.subr.mxu0 0.0
  %3056 = vmatpush1.msra.mxu0 0.0
  %3057 = vmatprep.subr.mxu0 0.0
  %3058 = vmatpush1.msra.mxu0 0.0
  %3059 = vmatprep.mubr.f32.mxu0 0.0
  %3060 = vmatmul.mubr.f32.gmra.mrb[0].mxu0 %v2993
  %v3061 = vpop.f32.mrb[0].mxu0
  %v3062 = vadd.f32 %v2989, %v3061
  %v3063 = vpop.f32.mrb[0].mxu0
  %3064 = vdwg.mxu0
  %3065 = vst [vmem:[%s21] sm:$0x3] %v3062
  // Predicated region
  $region86: #{pna_net_forward.1} parent=0 // pred_check
    _
  $region87: #{pna_net_forward.1} parent=0 // pred_check_branch
    %3067 = sbr.rel (0) target = $region89
  $region88: #{pna_net_forward.1} parent=0 // pred_region
    _
  $region89: #{pna_net_forward.1} parent=0 // pred_fallthru
    _
  // Predicated region
  $region90: #{pna_net_forward.1} parent=0 // pred_check
    _
  $region91: #{pna_net_forward.1} parent=0 // pred_check_branch
    %3069 = sbr.rel (0) target = $region93
  $region92: #{pna_net_forward.1} parent=0 // pred_region
    _
  $region93: #{pna_net_forward.1} parent=0 // pred_fallthru
    _

</llo_original>
